<compile_context>
chip_gen: v7x
topology: tpu7x:2x2x1
jax: 0.10.0
libtpu: 0.0.40
codegen_flags: <defaults>
</compile_context>

<pallas_src>
import jax
import jax.numpy as jnp
from jax import lax
from jax.experimental import pallas as pl
from jax.experimental.pallas import tpu as pltpu

BN_EPS = 1e-3


def _se_conv_bn_kernel(xg_ref, w1t_ref, b1_ref, x_ref, w2_ref, gb_ref,
                       o_ref, gate_ref):
    # xg_ref:   [1, C_in]        x518 squeezed                      (f32)
    # w1t_ref:  [C_in, C_mid]    conv165 weight, pre-transposed     (f32)
    # b1_ref:   [1, C_mid]       conv165 bias                       (f32)
    # x_ref:    [C_mid, HW]      x515 flattened                     (bf16)
    # w2_ref:   [blk, C_mid]     conv166 weight block               (bf16)
    # gb_ref:   [blk, 2]         col0 = gamma, col1 = beta          (f32)
    # o_ref:    [blk, HW]        normalized output block            (f32)
    # gate_ref: [1, C_mid]       VMEM scratch, persists across grid (f32)

    # --- grid step 0 only: SE gate (conv2d165 + sigmoid) into scratch ------
    @pl.when(pl.program_id(0) == 0)
    def _():
        logits = jnp.dot(xg_ref[...], w1t_ref[...],
                         preferred_element_type=jnp.float32) + b1_ref[...]
        gate_ref[...] = jax.nn.sigmoid(logits)                  # [1, C_mid]

    # --- fold gate into this block's w2 rows (exact reassociation) ---------
    # Elementwise multiply in f32, cast to bf16 only at the MXU boundary.
    w2g = (w2_ref[...] * gate_ref[...]).astype(jnp.bfloat16)    # [blk, C_mid]

    # conv2d166 (1x1, no bias): bf16 x bf16 MXU matmul, f32 accumulate.
    y = jnp.dot(w2g, x_ref[...],
                preferred_element_type=jnp.float32)             # [blk, HW]

    # --- BatchNorm2d, training-mode batch statistics over N*H*W (N == 1) ---
    n = y.shape[1]
    mean = jnp.sum(y, axis=1, keepdims=True) / n                # [blk, 1]
    centered = y - mean
    var = jnp.sum(centered * centered, axis=1, keepdims=True) / n
    gb = gb_ref[...]
    scale = gb[:, 0:1] * lax.rsqrt(var + BN_EPS)                # gamma*inv_std
    o_ref[...] = (centered * scale + gb[:, 1:2]).astype(o_ref.dtype)


@jax.jit
def se_conv_bn(x518, x515, w1, b1, w2, gamma, beta):
    """x518: [1, C_in, 1, 1], x515: [1, C_mid, H, W] (NCHW, N must be 1)."""
    N, C_mid, H, W = x515.shape
    if N != 1:
        # TODO(synk): N > 1 needs a per-sample gate and joint BN statistics.
        raise ValueError("se_conv_bn assumes N == 1 (as in the source module)")
    C_in = x518.shape[1]
    C_out = w2.shape[0]
    HW = H * W

    n_blocks = 2
    blk = C_out // n_blocks
    assert C_out % n_blocks == 0 and blk % 8 == 0, (C_out, blk)

    # Free reshapes; only the two large operands are cast to bf16.
    x_mat = x515.reshape(C_mid, HW).astype(jnp.bfloat16)    # [1344, 196] bf16
    xg = x518.reshape(1, C_in)                              # [1, 56]
    w1_t = jnp.transpose(w1.reshape(C_mid, C_in))           # [56, 1344] f32
    b1_r = b1.reshape(1, C_mid)                             # [1, 1344]
    w2_m = w2.reshape(C_out, C_mid).astype(jnp.bfloat16)    # [224, 1344] bf16
    gb = jnp.stack([gamma, beta], axis=1)                   # [224, 2]

    cost = pl.CostEstimate(
        flops=2 * C_out * C_mid * HW + 2 * C_mid * C_in
              + 2 * C_out * C_mid + 4 * C_out * HW,
        transcendentals=C_mid,
        bytes_accessed=2 * (C_mid * HW + C_out * C_mid)
                       + 4 * (C_in * C_mid + C_mid + C_in
                              + 2 * C_out + C_out * HW),
    )

    grid_spec = pltpu.PrefetchScalarGridSpec(
        num_scalar_prefetch=0,
        grid=(n_blocks,),
        in_specs=[
            pl.BlockSpec((1, C_in), lambda i: (0, 0)),        # xg   (resident)
            pl.BlockSpec((C_in, C_mid), lambda i: (0, 0)),    # w1^T (resident)
            pl.BlockSpec((1, C_mid), lambda i: (0, 0)),       # b1   (resident)
            pl.BlockSpec((C_mid, HW), lambda i: (0, 0)),      # x    (resident)
            pl.BlockSpec((blk, C_mid), lambda i: (i, 0)),     # w2   (streamed)
            pl.BlockSpec((blk, 2), lambda i: (i, 0)),         # gamma/beta
        ],
        out_specs=pl.BlockSpec((blk, HW), lambda i: (i, 0)),
        scratch_shapes=[pltpu.VMEM((1, C_mid), jnp.float32)],  # SE gate row
    )

    out = pl.pallas_call(
        _se_conv_bn_kernel,
        out_shape=jax.ShapeDtypeStruct((C_out, HW), jnp.float32),
        grid_spec=grid_spec,
        compiler_params=pltpu.CompilerParams(
            dimension_semantics=("arbitrary",)),
        cost_estimate=cost,
    )(xg, w1_t, b1_r, x_mat, w2_m, gb)

    # [C_out, HW] -> NCHW: pure reshape for N == 1, no data movement.
    return out.reshape(N, C_out, H, W)


def _reference_f32(x518, x515, w1, b1, w2, gamma, beta):
    # Pure-f32 JAX reference of the PyTorch forward (training-mode BN).
    N, C_mid, H, W = x515.shape
    C_in = x518.shape[1]
    C_out = w2.shape[0]
    xg = x518.reshape(N, C_in)
    logits = xg @ w1.reshape(C_mid, C_in).T + b1                 # [1, 1344]
    gate = jax.nn.sigmoid(logits).reshape(N, C_mid, 1, 1)
    z = gate * x515                                              # [1,1344,H,W]
    y = jnp.einsum('nchw,oc->nohw', z, w2.reshape(C_out, C_mid))
    mean = y.mean(axis=(0, 2, 3), keepdims=True)
    var = ((y - mean) ** 2).mean(axis=(0, 2, 3), keepdims=True)
    return (gamma.reshape(1, C_out, 1, 1) * (y - mean)
            / jnp.sqrt(var + BN_EPS) + beta.reshape(1, C_out, 1, 1))


def _reference_bf16(x518, x515, w1, b1, w2, gamma, beta):
    # Mirrors the kernel's numerics: bf16 MXU operands, f32 accumulate/BN.
    N, C_mid, H, W = x515.shape
    C_in = x518.shape[1]
    C_out = w2.shape[0]
    HW = H * W
    xg = x518.reshape(1, C_in)
    logits = xg @ w1.reshape(C_mid, C_in).T + b1.reshape(1, C_mid)
    gate = jax.nn.sigmoid(logits)                                # [1, C_mid]
    w2g = (w2.reshape(C_out, C_mid).astype(jnp.bfloat16) * gate
           ).astype(jnp.bfloat16)
    x_bf = x515.reshape(C_mid, HW).astype(jnp.bfloat16)
    y = jnp.dot(w2g, x_bf, preferred_element_type=jnp.float32)   # [C_out, HW]
    mean = y.mean(axis=1, keepdims=True)
    var = ((y - mean) ** 2).mean(axis=1, keepdims=True)
    out = (gamma.reshape(C_out, 1) * (y - mean) / jnp.sqrt(var + BN_EPS)
           + beta.reshape(C_out, 1))
    return out.reshape(N, C_out, H, W)


if __name__ == "__main__":
    key = jax.random.PRNGKey(0)
    k1, k2, k3, k4, k5 = jax.random.split(key, 5)

    N, H, W = 1, 14, 14
    C_in, C_mid, C_out = 56, 1344, 224

    x515 = jax.random.normal(k1, (N, C_mid, H, W), dtype=jnp.float32)
    x518 = jax.random.normal(k2, (N, C_in, 1, 1), dtype=jnp.float32)

    # Deterministic synthetic parameters (not a checkpoint).
    w1 = 0.05 * jax.random.normal(k3, (C_mid, C_in, 1, 1), dtype=jnp.float32)
    b1 = 0.01 * jax.random.normal(k4, (C_mid,), dtype=jnp.float32)
    w2 = 0.05 * jax.random.normal(k5, (C_out, C_mid, 1, 1), dtype=jnp.float32)
    gamma = jnp.ones((C_out,), dtype=jnp.float32)   # BN affine defaults
    beta = jnp.zeros((C_out,), dtype=jnp.float32)

    out = se_conv_bn(x518, x515, w1, b1, w2, gamma, beta)
    out = jax.block_until_ready(out)
    assert out.shape == (N, C_out, H, W), out.shape

    # Tight check against a reference with matching bf16 MXU-operand numerics.
    ref_bf = _reference_bf16(x518, x515, w1, b1, w2, gamma, beta)
    assert jnp.allclose(out, ref_bf, atol=5e-3, rtol=5e-3), \
        float(jnp.max(jnp.abs(out - ref_bf)))

    # Looser check against the full-f32 PyTorch-equivalent reference
    # (bf16 quantization of x/w2 costs ~1e-2-level deviations).
    ref = _reference_f32(x518, x515, w1, b1, w2, gamma, beta)
    assert jnp.allclose(out, ref, atol=5e-2, rtol=5e-2), \
        float(jnp.max(jnp.abs(out - ref)))

    print("KERNEL_OK")
</pallas_src>

<mosaic_0001>
module attributes {stable_mosaic.version = 11 : i64} {
  func.func @_se_conv_bn_kernel(%arg0: i32, %arg1: memref<1x56xf32, #tpu.memory_space<vmem>>, %arg2: memref<56x1344xf32, #tpu.memory_space<vmem>>, %arg3: memref<1x1344xf32, #tpu.memory_space<vmem>>, %arg4: memref<1344x196xbf16, #tpu.memory_space<vmem>>, %arg5: memref<112x1344xbf16, #tpu.memory_space<vmem>>, %arg6: memref<112x2xf32, #tpu.memory_space<vmem>>, %arg7: memref<112x196xf32, #tpu.memory_space<vmem>>, %arg8: memref<1x1344xf32, #tpu.memory_space<vmem>>) attributes {dimension_semantics = [#tpu.dimension_semantics<arbitrary>], iteration_bounds = array<i64: 2>, scalar_prefetch = 0 : i64, scratch_operands = 1 : i64, tpu.core_type = #tpu.core_type<tc>, window_params = [{pipeline_mode = #tpu.pipeline_mode<synchronous>, transform_indices = @transform_0, window_bounds = array<i64: 1, 56>}, {pipeline_mode = #tpu.pipeline_mode<synchronous>, transform_indices = @transform_1, window_bounds = array<i64: 56, 1344>}, {pipeline_mode = #tpu.pipeline_mode<synchronous>, transform_indices = @transform_2, window_bounds = array<i64: 1, 1344>}, {pipeline_mode = #tpu.pipeline_mode<synchronous>, transform_indices = @transform_3, window_bounds = array<i64: 1344, 196>}, {transform_indices = @transform_4, window_bounds = array<i64: 112, 1344>}, {transform_indices = @transform_5, window_bounds = array<i64: 112, 2>}, {transform_indices = @transform_6, window_bounds = array<i64: 112, 196>}]} {
    %c0_i32 = arith.constant 0 : i32
    %0 = arith.cmpi eq, %arg0, %c0_i32 : i32
    %1 = arith.extui %0 : i1 to i32
    %c0_i32_0 = arith.constant 0 : i32
    %2 = arith.cmpi ne, %1, %c0_i32_0 : i32
    scf.if %2 {
      %c0_15 = arith.constant 0 : index
      %c0_16 = arith.constant 0 : index
      %34 = vector.load %arg1[%c0_15, %c0_16] : memref<1x56xf32, #tpu.memory_space<vmem>>, vector<1x56xf32>
      %c0_17 = arith.constant 0 : index
      %c0_18 = arith.constant 0 : index
      %35 = vector.load %arg2[%c0_17, %c0_18] : memref<56x1344xf32, #tpu.memory_space<vmem>>, vector<56x1344xf32>
      %cst_19 = arith.constant dense<0.000000e+00> : vector<1x1344xf32>
      %36 = tpu.matmul %34, %35, %cst_19 {dimension_numbers = #tpu.dot_dimension_numbers<[1], [0], [0], [1], [0, 0, 1, 1], [], []>} : vector<1x56xf32>, vector<56x1344xf32>, vector<1x1344xf32> -> vector<1x1344xf32>
      %c0_20 = arith.constant 0 : index
      %c0_21 = arith.constant 0 : index
      %37 = vector.load %arg3[%c0_20, %c0_21] : memref<1x1344xf32, #tpu.memory_space<vmem>>, vector<1x1344xf32>
      %38 = arith.addf %36, %37 : vector<1x1344xf32>
      %39 = arith.negf %38 : vector<1x1344xf32>
      %40 = math.exp %39 : vector<1x1344xf32>
      %cst_22 = arith.constant 1.000000e+00 : f32
      %41 = vector.broadcast %cst_22 : f32 to vector<1x1344xf32>
      %42 = arith.addf %41, %40 : vector<1x1344xf32>
      %43 = arith.divf %41, %42 : vector<1x1344xf32>
      %c0_23 = arith.constant 0 : index
      %c0_24 = arith.constant 0 : index
      %44 = vector.load %arg8[%c0_23, %c0_24] : memref<1x1344xf32, #tpu.memory_space<vmem>>, vector<1x1344xf32>
      tpu.vector_store %arg8[%c0_23, %c0_24], %43 {strides = array<i32>} : memref<1x1344xf32, #tpu.memory_space<vmem>>, vector<1x1344xf32>,
    } else {
    }
    %c0 = arith.constant 0 : index
    %c0_1 = arith.constant 0 : index
    %3 = vector.load %arg5[%c0, %c0_1] : memref<112x1344xbf16, #tpu.memory_space<vmem>>, vector<112x1344xbf16>
    %c0_2 = arith.constant 0 : index
    %c0_3 = arith.constant 0 : index
    %4 = vector.load %arg8[%c0_2, %c0_3] : memref<1x1344xf32, #tpu.memory_space<vmem>>, vector<1x1344xf32>
    %5 = arith.extf %3 : vector<112x1344xbf16> to vector<112x1344xf32>
    %6 = vector.broadcast %4 : vector<1x1344xf32> to vector<112x1344xf32>
    %7 = arith.mulf %5, %6 : vector<112x1344xf32>
    %8 = arith.truncf %7 : vector<112x1344xf32> to vector<112x1344xbf16>
    %c0_4 = arith.constant 0 : index
    %c0_5 = arith.constant 0 : index
    %9 = vector.load %arg4[%c0_4, %c0_5] : memref<1344x196xbf16, #tpu.memory_space<vmem>>, vector<1344x196xbf16>
    %cst = arith.constant dense<0.000000e+00> : vector<112x196xf32>
    %10 = tpu.matmul %8, %9, %cst {dimension_numbers = #tpu.dot_dimension_numbers<[1], [0], [0], [1], [0, 0, 1, 1], [], []>} : vector<112x1344xbf16>, vector<1344x196xbf16>, vector<112x196xf32> -> vector<112x196xf32>
    %cst_6 = arith.constant dense<0.000000e+00> : vector<112xf32>
    %11 = vector.multi_reduction <add>, %10, %cst_6 [1] : vector<112x196xf32> to vector<112xf32>
    %12 = vector.shape_cast %11 : vector<112xf32> to vector<112x1xf32>
    %cst_7 = arith.constant 1.960000e+02 : f32
    %13 = vector.broadcast %cst_7 : f32 to vector<112x1xf32>
    %14 = arith.divf %12, %13 : vector<112x1xf32>
    %15 = vector.broadcast %14 : vector<112x1xf32> to vector<112x196xf32>
    %16 = arith.subf %10, %15 : vector<112x196xf32>
    %17 = arith.mulf %16, %16 : vector<112x196xf32>
    %cst_8 = arith.constant dense<0.000000e+00> : vector<112xf32>
    %18 = vector.multi_reduction <add>, %17, %cst_8 [1] : vector<112x196xf32> to vector<112xf32>
    %19 = vector.shape_cast %18 : vector<112xf32> to vector<112x1xf32>
    %cst_9 = arith.constant 1.960000e+02 : f32
    %20 = vector.broadcast %cst_9 : f32 to vector<112x1xf32>
    %21 = arith.divf %19, %20 : vector<112x1xf32>
    %c0_10 = arith.constant 0 : index
    %c0_11 = arith.constant 0 : index
    %22 = vector.load %arg6[%c0_10, %c0_11] : memref<112x2xf32, #tpu.memory_space<vmem>>, vector<112x2xf32>
    %23 = vector.extract_strided_slice %22 {offsets = [0, 0], sizes = [112, 1], strides = [1, 1]} : vector<112x2xf32> to vector<112x1xf32>
    %cst_12 = arith.constant 1.000000e-03 : f32
    %24 = vector.broadcast %cst_12 : f32 to vector<112x1xf32>
    %25 = arith.addf %21, %24 : vector<112x1xf32>
    %26 = math.rsqrt %25 : vector<112x1xf32>
    %27 = arith.mulf %23, %26 : vector<112x1xf32>
    %28 = vector.broadcast %27 : vector<112x1xf32> to vector<112x196xf32>
    %29 = arith.mulf %16, %28 : vector<112x196xf32>
    %30 = vector.extract_strided_slice %22 {offsets = [0, 1], sizes = [112, 1], strides = [1, 1]} : vector<112x2xf32> to vector<112x1xf32>
    %31 = vector.broadcast %30 : vector<112x1xf32> to vector<112x196xf32>
    %32 = arith.addf %29, %31 : vector<112x196xf32>
    %c0_13 = arith.constant 0 : index
    %c0_14 = arith.constant 0 : index
    %33 = vector.load %arg7[%c0_13, %c0_14] : memref<112x196xf32, #tpu.memory_space<vmem>>, vector<112x196xf32>
    tpu.vector_store %arg7[%c0_13, %c0_14], %32 {strides = array<i32>} : memref<112x196xf32, #tpu.memory_space<vmem>>, vector<112x196xf32>,
    return
  }
  func.func @transform_0(%arg0: i32) -> (i32, i32) {
    %c0_i32 = arith.constant 0 : i32
    %c0_i32_0 = arith.constant 0 : i32
    %c0_i32_1 = arith.constant 0 : i32
    return %c0_i32, %c0_i32_0 : i32, i32
  }
  func.func @transform_1(%arg0: i32) -> (i32, i32) {
    %c0_i32 = arith.constant 0 : i32
    %c0_i32_0 = arith.constant 0 : i32
    %c0_i32_1 = arith.constant 0 : i32
    return %c0_i32, %c0_i32_0 : i32, i32
  }
  func.func @transform_2(%arg0: i32) -> (i32, i32) {
    %c0_i32 = arith.constant 0 : i32
    %c0_i32_0 = arith.constant 0 : i32
    %c0_i32_1 = arith.constant 0 : i32
    return %c0_i32, %c0_i32_0 : i32, i32
  }
  func.func @transform_3(%arg0: i32) -> (i32, i32) {
    %c0_i32 = arith.constant 0 : i32
    %c0_i32_0 = arith.constant 0 : i32
    %c0_i32_1 = arith.constant 0 : i32
    return %c0_i32, %c0_i32_0 : i32, i32
  }
  func.func @transform_4(%arg0: i32) -> (i32, i32) {
    %c0_i32 = arith.constant 0 : i32
    %c0_i32_0 = arith.constant 0 : i32
    return %arg0, %c0_i32 : i32, i32
  }
  func.func @transform_5(%arg0: i32) -> (i32, i32) {
    %c0_i32 = arith.constant 0 : i32
    %c0_i32_0 = arith.constant 0 : i32
    return %arg0, %c0_i32 : i32, i32
  }
  func.func @transform_6(%arg0: i32) -> (i32, i32) {
    %c0_i32 = arith.constant 0 : i32
    %c0_i32_0 = arith.constant 0 : i32
    return %arg0, %c0_i32 : i32, i32
  }
}

</mosaic_0001>

<llo_original>
// kernel: se_conv_bn.1
$region0: #{se_conv_bn.1}
  #allocation0 [shape = 'u32[]', space=smem, size = 0x4, offset = 0x4, fixed_abs, tag = 'smem constant byte address 0x4 - core index']
  #allocation1 [shape = 'u32[144,128]{1,0:T(1,128)}', space=vmem, size = 0x12000, scoped, tag = 'internal scratch']
  #allocation2 [shape = 'f32[1,1344]{1,0:T(1,128)}', space=vmem, size = 0x1600, scoped, tag = 'scratch operand']
  %s0 = inlined_call_operand.vmem [shape: f32[1,56], index: 0, kind: input, shape index: {}]
  %s1 = inlined_call_operand.vmem [shape: f32[56,1344], index: 1, kind: input, shape index: {}]
  %s2 = inlined_call_operand.vmem [shape: f32[1,1344], index: 2, kind: input, shape index: {}]
  %s3 = inlined_call_operand.vmem [shape: bf16[1344,196], index: 3, kind: input, shape index: {}]
  %s4 = inlined_call_operand.vmem [shape: bf16[224,1344], index: 4, kind: input, shape index: {}]
  %s5 = inlined_call_operand.vmem [shape: f32[224,2], index: 5, kind: input, shape index: {}]
  %s6 = inlined_call_operand.vmem [shape: f32[224,196], index: 6, kind: output, shape index: {}]
  %s7 = sld [smem:[#allocation0]]
  $region61: #{se_conv_bn.1} parent=0
    _
  %s9 = ssub.s32 1, %s7
  %s10 = scalar_select 0, %s9, %s7
  loop: start=0, step=1, limit=4
  $region2: #{se_conv_bn.1} parent=0 // loop_pre_header
    _
  $region3: #{se_conv_bn.1} parent=0 // loop_header
    %s12 = sphi 0, %s16
    %p13 = scmp.ge.s32.totalorder %s12, 4
    %s20 = sphi 0, %s20
    %s22 = sphi 0, %s20
    %s23 = sphi 0, %s22
    %s37 = sphi 0, %s23
    %s41 = sphi 0, %s41
    %s43 = sphi 0, %s41
    %s44 = sphi 0, %s43
    %s58 = sphi 0, %s44
    %s62 = sphi 0, %s62
    %s64 = sphi 0, %s62
    %s65 = sphi 0, %s64
    %s79 = sphi 0, %s65
    %s83 = sphi 0, %s83
    %s85 = sphi 0, %s83
    %s86 = sphi 0, %s85
    %s100 = sphi 0, %s86
    %s106 = sphi 0, %s108
    %s109 = sphi 0, %s106
    %s110 = sphi 0, %s109
    %s126 = sphi 0, %s110
    %s132 = sphi 0, %s134
    %s135 = sphi 0, %s132
    %s136 = sphi 0, %s135
    %s152 = sphi 0, %s136
    %s158 = sphi 0, %s160
    %s161 = sphi 0, %s158
    %s162 = sphi 0, %s161
    %s178 = sphi 0, %s162
  $region4: #{se_conv_bn.1} parent=0 // loop_header_branch
    %15 = sbr.rel (%p13) target = $region8
  $region5: #{se_conv_bn.1} parent=0 // loop_body
    %s17 = ssub.s32 %s12, 1
    %s18 = ssub.s32 %s12, 2
    %s19 = sadd.s32 %s12, 1
    %s21 = sadd.s32 %s20, 1
    %p24 = scmp.eq.s32.totalorder %s12, 1
    %p25 = scmp.ne.s32.totalorder %s20, %s22
    %p26 = scmp.eq.s32.totalorder %s12, 0
    %p27 = por %p25, %p26
    %p28 = scmp.ne.s32.totalorder %s20, %s22
    %p29 = scmp.eq.s32.totalorder %s17, 1
    %p30 = por %p28, %p29
    %p31 = scmp.ne.s32.totalorder %s22, %s23
    %p32 = scmp.eq.s32.totalorder %s17, 0
    %p33 = por %p31, %p32
    %p34 = scmp.ne.s32.totalorder %s22, %s23
    %p35 = scmp.eq.s32.totalorder %s18, 1
    %p36 = por %p34, %p35
    %p38 = scmp.ne.s32.totalorder %s23, %s37
    %p39 = scmp.eq.s32.totalorder %s18, 0
    %p40 = por %p38, %p39
    %s42 = sadd.s32 %s41, 1
    %p45 = scmp.eq.s32.totalorder %s12, 1
    %p46 = scmp.ne.s32.totalorder %s41, %s43
    %p47 = scmp.eq.s32.totalorder %s12, 0
    %p48 = por %p46, %p47
    %p49 = scmp.ne.s32.totalorder %s41, %s43
    %p50 = scmp.eq.s32.totalorder %s17, 1
    %p51 = por %p49, %p50
    %p52 = scmp.ne.s32.totalorder %s43, %s44
    %p53 = scmp.eq.s32.totalorder %s17, 0
    %p54 = por %p52, %p53
    %p55 = scmp.ne.s32.totalorder %s43, %s44
    %p56 = scmp.eq.s32.totalorder %s18, 1
    %p57 = por %p55, %p56
    %p59 = scmp.ne.s32.totalorder %s44, %s58
    %p60 = scmp.eq.s32.totalorder %s18, 0
    %p61 = por %p59, %p60
    %s63 = sadd.s32 %s62, 1
    %p66 = scmp.eq.s32.totalorder %s12, 1
    %p67 = scmp.ne.s32.totalorder %s62, %s64
    %p68 = scmp.eq.s32.totalorder %s12, 0
    %p69 = por %p67, %p68
    %p70 = scmp.ne.s32.totalorder %s62, %s64
    %p71 = scmp.eq.s32.totalorder %s17, 1
    %p72 = por %p70, %p71
    %p73 = scmp.ne.s32.totalorder %s64, %s65
    %p74 = scmp.eq.s32.totalorder %s17, 0
    %p75 = por %p73, %p74
    %p76 = scmp.ne.s32.totalorder %s64, %s65
    %p77 = scmp.eq.s32.totalorder %s18, 1
    %p78 = por %p76, %p77
    %p80 = scmp.ne.s32.totalorder %s65, %s79
    %p81 = scmp.eq.s32.totalorder %s18, 0
    %p82 = por %p80, %p81
    %s84 = sadd.s32 %s83, 1
    %p87 = scmp.eq.s32.totalorder %s12, 1
    %p88 = scmp.ne.s32.totalorder %s83, %s85
    %p89 = scmp.eq.s32.totalorder %s12, 0
    %p90 = por %p88, %p89
    %p91 = scmp.ne.s32.totalorder %s83, %s85
    %p92 = scmp.eq.s32.totalorder %s17, 1
    %p93 = por %p91, %p92
    %p94 = scmp.ne.s32.totalorder %s85, %s86
    %p95 = scmp.eq.s32.totalorder %s17, 0
    %p96 = por %p94, %p95
    %p97 = scmp.ne.s32.totalorder %s85, %s86
    %p98 = scmp.eq.s32.totalorder %s18, 1
    %p99 = por %p97, %p98
    %p101 = scmp.ne.s32.totalorder %s86, %s100
    %p102 = scmp.eq.s32.totalorder %s18, 0
    %p103 = por %p101, %p102
    %s104 = ssub.s32 %s12, %s19
    %p105 = scmp.eq.s32.totalorder %s104, 0
    %s107 = sadd.s32 %s106, 1
    %s108 = scalar_select %p105, %s106, %s107
    %p111 = pneg %p105
    %p112 = scmp.eq.s32.totalorder %s12, 1
    %p113 = por %p111, %p112
    %p114 = scmp.ne.s32.totalorder %s106, %s109
    %p115 = scmp.eq.s32.totalorder %s12, 0
    %p116 = por %p114, %p115
    %p117 = scmp.ne.s32.totalorder %s106, %s109
    %p118 = scmp.eq.s32.totalorder %s17, 1
    %p119 = por %p117, %p118
    %p120 = scmp.ne.s32.totalorder %s109, %s110
    %p121 = scmp.eq.s32.totalorder %s17, 0
    %p122 = por %p120, %p121
    %p123 = scmp.ne.s32.totalorder %s109, %s110
    %p124 = scmp.eq.s32.totalorder %s18, 1
    %p125 = por %p123, %p124
    %p127 = scmp.ne.s32.totalorder %s110, %s126
    %p128 = scmp.eq.s32.totalorder %s18, 0
    %p129 = por %p127, %p128
    %s130 = ssub.s32 %s12, %s19
    %p131 = scmp.eq.s32.totalorder %s130, 0
    %s133 = sadd.s32 %s132, 1
    %s134 = scalar_select %p131, %s132, %s133
    %p137 = pneg %p131
    %p138 = scmp.eq.s32.totalorder %s12, 1
    %p139 = por %p137, %p138
    %p140 = scmp.ne.s32.totalorder %s132, %s135
    %p141 = scmp.eq.s32.totalorder %s12, 0
    %p142 = por %p140, %p141
    %p143 = scmp.ne.s32.totalorder %s132, %s135
    %p144 = scmp.eq.s32.totalorder %s17, 1
    %p145 = por %p143, %p144
    %p146 = scmp.ne.s32.totalorder %s135, %s136
    %p147 = scmp.eq.s32.totalorder %s17, 0
    %p148 = por %p146, %p147
    %p149 = scmp.ne.s32.totalorder %s135, %s136
    %p150 = scmp.eq.s32.totalorder %s18, 1
    %p151 = por %p149, %p150
    %p153 = scmp.ne.s32.totalorder %s136, %s152
    %p154 = scmp.eq.s32.totalorder %s18, 0
    %p155 = por %p153, %p154
    %s156 = ssub.s32 %s12, %s19
    %p157 = scmp.eq.s32.totalorder %s156, 0
    %s159 = sadd.s32 %s158, 1
    %s160 = scalar_select %p157, %s158, %s159
    %p163 = pneg %p157
    %p164 = scmp.eq.s32.totalorder %s12, 1
    %p165 = por %p163, %p164
    %p166 = scmp.ne.s32.totalorder %s158, %s161
    %p167 = scmp.eq.s32.totalorder %s12, 0
    %p168 = por %p166, %p167
    %p169 = scmp.ne.s32.totalorder %s158, %s161
    %p170 = scmp.eq.s32.totalorder %s17, 1
    %p171 = por %p169, %p170
    %p172 = scmp.ne.s32.totalorder %s161, %s162
    %p173 = scmp.eq.s32.totalorder %s17, 0
    %p174 = por %p172, %p173
    %p175 = scmp.ne.s32.totalorder %s161, %s162
    %p176 = scmp.eq.s32.totalorder %s18, 1
    %p177 = por %p175, %p176
    %p179 = scmp.ne.s32.totalorder %s162, %s178
    %p180 = scmp.eq.s32.totalorder %s18, 0
    %p181 = por %p179, %p180
    %p182 = scmp.le.s32.totalorder 1, %s12
    %p183 = scmp.lt.s32.totalorder %s12, 3
    %p184 = pnand %p182, %p183
    %p185 = pneg %p184
    // Predicated region
    $region9: #{se_conv_bn.1} parent=5 // pred_check
      _
    $region10: #{se_conv_bn.1} parent=5 // pred_check_branch
      %187 = sbr.rel (%p184) target = $region12
    $region11: #{se_conv_bn.1} parent=5 // pred_region
      %s188 = ssub.s32 %s12, 1
      // Predicated region
      $region13: #{se_conv_bn.1} parent=11 // pred_check
        %p189 = pneg %p33
      $region14: #{se_conv_bn.1} parent=11 // pred_check_branch
        %191 = sbr.rel (%p189) target = $region16
      $region15: #{se_conv_bn.1} parent=11 // pred_region
        _
      $region16: #{se_conv_bn.1} parent=11 // pred_fallthru
        _
      // Predicated region
      $region17: #{se_conv_bn.1} parent=11 // pred_check
        %p192 = pneg %p54
      $region18: #{se_conv_bn.1} parent=11 // pred_check_branch
        %194 = sbr.rel (%p192) target = $region20
      $region19: #{se_conv_bn.1} parent=11 // pred_region
        _
      $region20: #{se_conv_bn.1} parent=11 // pred_fallthru
        _
      // Predicated region
      $region21: #{se_conv_bn.1} parent=11 // pred_check
        %p195 = pneg %p75
      $region22: #{se_conv_bn.1} parent=11 // pred_check_branch
        %197 = sbr.rel (%p195) target = $region24
      $region23: #{se_conv_bn.1} parent=11 // pred_region
        _
      $region24: #{se_conv_bn.1} parent=11 // pred_fallthru
        _
      // Predicated region
      $region25: #{se_conv_bn.1} parent=11 // pred_check
        %p198 = pneg %p96
      $region26: #{se_conv_bn.1} parent=11 // pred_check_branch
        %200 = sbr.rel (%p198) target = $region28
      $region27: #{se_conv_bn.1} parent=11 // pred_region
        _
      $region28: #{se_conv_bn.1} parent=11 // pred_fallthru
        _
    $region12: #{se_conv_bn.1} parent=5 // pred_fallthru
      _
    %p201 = scmp.lt.s32.totalorder %s12, 2
    // Predicated region
    $region29: #{se_conv_bn.1} parent=5 // pred_check
      %p202 = pneg %p201
    $region30: #{se_conv_bn.1} parent=5 // pred_check_branch
      %204 = sbr.rel (%p202) target = $region32
    $region31: #{se_conv_bn.1} parent=5 // pred_region
      // Predicated region
      $region33: #{se_conv_bn.1} parent=31 // pred_check
        %p205 = pneg %p116
      $region34: #{se_conv_bn.1} parent=31 // pred_check_branch
        %207 = sbr.rel (%p205) target = $region36
      $region35: #{se_conv_bn.1} parent=31 // pred_region
        %s208 = smul.u32 14, %s12
        %p209 = scmp.lt.s32.totalorder %s208, 27
        %s210 = scalar_select %p209, %s208, 27
        %s211 = smul.addr %s210, 11
        %s212 = smul.addr %s211, 4
        %s213 = scalar_lea.vmem %s4, %s212
        %s214 = smul.u32 14, %s12
      $region36: #{se_conv_bn.1} parent=31 // pred_fallthru
        _
      // Predicated region
      $region37: #{se_conv_bn.1} parent=31 // pred_check
        %p215 = pneg %p142
      $region38: #{se_conv_bn.1} parent=31 // pred_check_branch
        %217 = sbr.rel (%p215) target = $region40
      $region39: #{se_conv_bn.1} parent=31 // pred_region
        %s218 = smul.u32 14, %s12
        %p219 = scmp.lt.s32.totalorder %s218, 27
        %s220 = scalar_select %p219, %s218, 27
        %s221 = smul.addr %s220, 8
        %s222 = scalar_lea.vmem %s5, %s221
        %s223 = smul.u32 14, %s12
      $region40: #{se_conv_bn.1} parent=31 // pred_fallthru
        _
    $region32: #{se_conv_bn.1} parent=5 // pred_fallthru
      _
    %p224 = scmp.le.s32.totalorder 1, %s12
    %p225 = scmp.lt.s32.totalorder %s12, 3
    %p226 = pnand %p224, %p225
    %p227 = pneg %p226
    // Predicated region
    $region41: #{se_conv_bn.1} parent=5 // pred_check
      _
    $region42: #{se_conv_bn.1} parent=5 // pred_check_branch
      %229 = sbr.rel (%p226) target = $region44
    $region43: #{se_conv_bn.1} parent=5 // pred_region
      %s230 = ssub.s32 %s12, 1
      %p231 = pneg %p33
      %p232 = pneg %p30
      %p233 = pneg %p54
      %p234 = pneg %p51
      %p235 = pneg %p75
      %p236 = pneg %p72
      %p237 = pneg %p96
      %p238 = pneg %p93
      %s239 = smul.u32 14, %s17
      %p240 = scmp.lt.s32.totalorder %s239, 27
      %s241 = scalar_select %p240, %s239, 27
      %s242 = smul.addr %s241, 11
      %s243 = smul.addr %s242, 4
      %s244 = scalar_lea.vmem %s4, %s243
      %p245 = pneg %p122
      %p246 = pneg %p119
      %s247 = smul.u32 14, %s17
      %p248 = scmp.lt.s32.totalorder %s247, 27
      %s249 = scalar_select %p248, %s247, 27
      %s250 = smul.addr %s249, 8
      %s251 = scalar_lea.vmem %s5, %s250
      %p252 = pneg %p148
      %p253 = pneg %p145
      %p254 = pneg %p174
      %p255 = pneg %p171
      %s256 = smul.u32 14, %s17
      %p257 = scmp.lt.s32.totalorder %s256, 27
      %s258 = scalar_select %p257, %s256, 27
      %s259 = smul.addr %s258, 2
      %s260 = smul.addr %s259, 8
      %s261 = scalar_lea.vmem %s6, %s260
      %s262 = smul.u32 14, %s17
      %p263 = scmp.lt.s32.totalorder %s262, 27
      %s264 = scalar_select %p263, %s262, 27
      %s265 = smul.addr %s264, 11
      %s266 = smul.addr %s265, 4
      %s267 = scalar_lea.vmem %s4, %s266
      %s268 = smul.u32 14, %s17
      %s269 = smul.u32 14, %s17
      %p270 = scmp.lt.s32.totalorder %s269, 27
      %s271 = scalar_select %p270, %s269, 27
      %s272 = smul.addr %s271, 8
      %s273 = scalar_lea.vmem %s5, %s272
      %s274 = smul.u32 14, %s17
      %s275 = smul.u32 14, %s17
      %p276 = scmp.lt.s32.totalorder %s275, 27
      %s277 = scalar_select %p276, %s275, 27
      %s278 = smul.addr %s277, 2
      %s279 = smul.addr %s278, 8
      %s280 = scalar_lea.vmem %s6, %s279
      %s281 = smul.u32 14, %s17
      %p283 = scmp.eq.s32.totalorder %s17, 0
      // Predicated region
      $region45: #{se_conv_bn.1} parent=43 // pred_check
        %p284 = pneg %p283
      $region46: #{se_conv_bn.1} parent=43 // pred_check_branch
        %286 = sbr.rel (%p284) target = $region48
      $region47: #{se_conv_bn.1} parent=43 // pred_region
        %v287 = vld [vmem:[%s0] sm:$0x1]
        %v288 = vld [vmem:[%s1] sm:$0xff]
        %v289 = vld [vmem:[%s1 + $0x8] sm:$0xff]
        %v290 = vld [vmem:[%s1 + $0x10] sm:$0xff]
        %v291 = vld [vmem:[%s1 + $0x18] sm:$0xff]
        %v292 = vld [vmem:[%s1 + $0x20] sm:$0xff]
        %v293 = vld [vmem:[%s1 + $0x28] sm:$0xff]
        %v294 = vld [vmem:[%s1 + $0x30] sm:$0xff]
        %v295 = vld [vmem:[%s1 + $0x38] sm:$0xff]
        %v296 = vld [vmem:[%s1 + $0x40] sm:$0xff]
        %v297 = vld [vmem:[%s1 + $0x48] sm:$0xff]
        %v298 = vld [vmem:[%s1 + $0x50] sm:$0xff]
        %v299 = vld [vmem:[%s1 + $0x58] sm:$0xff]
        %v300 = vld [vmem:[%s1 + $0x60] sm:$0xff]
        %v301 = vld [vmem:[%s1 + $0x68] sm:$0xff]
        %v302 = vld [vmem:[%s1 + $0x70] sm:$0xff]
        %v303 = vld [vmem:[%s1 + $0x78] sm:$0xff]
        %v304 = vld [vmem:[%s1 + $0x80] sm:$0xff]
        %v305 = vld [vmem:[%s1 + $0x88] sm:$0xff]
        %v306 = vld [vmem:[%s1 + $0x90] sm:$0xff]
        %v307 = vld [vmem:[%s1 + $0x98] sm:$0xff]
        %v308 = vld [vmem:[%s1 + $0xa0] sm:$0xff]
        %v309 = vld [vmem:[%s1 + $0xa8] sm:$0xff]
        %v310 = vld [vmem:[%s1 + $0xb0] sm:$0xff]
        %v311 = vld [vmem:[%s1 + $0xb8] sm:$0xff]
        %v312 = vld [vmem:[%s1 + $0xc0] sm:$0xff]
        %v313 = vld [vmem:[%s1 + $0xc8] sm:$0xff]
        %v314 = vld [vmem:[%s1 + $0xd0] sm:$0xff]
        %v315 = vld [vmem:[%s1 + $0xd8] sm:$0xff]
        %v316 = vld [vmem:[%s1 + $0xe0] sm:$0xff]
        %v317 = vld [vmem:[%s1 + $0xe8] sm:$0xff]
        %v318 = vld [vmem:[%s1 + $0xf0] sm:$0xff]
        %v319 = vld [vmem:[%s1 + $0xf8] sm:$0xff]
        %v320 = vld [vmem:[%s1 + $0x100] sm:$0xff]
        %v321 = vld [vmem:[%s1 + $0x108] sm:$0xff]
        %v322 = vld [vmem:[%s1 + $0x110] sm:$0xff]
        %v323 = vld [vmem:[%s1 + $0x118] sm:$0xff]
        %v324 = vld [vmem:[%s1 + $0x120] sm:$0xff]
        %v325 = vld [vmem:[%s1 + $0x128] sm:$0xff]
        %v326 = vld [vmem:[%s1 + $0x130] sm:$0xff]
        %v327 = vld [vmem:[%s1 + $0x138] sm:$0xff]
        %v328 = vld [vmem:[%s1 + $0x140] sm:$0xff]
        %v329 = vld [vmem:[%s1 + $0x148] sm:$0xff]
        %v330 = vld [vmem:[%s1 + $0x150] sm:$0xff]
        %v331 = vld [vmem:[%s1 + $0x158] sm:$0xff]
        %v332 = vld [vmem:[%s1 + $0x160] sm:$0xff]
        %v333 = vld [vmem:[%s1 + $0x168] sm:$0xff]
        %v334 = vld [vmem:[%s1 + $0x170] sm:$0xff]
        %v335 = vld [vmem:[%s1 + $0x178] sm:$0xff]
        %v336 = vld [vmem:[%s1 + $0x180] sm:$0xff]
        %v337 = vld [vmem:[%s1 + $0x188] sm:$0xff]
        %v338 = vld [vmem:[%s1 + $0x190] sm:$0xff]
        %v339 = vld [vmem:[%s1 + $0x198] sm:$0xff]
        %v340 = vld [vmem:[%s1 + $0x1a0] sm:$0xff]
        %v341 = vld [vmem:[%s1 + $0x1a8] sm:$0xff]
        %v342 = vld [vmem:[%s1 + $0x1b0] sm:$0xff]
        %v343 = vld [vmem:[%s1 + $0x1b8] sm:$0xff]
        %v344 = vld [vmem:[%s1 + $0x1c0] sm:$0xff]
        %v345 = vld [vmem:[%s1 + $0x1c8] sm:$0xff]
        %v346 = vld [vmem:[%s1 + $0x1d0] sm:$0xff]
        %v347 = vld [vmem:[%s1 + $0x1d8] sm:$0xff]
        %v348 = vld [vmem:[%s1 + $0x1e0] sm:$0xff]
        %v349 = vld [vmem:[%s1 + $0x1e8] sm:$0xff]
        %v350 = vld [vmem:[%s1 + $0x1f0] sm:$0xff]
        %v351 = vld [vmem:[%s1 + $0x1f8] sm:$0xff]
        %v352 = vld [vmem:[%s1 + $0x200] sm:$0xff]
        %v353 = vld [vmem:[%s1 + $0x208] sm:$0xff]
        %v354 = vld [vmem:[%s1 + $0x210] sm:$0xff]
        %v355 = vld [vmem:[%s1 + $0x218] sm:$0xff]
        %v356 = vld [vmem:[%s1 + $0x220] sm:$0xff]
        %v357 = vld [vmem:[%s1 + $0x228] sm:$0xff]
        %v358 = vld [vmem:[%s1 + $0x230] sm:$0xff]
        %v359 = vld [vmem:[%s1 + $0x238] sm:$0xff]
        %v360 = vld [vmem:[%s1 + $0x240] sm:$0xff]
        %v361 = vld [vmem:[%s1 + $0x248] sm:$0xff]
        %v362 = vld [vmem:[%s1 + $0x250] sm:$0xff]
        %v363 = vld [vmem:[%s1 + $0x258] sm:$0xff]
        %v364 = vld [vmem:[%s1 + $0x260] sm:$0xff]
        %v365 = vld [vmem:[%s2] sm:$0xff]
        %v366 = vld [vmem:[%s2 + $0x8] sm:$0x7]
        %v369 = vlaneseq
        %v370 = vshrl.u32 %v369, 7
        %v371 = vsub.s32 0, %v370
        %v372 = vrot.slane %v365, %v371
        %v373 = vlaneseq
        %v374 = vshrl.u32 %v373, 7
        %v375 = vsub.s32 1, %v374
        %v376 = vrot.slane %v365, %v375
        %v377 = vlaneseq
        %v378 = vshrl.u32 %v377, 7
        %v379 = vsub.s32 2, %v378
        %v380 = vrot.slane %v365, %v379
        %v381 = vlaneseq
        %v382 = vshrl.u32 %v381, 7
        %v383 = vsub.s32 3, %v382
        %v384 = vrot.slane %v365, %v383
        %v385 = vlaneseq
        %v386 = vshrl.u32 %v385, 7
        %v387 = vsub.s32 4, %v386
        %v388 = vrot.slane %v365, %v387
        %v389 = vlaneseq
        %v390 = vshrl.u32 %v389, 7
        %v391 = vsub.s32 5, %v390
        %v392 = vrot.slane %v365, %v391
        %v393 = vlaneseq
        %v394 = vshrl.u32 %v393, 7
        %v395 = vsub.s32 6, %v394
        %v396 = vrot.slane %v365, %v395
        %v397 = vlaneseq
        %v398 = vshrl.u32 %v397, 7
        %v399 = vsub.s32 7, %v398
        %v400 = vrot.slane %v365, %v399
        %v401 = vlaneseq
        %v402 = vshrl.u32 %v401, 7
        %v403 = vsub.s32 0, %v402
        %v404 = vrot.slane %v366, %v403
        %v405 = vlaneseq
        %v406 = vshrl.u32 %v405, 7
        %v407 = vsub.s32 1, %v406
        %v408 = vrot.slane %v366, %v407
        %v409 = vlaneseq
        %v410 = vshrl.u32 %v409, 7
        %v411 = vsub.s32 2, %v410
        %v412 = vrot.slane %v366, %v411
        %vm424 = vcmask 457728
        %v426 = vsel %vm424, %v287, 0
        %428 = vmatprep.subr.mxu0 %v289
        %429 = vmatpush1.msra.mxu0 %v288
        %430 = vmatprep.subr.mxu0 %v300
        %431 = vmatpush1.msra.mxu0 %v299
        %432 = vmatprep.subr.mxu0 %v311
        %433 = vmatpush1.msra.mxu0 %v310
        %434 = vmatprep.subr.mxu0 %v322
        %435 = vmatpush1.msra.mxu0 %v321
        %436 = vmatprep.subr.mxu0 %v333
        %437 = vmatpush1.msra.mxu0 %v332
        %438 = vmatprep.subr.mxu0 %v344
        %439 = vmatpush1.msra.mxu0 %v343
        %440 = vmatprep.subr.mxu0 %v355
        %441 = vmatpush1.msra.mxu0 %v354
        %442 = vmatprep.subr.mxu0 0.0
        %443 = vmatpush1.msra.mxu0 0.0
        %444 = vmatprep.subr.mxu0 0.0
        %445 = vmatpush1.msra.mxu0 0.0
        %446 = vmatprep.subr.mxu0 0.0
        %447 = vmatpush1.msra.mxu0 0.0
        %448 = vmatprep.subr.mxu0 0.0
        %449 = vmatpush1.msra.mxu0 0.0
        %450 = vmatprep.subr.mxu0 0.0
        %451 = vmatpush1.msra.mxu0 0.0
        %452 = vmatprep.subr.mxu0 0.0
        %453 = vmatpush1.msra.mxu0 0.0
        %454 = vmatprep.subr.mxu0 0.0
        %455 = vmatpush1.msra.mxu0 0.0
        %456 = vmatprep.subr.mxu0 0.0
        %457 = vmatpush1.msra.mxu0 0.0
        %458 = vmatprep.subr.mxu0 0.0
        %459 = vmatpush1.msra.mxu0 0.0
        %460 = vmatprep.subr.mxu0 0.0
        %461 = vmatpush1.msra.mxu0 0.0
        %462 = vmatprep.subr.mxu0 0.0
        %463 = vmatpush1.msra.mxu0 0.0
        %464 = vmatprep.subr.mxu0 0.0
        %465 = vmatpush1.msra.mxu0 0.0
        %466 = vmatprep.subr.mxu0 0.0
        %467 = vmatpush1.msra.mxu0 0.0
        %468 = vmatprep.subr.mxu0 0.0
        %469 = vmatpush1.msra.mxu0 0.0
        %470 = vmatprep.subr.mxu0 0.0
        %471 = vmatpush1.msra.mxu0 0.0
        %472 = vmatprep.subr.mxu0 0.0
        %473 = vmatpush1.msra.mxu0 0.0
        %474 = vmatprep.subr.mxu0 0.0
        %475 = vmatpush1.msra.mxu0 0.0
        %476 = vmatprep.subr.mxu0 0.0
        %477 = vmatpush1.msra.mxu0 0.0
        %478 = vmatprep.subr.mxu0 0.0
        %479 = vmatpush1.msra.mxu0 0.0
        %480 = vmatprep.subr.mxu0 0.0
        %481 = vmatpush1.msra.mxu0 0.0
        %482 = vmatprep.subr.mxu0 0.0
        %483 = vmatpush1.msra.mxu0 0.0
        %484 = vmatprep.subr.mxu0 0.0
        %485 = vmatpush1.msra.mxu0 0.0
        %486 = vmatprep.subr.mxu0 0.0
        %487 = vmatpush1.msra.mxu0 0.0
        %488 = vmatprep.subr.mxu0 0.0
        %489 = vmatpush1.msra.mxu0 0.0
        %490 = vmatprep.subr.mxu0 0.0
        %491 = vmatpush1.msra.mxu0 0.0
        %492 = vmatprep.mubr.f32.mxu0 0.0
        %493 = vmatmul.mubr.f32.gmra.mrb[0].mxu0 %v426
        %v494 = vpop.f32.mrb[0].mxu0
        %v495 = vadd.f32 %v372, %v494
        %v496 = vpop.f32.mrb[0].mxu0
        %v497 = vadd.f32 %v376, %v496
        %498 = vdwg.mxu0
        %499 = vmatprep.subr.mxu0 %v291
        %500 = vmatpush1.msra.mxu0 %v290
        %501 = vmatprep.subr.mxu0 %v302
        %502 = vmatpush1.msra.mxu0 %v301
        %503 = vmatprep.subr.mxu0 %v313
        %504 = vmatpush1.msra.mxu0 %v312
        %505 = vmatprep.subr.mxu0 %v324
        %506 = vmatpush1.msra.mxu0 %v323
        %507 = vmatprep.subr.mxu0 %v335
        %508 = vmatpush1.msra.mxu0 %v334
        %509 = vmatprep.subr.mxu0 %v346
        %510 = vmatpush1.msra.mxu0 %v345
        %511 = vmatprep.subr.mxu0 %v357
        %512 = vmatpush1.msra.mxu0 %v356
        %513 = vmatprep.subr.mxu0 0.0
        %514 = vmatpush1.msra.mxu0 0.0
        %515 = vmatprep.subr.mxu0 0.0
        %516 = vmatpush1.msra.mxu0 0.0
        %517 = vmatprep.subr.mxu0 0.0
        %518 = vmatpush1.msra.mxu0 0.0
        %519 = vmatprep.subr.mxu0 0.0
        %520 = vmatpush1.msra.mxu0 0.0
        %521 = vmatprep.subr.mxu0 0.0
        %522 = vmatpush1.msra.mxu0 0.0
        %523 = vmatprep.subr.mxu0 0.0
        %524 = vmatpush1.msra.mxu0 0.0
        %525 = vmatprep.subr.mxu0 0.0
        %526 = vmatpush1.msra.mxu0 0.0
        %527 = vmatprep.subr.mxu0 0.0
        %528 = vmatpush1.msra.mxu0 0.0
        %529 = vmatprep.subr.mxu0 0.0
        %530 = vmatpush1.msra.mxu0 0.0
        %531 = vmatprep.subr.mxu0 0.0
        %532 = vmatpush1.msra.mxu0 0.0
        %533 = vmatprep.subr.mxu0 0.0
        %534 = vmatpush1.msra.mxu0 0.0
        %535 = vmatprep.subr.mxu0 0.0
        %536 = vmatpush1.msra.mxu0 0.0
        %537 = vmatprep.subr.mxu0 0.0
        %538 = vmatpush1.msra.mxu0 0.0
        %539 = vmatprep.subr.mxu0 0.0
        %540 = vmatpush1.msra.mxu0 0.0
        %541 = vmatprep.subr.mxu0 0.0
        %542 = vmatpush1.msra.mxu0 0.0
        %543 = vmatprep.subr.mxu0 0.0
        %544 = vmatpush1.msra.mxu0 0.0
        %545 = vmatprep.subr.mxu0 0.0
        %546 = vmatpush1.msra.mxu0 0.0
        %547 = vmatprep.subr.mxu0 0.0
        %548 = vmatpush1.msra.mxu0 0.0
        %549 = vmatprep.subr.mxu0 0.0
        %550 = vmatpush1.msra.mxu0 0.0
        %551 = vmatprep.subr.mxu0 0.0
        %552 = vmatpush1.msra.mxu0 0.0
        %553 = vmatprep.subr.mxu0 0.0
        %554 = vmatpush1.msra.mxu0 0.0
        %555 = vmatprep.subr.mxu0 0.0
        %556 = vmatpush1.msra.mxu0 0.0
        %557 = vmatprep.subr.mxu0 0.0
        %558 = vmatpush1.msra.mxu0 0.0
        %559 = vmatprep.subr.mxu0 0.0
        %560 = vmatpush1.msra.mxu0 0.0
        %561 = vmatprep.subr.mxu0 0.0
        %562 = vmatpush1.msra.mxu0 0.0
        %563 = vmatprep.mubr.f32.mxu0 0.0
        %564 = vmatmul.mubr.f32.gmra.mrb[0].mxu0 %v426
        %v565 = vpop.f32.mrb[0].mxu0
        %v566 = vadd.f32 %v380, %v565
        %v567 = vpop.f32.mrb[0].mxu0
        %v568 = vadd.f32 %v384, %v567
        %569 = vdwg.mxu0
        %570 = vmatprep.subr.mxu0 %v293
        %571 = vmatpush1.msra.mxu0 %v292
        %572 = vmatprep.subr.mxu0 %v304
        %573 = vmatpush1.msra.mxu0 %v303
        %574 = vmatprep.subr.mxu0 %v315
        %575 = vmatpush1.msra.mxu0 %v314
        %576 = vmatprep.subr.mxu0 %v326
        %577 = vmatpush1.msra.mxu0 %v325
        %578 = vmatprep.subr.mxu0 %v337
        %579 = vmatpush1.msra.mxu0 %v336
        %580 = vmatprep.subr.mxu0 %v348
        %581 = vmatpush1.msra.mxu0 %v347
        %582 = vmatprep.subr.mxu0 %v359
        %583 = vmatpush1.msra.mxu0 %v358
        %584 = vmatprep.subr.mxu0 0.0
        %585 = vmatpush1.msra.mxu0 0.0
        %586 = vmatprep.subr.mxu0 0.0
        %587 = vmatpush1.msra.mxu0 0.0
        %588 = vmatprep.subr.mxu0 0.0
        %589 = vmatpush1.msra.mxu0 0.0
        %590 = vmatprep.subr.mxu0 0.0
        %591 = vmatpush1.msra.mxu0 0.0
        %592 = vmatprep.subr.mxu0 0.0
        %593 = vmatpush1.msra.mxu0 0.0
        %594 = vmatprep.subr.mxu0 0.0
        %595 = vmatpush1.msra.mxu0 0.0
        %596 = vmatprep.subr.mxu0 0.0
        %597 = vmatpush1.msra.mxu0 0.0
        %598 = vmatprep.subr.mxu0 0.0
        %599 = vmatpush1.msra.mxu0 0.0
        %600 = vmatprep.subr.mxu0 0.0
        %601 = vmatpush1.msra.mxu0 0.0
        %602 = vmatprep.subr.mxu0 0.0
        %603 = vmatpush1.msra.mxu0 0.0
        %604 = vmatprep.subr.mxu0 0.0
        %605 = vmatpush1.msra.mxu0 0.0
        %606 = vmatprep.subr.mxu0 0.0
        %607 = vmatpush1.msra.mxu0 0.0
        %608 = vmatprep.subr.mxu0 0.0
        %609 = vmatpush1.msra.mxu0 0.0
        %610 = vmatprep.subr.mxu0 0.0
        %611 = vmatpush1.msra.mxu0 0.0
        %612 = vmatprep.subr.mxu0 0.0
        %613 = vmatpush1.msra.mxu0 0.0
        %614 = vmatprep.subr.mxu0 0.0
        %615 = vmatpush1.msra.mxu0 0.0
        %616 = vmatprep.subr.mxu0 0.0
        %617 = vmatpush1.msra.mxu0 0.0
        %618 = vmatprep.subr.mxu0 0.0
        %619 = vmatpush1.msra.mxu0 0.0
        %620 = vmatprep.subr.mxu0 0.0
        %621 = vmatpush1.msra.mxu0 0.0
        %622 = vmatprep.subr.mxu0 0.0
        %623 = vmatpush1.msra.mxu0 0.0
        %624 = vmatprep.subr.mxu0 0.0
        %625 = vmatpush1.msra.mxu0 0.0
        %626 = vmatprep.subr.mxu0 0.0
        %627 = vmatpush1.msra.mxu0 0.0
        %628 = vmatprep.subr.mxu0 0.0
        %629 = vmatpush1.msra.mxu0 0.0
        %630 = vmatprep.subr.mxu0 0.0
        %631 = vmatpush1.msra.mxu0 0.0
        %632 = vmatprep.subr.mxu0 0.0
        %633 = vmatpush1.msra.mxu0 0.0
        %634 = vmatprep.mubr.f32.mxu0 0.0
        %635 = vmatmul.mubr.f32.gmra.mrb[0].mxu0 %v426
        %v636 = vpop.f32.mrb[0].mxu0
        %v637 = vadd.f32 %v388, %v636
        %v638 = vpop.f32.mrb[0].mxu0
        %v639 = vadd.f32 %v392, %v638
        %640 = vdwg.mxu0
        %641 = vmatprep.subr.mxu0 %v295
        %642 = vmatpush1.msra.mxu0 %v294
        %643 = vmatprep.subr.mxu0 %v306
        %644 = vmatpush1.msra.mxu0 %v305
        %645 = vmatprep.subr.mxu0 %v317
        %646 = vmatpush1.msra.mxu0 %v316
        %647 = vmatprep.subr.mxu0 %v328
        %648 = vmatpush1.msra.mxu0 %v327
        %649 = vmatprep.subr.mxu0 %v339
        %650 = vmatpush1.msra.mxu0 %v338
        %651 = vmatprep.subr.mxu0 %v350
        %652 = vmatpush1.msra.mxu0 %v349
        %653 = vmatprep.subr.mxu0 %v361
        %654 = vmatpush1.msra.mxu0 %v360
        %655 = vmatprep.subr.mxu0 0.0
        %656 = vmatpush1.msra.mxu0 0.0
        %657 = vmatprep.subr.mxu0 0.0
        %658 = vmatpush1.msra.mxu0 0.0
        %659 = vmatprep.subr.mxu0 0.0
        %660 = vmatpush1.msra.mxu0 0.0
        %661 = vmatprep.subr.mxu0 0.0
        %662 = vmatpush1.msra.mxu0 0.0
        %663 = vmatprep.subr.mxu0 0.0
        %664 = vmatpush1.msra.mxu0 0.0
        %665 = vmatprep.subr.mxu0 0.0
        %666 = vmatpush1.msra.mxu0 0.0
        %667 = vmatprep.subr.mxu0 0.0
        %668 = vmatpush1.msra.mxu0 0.0
        %669 = vmatprep.subr.mxu0 0.0
        %670 = vmatpush1.msra.mxu0 0.0
        %671 = vmatprep.subr.mxu0 0.0
        %672 = vmatpush1.msra.mxu0 0.0
        %673 = vmatprep.subr.mxu0 0.0
        %674 = vmatpush1.msra.mxu0 0.0
        %675 = vmatprep.subr.mxu0 0.0
        %676 = vmatpush1.msra.mxu0 0.0
        %677 = vmatprep.subr.mxu0 0.0
        %678 = vmatpush1.msra.mxu0 0.0
        %679 = vmatprep.subr.mxu0 0.0
        %680 = vmatpush1.msra.mxu0 0.0
        %681 = vmatprep.subr.mxu0 0.0
        %682 = vmatpush1.msra.mxu0 0.0
        %683 = vmatprep.subr.mxu0 0.0
        %684 = vmatpush1.msra.mxu0 0.0
        %685 = vmatprep.subr.mxu0 0.0
        %686 = vmatpush1.msra.mxu0 0.0
        %687 = vmatprep.subr.mxu0 0.0
        %688 = vmatpush1.msra.mxu0 0.0
        %689 = vmatprep.subr.mxu0 0.0
        %690 = vmatpush1.msra.mxu0 0.0
        %691 = vmatprep.subr.mxu0 0.0
        %692 = vmatpush1.msra.mxu0 0.0
        %693 = vmatprep.subr.mxu0 0.0
        %694 = vmatpush1.msra.mxu0 0.0
        %695 = vmatprep.subr.mxu0 0.0
        %696 = vmatpush1.msra.mxu0 0.0
        %697 = vmatprep.subr.mxu0 0.0
        %698 = vmatpush1.msra.mxu0 0.0
        %699 = vmatprep.subr.mxu0 0.0
        %700 = vmatpush1.msra.mxu0 0.0
        %701 = vmatprep.subr.mxu0 0.0
        %702 = vmatpush1.msra.mxu0 0.0
        %703 = vmatprep.subr.mxu0 0.0
        %704 = vmatpush1.msra.mxu0 0.0
        %705 = vmatprep.mubr.f32.mxu0 0.0
        %706 = vmatmul.mubr.f32.gmra.mrb[0].mxu0 %v426
        %v707 = vpop.f32.mrb[0].mxu0
        %v708 = vadd.f32 %v396, %v707
        %v709 = vpop.f32.mrb[0].mxu0
        %v710 = vadd.f32 %v400, %v709
        %711 = vdwg.mxu0
        %712 = vmatprep.subr.mxu0 %v297
        %713 = vmatpush1.msra.mxu0 %v296
        %714 = vmatprep.subr.mxu0 %v308
        %715 = vmatpush1.msra.mxu0 %v307
        %716 = vmatprep.subr.mxu0 %v319
        %717 = vmatpush1.msra.mxu0 %v318
        %718 = vmatprep.subr.mxu0 %v330
        %719 = vmatpush1.msra.mxu0 %v329
        %720 = vmatprep.subr.mxu0 %v341
        %721 = vmatpush1.msra.mxu0 %v340
        %722 = vmatprep.subr.mxu0 %v352
        %723 = vmatpush1.msra.mxu0 %v351
        %724 = vmatprep.subr.mxu0 %v363
        %725 = vmatpush1.msra.mxu0 %v362
        %726 = vmatprep.subr.mxu0 0.0
        %727 = vmatpush1.msra.mxu0 0.0
        %728 = vmatprep.subr.mxu0 0.0
        %729 = vmatpush1.msra.mxu0 0.0
        %730 = vmatprep.subr.mxu0 0.0
        %731 = vmatpush1.msra.mxu0 0.0
        %732 = vmatprep.subr.mxu0 0.0
        %733 = vmatpush1.msra.mxu0 0.0
        %734 = vmatprep.subr.mxu0 0.0
        %735 = vmatpush1.msra.mxu0 0.0
        %736 = vmatprep.subr.mxu0 0.0
        %737 = vmatpush1.msra.mxu0 0.0
        %738 = vmatprep.subr.mxu0 0.0
        %739 = vmatpush1.msra.mxu0 0.0
        %740 = vmatprep.subr.mxu0 0.0
        %741 = vmatpush1.msra.mxu0 0.0
        %742 = vmatprep.subr.mxu0 0.0
        %743 = vmatpush1.msra.mxu0 0.0
        %744 = vmatprep.subr.mxu0 0.0
        %745 = vmatpush1.msra.mxu0 0.0
        %746 = vmatprep.subr.mxu0 0.0
        %747 = vmatpush1.msra.mxu0 0.0
        %748 = vmatprep.subr.mxu0 0.0
        %749 = vmatpush1.msra.mxu0 0.0
        %750 = vmatprep.subr.mxu0 0.0
        %751 = vmatpush1.msra.mxu0 0.0
        %752 = vmatprep.subr.mxu0 0.0
        %753 = vmatpush1.msra.mxu0 0.0
        %754 = vmatprep.subr.mxu0 0.0
        %755 = vmatpush1.msra.mxu0 0.0
        %756 = vmatprep.subr.mxu0 0.0
        %757 = vmatpush1.msra.mxu0 0.0
        %758 = vmatprep.subr.mxu0 0.0
        %759 = vmatpush1.msra.mxu0 0.0
        %760 = vmatprep.subr.mxu0 0.0
        %761 = vmatpush1.msra.mxu0 0.0
        %762 = vmatprep.subr.mxu0 0.0
        %763 = vmatpush1.msra.mxu0 0.0
        %764 = vmatprep.subr.mxu0 0.0
        %765 = vmatpush1.msra.mxu0 0.0
        %766 = vmatprep.subr.mxu0 0.0
        %767 = vmatpush1.msra.mxu0 0.0
        %768 = vmatprep.subr.mxu0 0.0
        %769 = vmatpush1.msra.mxu0 0.0
        %770 = vmatprep.subr.mxu0 0.0
        %771 = vmatpush1.msra.mxu0 0.0
        %772 = vmatprep.subr.mxu0 0.0
        %773 = vmatpush1.msra.mxu0 0.0
        %774 = vmatprep.subr.mxu0 0.0
        %775 = vmatpush1.msra.mxu0 0.0
        %776 = vmatprep.mubr.f32.mxu0 0.0
        %777 = vmatmul.mubr.f32.gmra.mrb[0].mxu0 %v426
        %v778 = vpop.f32.mrb[0].mxu0
        %v779 = vadd.f32 %v404, %v778
        %v780 = vpop.f32.mrb[0].mxu0
        %v781 = vadd.f32 %v408, %v780
        %782 = vdwg.mxu0
        %783 = vmatprep.subr.mxu0 0.0
        %784 = vmatpush1.msra.mxu0 %v298
        %785 = vmatprep.subr.mxu0 0.0
        %786 = vmatpush1.msra.mxu0 %v309
        %787 = vmatprep.subr.mxu0 0.0
        %788 = vmatpush1.msra.mxu0 %v320
        %789 = vmatprep.subr.mxu0 0.0
        %790 = vmatpush1.msra.mxu0 %v331
        %791 = vmatprep.subr.mxu0 0.0
        %792 = vmatpush1.msra.mxu0 %v342
        %793 = vmatprep.subr.mxu0 0.0
        %794 = vmatpush1.msra.mxu0 %v353
        %795 = vmatprep.subr.mxu0 0.0
        %796 = vmatpush1.msra.mxu0 %v364
        %797 = vmatprep.subr.mxu0 0.0
        %798 = vmatpush1.msra.mxu0 0.0
        %799 = vmatprep.subr.mxu0 0.0
        %800 = vmatpush1.msra.mxu0 0.0
        %801 = vmatprep.subr.mxu0 0.0
        %802 = vmatpush1.msra.mxu0 0.0
        %803 = vmatprep.subr.mxu0 0.0
        %804 = vmatpush1.msra.mxu0 0.0
        %805 = vmatprep.subr.mxu0 0.0
        %806 = vmatpush1.msra.mxu0 0.0
        %807 = vmatprep.subr.mxu0 0.0
        %808 = vmatpush1.msra.mxu0 0.0
        %809 = vmatprep.subr.mxu0 0.0
        %810 = vmatpush1.msra.mxu0 0.0
        %811 = vmatprep.subr.mxu0 0.0
        %812 = vmatpush1.msra.mxu0 0.0
        %813 = vmatprep.subr.mxu0 0.0
        %814 = vmatpush1.msra.mxu0 0.0
        %815 = vmatprep.subr.mxu0 0.0
        %816 = vmatpush1.msra.mxu0 0.0
        %817 = vmatprep.subr.mxu0 0.0
        %818 = vmatpush1.msra.mxu0 0.0
        %819 = vmatprep.subr.mxu0 0.0
        %820 = vmatpush1.msra.mxu0 0.0
        %821 = vmatprep.subr.mxu0 0.0
        %822 = vmatpush1.msra.mxu0 0.0
        %823 = vmatprep.subr.mxu0 0.0
        %824 = vmatpush1.msra.mxu0 0.0
        %825 = vmatprep.subr.mxu0 0.0
        %826 = vmatpush1.msra.mxu0 0.0
        %827 = vmatprep.subr.mxu0 0.0
        %828 = vmatpush1.msra.mxu0 0.0
        %829 = vmatprep.subr.mxu0 0.0
        %830 = vmatpush1.msra.mxu0 0.0
        %831 = vmatprep.subr.mxu0 0.0
        %832 = vmatpush1.msra.mxu0 0.0
        %833 = vmatprep.subr.mxu0 0.0
        %834 = vmatpush1.msra.mxu0 0.0
        %835 = vmatprep.subr.mxu0 0.0
        %836 = vmatpush1.msra.mxu0 0.0
        %837 = vmatprep.subr.mxu0 0.0
        %838 = vmatpush1.msra.mxu0 0.0
        %839 = vmatprep.subr.mxu0 0.0
        %840 = vmatpush1.msra.mxu0 0.0
        %841 = vmatprep.subr.mxu0 0.0
        %842 = vmatpush1.msra.mxu0 0.0
        %843 = vmatprep.subr.mxu0 0.0
        %844 = vmatpush1.msra.mxu0 0.0
        %845 = vmatprep.subr.mxu0 0.0
        %846 = vmatpush1.msra.mxu0 0.0
        %847 = vmatprep.mubr.f32.mxu0 0.0
        %848 = vmatmul.mubr.f32.gmra.mrb[0].mxu0 %v426
        %v849 = vpop.f32.mrb[0].mxu0
        %v850 = vadd.f32 %v412, %v849
        %v851 = vpop.f32.mrb[0].mxu0
        %852 = vdwg.mxu0
        %v853 = vxor.u32 %v495, 2147483648
        %v854 = vxor.u32 %v497, 2147483648
        %v855 = vxor.u32 %v566, 2147483648
        %v856 = vxor.u32 %v568, 2147483648
        %v857 = vxor.u32 %v637, 2147483648
        %v858 = vxor.u32 %v639, 2147483648
        %v859 = vxor.u32 %v708, 2147483648
        %v860 = vxor.u32 %v710, 2147483648
        %v861 = vxor.u32 %v779, 2147483648
        %v862 = vxor.u32 %v781, 2147483648
        %v863 = vxor.u32 %v850, 2147483648
        %v864 = vmul.f32 %v853, 1.442695
        %v865 = vpow.pop %v864
        %v866 = vmul.f32 %v854, 1.442695
        %v867 = vpow.pop %v866
        %v868 = vmul.f32 %v855, 1.442695
        %v869 = vpow.pop %v868
        %v870 = vmul.f32 %v856, 1.442695
        %v871 = vpow.pop %v870
        %v872 = vmul.f32 %v857, 1.442695
        %v873 = vpow.pop %v872
        %v874 = vmul.f32 %v858, 1.442695
        %v875 = vpow.pop %v874
        %v876 = vmul.f32 %v859, 1.442695
        %v877 = vpow.pop %v876
        %v878 = vmul.f32 %v860, 1.442695
        %v879 = vpow.pop %v878
        %v880 = vmul.f32 %v861, 1.442695
        %v881 = vpow.pop %v880
        %v882 = vmul.f32 %v862, 1.442695
        %v883 = vpow.pop %v882
        %v884 = vmul.f32 %v863, 1.442695
        %v885 = vpow.pop %v884
        %v886 = vadd.f32 %v865, 1.0
        %v887 = vadd.f32 %v867, 1.0
        %v888 = vadd.f32 %v869, 1.0
        %v889 = vadd.f32 %v871, 1.0
        %v890 = vadd.f32 %v873, 1.0
        %v891 = vadd.f32 %v875, 1.0
        %v892 = vadd.f32 %v877, 1.0
        %v893 = vadd.f32 %v879, 1.0
        %v894 = vadd.f32 %v881, 1.0
        %v895 = vadd.f32 %v883, 1.0
        %v896 = vadd.f32 %v885, 1.0
        %v897 = vrcp.pop %v886
        %v898 = vmul.f32 1.0, %v897
        %v899 = vrcp.pop %v887
        %v900 = vmul.f32 1.0, %v899
        %v901 = vrcp.pop %v888
        %v902 = vmul.f32 1.0, %v901
        %v903 = vrcp.pop %v889
        %v904 = vmul.f32 1.0, %v903
        %v905 = vrcp.pop %v890
        %v906 = vmul.f32 1.0, %v905
        %v907 = vrcp.pop %v891
        %v908 = vmul.f32 1.0, %v907
        %v909 = vrcp.pop %v892
        %v910 = vmul.f32 1.0, %v909
        %v911 = vrcp.pop %v893
        %v912 = vmul.f32 1.0, %v911
        %v913 = vrcp.pop %v894
        %v914 = vmul.f32 1.0, %v913
        %v915 = vrcp.pop %v895
        %v916 = vmul.f32 1.0, %v915
        %v917 = vrcp.pop %v896
        %v918 = vmul.f32 1.0, %v917
        %v930 = vcombine.low %v898, %v900
        %v931 = vcombine.low %v902, %v904
        %v932 = vcombine.low %v906, %v908
        %v933 = vcombine.low %v910, %v912
        %v935 = vunpack.c.l.s4 1966171168
        %v936 = vunpack.c.0.s8 %v935
        %v937 = vlaneseq
        %v938 = vshrl.u32 %v937, 7
        %v939 = vsub.s32 %v936, %v938
        %v940 = vrot.slane %v930, %v939
        %v942 = vunpack.c.l.s4 1966171168
        %v943 = vunpack.c.0.s8 %v942
        %v944 = vlaneseq
        %v945 = vshrl.u32 %v944, 7
        %v946 = vsub.s32 %v943, %v945
        %v947 = vrot.slane %v931, %v946
        %v949 = vunpack.c.l.s4 1966171168
        %v950 = vunpack.c.0.s8 %v949
        %v951 = vlaneseq
        %v952 = vshrl.u32 %v951, 7
        %v953 = vsub.s32 %v950, %v952
        %v954 = vrot.slane %v932, %v953
        %v956 = vunpack.c.l.s4 1966171168
        %v957 = vunpack.c.0.s8 %v956
        %v958 = vlaneseq
        %v959 = vshrl.u32 %v958, 7
        %v960 = vsub.s32 %v957, %v959
        %v961 = vrot.slane %v933, %v960
        %v962 = vcombine.low %v940, %v947
        %v963 = vcombine.low %v954, %v961
        %v965 = vunpack.c.l.s4 1966171168
        %v966 = vunpack.c.0.s8 %v965
        %v967 = vlaneseq
        %v968 = vshrl.u32 %v967, 7
        %v969 = vsub.s32 %v966, %v968
        %v970 = vrot.slane %v962, %v969
        %v972 = vunpack.c.l.s4 1966171168
        %v973 = vunpack.c.0.s8 %v972
        %v974 = vlaneseq
        %v975 = vshrl.u32 %v974, 7
        %v976 = vsub.s32 %v973, %v975
        %v977 = vrot.slane %v963, %v976
        %v978 = vcombine.low %v970, %v977
        %v979 = vcombine.low %v914, %v916
        %v981 = vunpack.c.l.s4 1966171168
        %v982 = vunpack.c.0.s8 %v981
        %v983 = vlaneseq
        %v984 = vshrl.u32 %v983, 7
        %v985 = vsub.s32 %v982, %v984
        %v986 = vrot.slane %v979, %v985
        %v988 = vunpack.c.l.s4 1966171168
        %v989 = vunpack.c.0.s8 %v988
        %v990 = vlaneseq
        %v991 = vshrl.u32 %v990, 7
        %v992 = vsub.s32 %v989, %v991
        %v993 = vrot.slane %v918, %v992
        %v994 = vcombine.low %v986, %v993
        %v996 = vunpack.c.l.s4 1966171168
        %v997 = vunpack.c.0.s8 %v996
        %v998 = vlaneseq
        %v999 = vshrl.u32 %v998, 7
        %v1000 = vsub.s32 %v997, %v999
        %v1001 = vrot.slane %v994, %v1000
        %1004 = vst [vmem:[#allocation2] sm:$0xff] %v978
        %v1005 = vlaneseq
        %vm1006 = vcmp.ge.s32.totalorder %v1005, 0
        %vm1007 = vcmp.lt.s32.totalorder %v1005, 320
        %vm1008 = vmand %vm1006, %vm1007
        %1009 = vst.msk [vmem:[#allocation2 + $0x8] sm:$0x7] %vm1008, %v1001
      $region48: #{se_conv_bn.1} parent=43 // pred_fallthru
        _
      %v1010 = vld [vmem:[%s267] sm:$0xff]
      %v1011 = vld [vmem:[%s267 + $0x8] sm:$0xff]
      %v1012 = vld [vmem:[%s267 + $0x10] sm:$0xff]
      %v1013 = vld [vmem:[%s267 + $0x18] sm:$0xff]
      %v1014 = vld [vmem:[%s267 + $0x20] sm:$0xff]
      %v1015 = vld [vmem:[%s267 + $0x28] sm:$0xf]
      %v1016 = vld [vmem:[%s267 + $0x2c] sm:$0xff]
      %v1017 = vld [vmem:[%s267 + $0x34] sm:$0xff]
      %v1018 = vld [vmem:[%s267 + $0x3c] sm:$0xff]
      %v1019 = vld [vmem:[%s267 + $0x44] sm:$0xff]
      %v1020 = vld [vmem:[%s267 + $0x4c] sm:$0xff]
      %v1021 = vld [vmem:[%s267 + $0x54] sm:$0xf]
      %v1022 = vld [vmem:[%s267 + $0x58] sm:$0xff]
      %v1023 = vld [vmem:[%s267 + $0x60] sm:$0xff]
      %v1024 = vld [vmem:[%s267 + $0x68] sm:$0xff]
      %v1025 = vld [vmem:[%s267 + $0x70] sm:$0xff]
      %v1026 = vld [vmem:[%s267 + $0x78] sm:$0xff]
      %v1027 = vld [vmem:[%s267 + $0x80] sm:$0xf]
      %v1028 = vld [vmem:[%s267 + $0x84] sm:$0xff]
      %v1029 = vld [vmem:[%s267 + $0x8c] sm:$0xff]
      %v1030 = vld [vmem:[%s267 + $0x94] sm:$0xff]
      %v1031 = vld [vmem:[%s267 + $0x9c] sm:$0xff]
      %v1032 = vld [vmem:[%s267 + $0xa4] sm:$0xff]
      %v1033 = vld [vmem:[%s267 + $0xac] sm:$0xf]
      %v1034 = vld [vmem:[%s267 + $0xb0] sm:$0xff]
      %v1035 = vld [vmem:[%s267 + $0xb8] sm:$0xff]
      %v1036 = vld [vmem:[%s267 + $0xc0] sm:$0xff]
      %v1037 = vld [vmem:[%s267 + $0xc8] sm:$0xff]
      %v1038 = vld [vmem:[%s267 + $0xd0] sm:$0xff]
      %v1039 = vld [vmem:[%s267 + $0xd8] sm:$0xf]
      %v1040 = vld [vmem:[%s267 + $0xdc] sm:$0xff]
      %v1041 = vld [vmem:[%s267 + $0xe4] sm:$0xff]
      %v1042 = vld [vmem:[%s267 + $0xec] sm:$0xff]
      %v1043 = vld [vmem:[%s267 + $0xf4] sm:$0xff]
      %v1044 = vld [vmem:[%s267 + $0xfc] sm:$0xff]
      %v1045 = vld [vmem:[%s267 + $0x104] sm:$0xf]
      %v1046 = vld [vmem:[%s267 + $0x108] sm:$0xff]
      %v1047 = vld [vmem:[%s267 + $0x110] sm:$0xff]
      %v1048 = vld [vmem:[%s267 + $0x118] sm:$0xff]
      %v1049 = vld [vmem:[%s267 + $0x120] sm:$0xff]
      %v1050 = vld [vmem:[%s267 + $0x128] sm:$0xff]
      %v1051 = vld [vmem:[%s267 + $0x130] sm:$0xf]
      %v1052 = vld [vmem:[%s267 + $0x134] sm:$0xff]
      %v1053 = vld [vmem:[%s267 + $0x13c] sm:$0xff]
      %v1054 = vld [vmem:[%s267 + $0x144] sm:$0xff]
      %v1055 = vld [vmem:[%s267 + $0x14c] sm:$0xff]
      %v1056 = vld [vmem:[%s267 + $0x154] sm:$0xff]
      %v1057 = vld [vmem:[%s267 + $0x15c] sm:$0xf]
      %v1058 = vld [vmem:[%s267 + $0x160] sm:$0xff]
      %v1059 = vld [vmem:[%s267 + $0x168] sm:$0xff]
      %v1060 = vld [vmem:[%s267 + $0x170] sm:$0xff]
      %v1061 = vld [vmem:[%s267 + $0x178] sm:$0xff]
      %v1062 = vld [vmem:[%s267 + $0x180] sm:$0xff]
      %v1063 = vld [vmem:[%s267 + $0x188] sm:$0xf]
      %v1064 = vld [vmem:[%s267 + $0x18c] sm:$0xff]
      %v1065 = vld [vmem:[%s267 + $0x194] sm:$0xff]
      %v1066 = vld [vmem:[%s267 + $0x19c] sm:$0xff]
      %v1067 = vld [vmem:[%s267 + $0x1a4] sm:$0xff]
      %v1068 = vld [vmem:[%s267 + $0x1ac] sm:$0xff]
      %v1069 = vld [vmem:[%s267 + $0x1b4] sm:$0xf]
      %v1070 = vld [vmem:[%s267 + $0x1b8] sm:$0xff]
      %v1071 = vld [vmem:[%s267 + $0x1c0] sm:$0xff]
      %v1072 = vld [vmem:[%s267 + $0x1c8] sm:$0xff]
      %v1073 = vld [vmem:[%s267 + $0x1d0] sm:$0xff]
      %v1074 = vld [vmem:[%s267 + $0x1d8] sm:$0xff]
      %v1075 = vld [vmem:[%s267 + $0x1e0] sm:$0xf]
      %v1076 = vld [vmem:[%s267 + $0x1e4] sm:$0xff]
      %v1077 = vld [vmem:[%s267 + $0x1ec] sm:$0xff]
      %v1078 = vld [vmem:[%s267 + $0x1f4] sm:$0xff]
      %v1079 = vld [vmem:[%s267 + $0x1fc] sm:$0xff]
      %v1080 = vld [vmem:[%s267 + $0x204] sm:$0xff]
      %v1081 = vld [vmem:[%s267 + $0x20c] sm:$0xf]
      %v1082 = vld [vmem:[%s267 + $0x210] sm:$0xff]
      %v1083 = vld [vmem:[%s267 + $0x218] sm:$0xff]
      %v1084 = vld [vmem:[%s267 + $0x220] sm:$0xff]
      %v1085 = vld [vmem:[%s267 + $0x228] sm:$0xff]
      %v1086 = vld [vmem:[%s267 + $0x230] sm:$0xff]
      %v1087 = vld [vmem:[%s267 + $0x238] sm:$0xf]
      %v1088 = vld [vmem:[%s267 + $0x23c] sm:$0xff]
      %v1089 = vld [vmem:[%s267 + $0x244] sm:$0xff]
      %v1090 = vld [vmem:[%s267 + $0x24c] sm:$0xff]
      %v1091 = vld [vmem:[%s267 + $0x254] sm:$0xff]
      %v1092 = vld [vmem:[%s267 + $0x25c] sm:$0xff]
      %v1093 = vld [vmem:[%s267 + $0x264] sm:$0xf]
      %v1094 = vld [vmem:[#allocation2] sm:$0xff]
      %v1095 = vld [vmem:[#allocation2 + $0x8] sm:$0x7]
      %v1096 = vunpack.c.l.bf16 %v1010
      %v1097 = vunpack.c.h.bf16 %v1010
      %v1098 = vunpack.c.l.bf16 %v1011
      %v1099 = vunpack.c.h.bf16 %v1011
      %v1100 = vunpack.c.l.bf16 %v1012
      %v1101 = vunpack.c.h.bf16 %v1012
      %v1102 = vunpack.c.l.bf16 %v1013
      %v1103 = vunpack.c.h.bf16 %v1013
      %v1104 = vunpack.c.l.bf16 %v1014
      %v1105 = vunpack.c.h.bf16 %v1014
      %v1106 = vunpack.c.l.bf16 %v1015
      %v1107 = vunpack.c.l.bf16 %v1016
      %v1108 = vunpack.c.h.bf16 %v1016
      %v1109 = vunpack.c.l.bf16 %v1017
      %v1110 = vunpack.c.h.bf16 %v1017
      %v1111 = vunpack.c.l.bf16 %v1018
      %v1112 = vunpack.c.h.bf16 %v1018
      %v1113 = vunpack.c.l.bf16 %v1019
      %v1114 = vunpack.c.h.bf16 %v1019
      %v1115 = vunpack.c.l.bf16 %v1020
      %v1116 = vunpack.c.h.bf16 %v1020
      %v1117 = vunpack.c.l.bf16 %v1021
      %v1118 = vunpack.c.l.bf16 %v1022
      %v1119 = vunpack.c.h.bf16 %v1022
      %v1120 = vunpack.c.l.bf16 %v1023
      %v1121 = vunpack.c.h.bf16 %v1023
      %v1122 = vunpack.c.l.bf16 %v1024
      %v1123 = vunpack.c.h.bf16 %v1024
      %v1124 = vunpack.c.l.bf16 %v1025
      %v1125 = vunpack.c.h.bf16 %v1025
      %v1126 = vunpack.c.l.bf16 %v1026
      %v1127 = vunpack.c.h.bf16 %v1026
      %v1128 = vunpack.c.l.bf16 %v1027
      %v1129 = vunpack.c.l.bf16 %v1028
      %v1130 = vunpack.c.h.bf16 %v1028
      %v1131 = vunpack.c.l.bf16 %v1029
      %v1132 = vunpack.c.h.bf16 %v1029
      %v1133 = vunpack.c.l.bf16 %v1030
      %v1134 = vunpack.c.h.bf16 %v1030
      %v1135 = vunpack.c.l.bf16 %v1031
      %v1136 = vunpack.c.h.bf16 %v1031
      %v1137 = vunpack.c.l.bf16 %v1032
      %v1138 = vunpack.c.h.bf16 %v1032
      %v1139 = vunpack.c.l.bf16 %v1033
      %v1140 = vunpack.c.l.bf16 %v1034
      %v1141 = vunpack.c.h.bf16 %v1034
      %v1142 = vunpack.c.l.bf16 %v1035
      %v1143 = vunpack.c.h.bf16 %v1035
      %v1144 = vunpack.c.l.bf16 %v1036
      %v1145 = vunpack.c.h.bf16 %v1036
      %v1146 = vunpack.c.l.bf16 %v1037
      %v1147 = vunpack.c.h.bf16 %v1037
      %v1148 = vunpack.c.l.bf16 %v1038
      %v1149 = vunpack.c.h.bf16 %v1038
      %v1150 = vunpack.c.l.bf16 %v1039
      %v1151 = vunpack.c.l.bf16 %v1040
      %v1152 = vunpack.c.h.bf16 %v1040
      %v1153 = vunpack.c.l.bf16 %v1041
      %v1154 = vunpack.c.h.bf16 %v1041
      %v1155 = vunpack.c.l.bf16 %v1042
      %v1156 = vunpack.c.h.bf16 %v1042
      %v1157 = vunpack.c.l.bf16 %v1043
      %v1158 = vunpack.c.h.bf16 %v1043
      %v1159 = vunpack.c.l.bf16 %v1044
      %v1160 = vunpack.c.h.bf16 %v1044
      %v1161 = vunpack.c.l.bf16 %v1045
      %v1162 = vunpack.c.l.bf16 %v1046
      %v1163 = vunpack.c.h.bf16 %v1046
      %v1164 = vunpack.c.l.bf16 %v1047
      %v1165 = vunpack.c.h.bf16 %v1047
      %v1166 = vunpack.c.l.bf16 %v1048
      %v1167 = vunpack.c.h.bf16 %v1048
      %v1168 = vunpack.c.l.bf16 %v1049
      %v1169 = vunpack.c.h.bf16 %v1049
      %v1170 = vunpack.c.l.bf16 %v1050
      %v1171 = vunpack.c.h.bf16 %v1050
      %v1172 = vunpack.c.l.bf16 %v1051
      %v1173 = vunpack.c.l.bf16 %v1052
      %v1174 = vunpack.c.h.bf16 %v1052
      %v1175 = vunpack.c.l.bf16 %v1053
      %v1176 = vunpack.c.h.bf16 %v1053
      %v1177 = vunpack.c.l.bf16 %v1054
      %v1178 = vunpack.c.h.bf16 %v1054
      %v1179 = vunpack.c.l.bf16 %v1055
      %v1180 = vunpack.c.h.bf16 %v1055
      %v1181 = vunpack.c.l.bf16 %v1056
      %v1182 = vunpack.c.h.bf16 %v1056
      %v1183 = vunpack.c.l.bf16 %v1057
      %v1184 = vunpack.c.l.bf16 %v1058
      %v1185 = vunpack.c.h.bf16 %v1058
      %v1186 = vunpack.c.l.bf16 %v1059
      %v1187 = vunpack.c.h.bf16 %v1059
      %v1188 = vunpack.c.l.bf16 %v1060
      %v1189 = vunpack.c.h.bf16 %v1060
      %v1190 = vunpack.c.l.bf16 %v1061
      %v1191 = vunpack.c.h.bf16 %v1061
      %v1192 = vunpack.c.l.bf16 %v1062
      %v1193 = vunpack.c.h.bf16 %v1062
      %v1194 = vunpack.c.l.bf16 %v1063
      %v1195 = vunpack.c.l.bf16 %v1064
      %v1196 = vunpack.c.h.bf16 %v1064
      %v1197 = vunpack.c.l.bf16 %v1065
      %v1198 = vunpack.c.h.bf16 %v1065
      %v1199 = vunpack.c.l.bf16 %v1066
      %v1200 = vunpack.c.h.bf16 %v1066
      %v1201 = vunpack.c.l.bf16 %v1067
      %v1202 = vunpack.c.h.bf16 %v1067
      %v1203 = vunpack.c.l.bf16 %v1068
      %v1204 = vunpack.c.h.bf16 %v1068
      %v1205 = vunpack.c.l.bf16 %v1069
      %v1206 = vunpack.c.l.bf16 %v1070
      %v1207 = vunpack.c.h.bf16 %v1070
      %v1208 = vunpack.c.l.bf16 %v1071
      %v1209 = vunpack.c.h.bf16 %v1071
      %v1210 = vunpack.c.l.bf16 %v1072
      %v1211 = vunpack.c.h.bf16 %v1072
      %v1212 = vunpack.c.l.bf16 %v1073
      %v1213 = vunpack.c.h.bf16 %v1073
      %v1214 = vunpack.c.l.bf16 %v1074
      %v1215 = vunpack.c.h.bf16 %v1074
      %v1216 = vunpack.c.l.bf16 %v1075
      %v1217 = vunpack.c.l.bf16 %v1076
      %v1218 = vunpack.c.h.bf16 %v1076
      %v1219 = vunpack.c.l.bf16 %v1077
      %v1220 = vunpack.c.h.bf16 %v1077
      %v1221 = vunpack.c.l.bf16 %v1078
      %v1222 = vunpack.c.h.bf16 %v1078
      %v1223 = vunpack.c.l.bf16 %v1079
      %v1224 = vunpack.c.h.bf16 %v1079
      %v1225 = vunpack.c.l.bf16 %v1080
      %v1226 = vunpack.c.h.bf16 %v1080
      %v1227 = vunpack.c.l.bf16 %v1081
      %v1228 = vunpack.c.l.bf16 %v1082
      %v1229 = vunpack.c.h.bf16 %v1082
      %v1230 = vunpack.c.l.bf16 %v1083
      %v1231 = vunpack.c.h.bf16 %v1083
      %v1232 = vunpack.c.l.bf16 %v1084
      %v1233 = vunpack.c.h.bf16 %v1084
      %v1234 = vunpack.c.l.bf16 %v1085
      %v1235 = vunpack.c.h.bf16 %v1085
      %v1236 = vunpack.c.l.bf16 %v1086
      %v1237 = vunpack.c.h.bf16 %v1086
      %v1238 = vunpack.c.l.bf16 %v1087
      %v1239 = vunpack.c.l.bf16 %v1088
      %v1240 = vunpack.c.h.bf16 %v1088
      %v1241 = vunpack.c.l.bf16 %v1089
      %v1242 = vunpack.c.h.bf16 %v1089
      %v1243 = vunpack.c.l.bf16 %v1090
      %v1244 = vunpack.c.h.bf16 %v1090
      %v1245 = vunpack.c.l.bf16 %v1091
      %v1246 = vunpack.c.h.bf16 %v1091
      %v1247 = vunpack.c.l.bf16 %v1092
      %v1248 = vunpack.c.h.bf16 %v1092
      %v1249 = vunpack.c.l.bf16 %v1093
      %v1252 = vlaneseq
      %v1253 = vshrl.u32 %v1252, 7
      %v1254 = vsub.s32 0, %v1253
      %v1255 = vrot.slane %v1094, %v1254
      %v1256 = vlaneseq
      %v1257 = vshrl.u32 %v1256, 7
      %v1258 = vsub.s32 1, %v1257
      %v1259 = vrot.slane %v1094, %v1258
      %v1260 = vlaneseq
      %v1261 = vshrl.u32 %v1260, 7
      %v1262 = vsub.s32 2, %v1261
      %v1263 = vrot.slane %v1094, %v1262
      %v1264 = vlaneseq
      %v1265 = vshrl.u32 %v1264, 7
      %v1266 = vsub.s32 3, %v1265
      %v1267 = vrot.slane %v1094, %v1266
      %v1268 = vlaneseq
      %v1269 = vshrl.u32 %v1268, 7
      %v1270 = vsub.s32 4, %v1269
      %v1271 = vrot.slane %v1094, %v1270
      %v1272 = vlaneseq
      %v1273 = vshrl.u32 %v1272, 7
      %v1274 = vsub.s32 5, %v1273
      %v1275 = vrot.slane %v1094, %v1274
      %v1276 = vlaneseq
      %v1277 = vshrl.u32 %v1276, 7
      %v1278 = vsub.s32 6, %v1277
      %v1279 = vrot.slane %v1094, %v1278
      %v1280 = vlaneseq
      %v1281 = vshrl.u32 %v1280, 7
      %v1282 = vsub.s32 7, %v1281
      %v1283 = vrot.slane %v1094, %v1282
      %v1284 = vlaneseq
      %v1285 = vshrl.u32 %v1284, 7
      %v1286 = vsub.s32 0, %v1285
      %v1287 = vrot.slane %v1095, %v1286
      %v1288 = vlaneseq
      %v1289 = vshrl.u32 %v1288, 7
      %v1290 = vsub.s32 1, %v1289
      %v1291 = vrot.slane %v1095, %v1290
      %v1292 = vlaneseq
      %v1293 = vshrl.u32 %v1292, 7
      %v1294 = vsub.s32 2, %v1293
      %v1295 = vrot.slane %v1095, %v1294
      %v1307 = vmul.f32 %v1096, %v1255
      %v1308 = vmul.f32 %v1097, %v1259
      %v1309 = vmul.f32 %v1098, %v1263
      %v1310 = vmul.f32 %v1099, %v1267
      %v1311 = vmul.f32 %v1100, %v1271
      %v1312 = vmul.f32 %v1101, %v1275
      %v1313 = vmul.f32 %v1102, %v1279
      %v1314 = vmul.f32 %v1103, %v1283
      %v1315 = vmul.f32 %v1104, %v1287
      %v1316 = vmul.f32 %v1105, %v1291
      %v1317 = vmul.f32 %v1106, %v1295
      %v1318 = vmul.f32 %v1107, %v1255
      %v1319 = vmul.f32 %v1108, %v1259
      %v1320 = vmul.f32 %v1109, %v1263
      %v1321 = vmul.f32 %v1110, %v1267
      %v1322 = vmul.f32 %v1111, %v1271
      %v1323 = vmul.f32 %v1112, %v1275
      %v1324 = vmul.f32 %v1113, %v1279
      %v1325 = vmul.f32 %v1114, %v1283
      %v1326 = vmul.f32 %v1115, %v1287
      %v1327 = vmul.f32 %v1116, %v1291
      %v1328 = vmul.f32 %v1117, %v1295
      %v1329 = vmul.f32 %v1118, %v1255
      %v1330 = vmul.f32 %v1119, %v1259
      %v1331 = vmul.f32 %v1120, %v1263
      %v1332 = vmul.f32 %v1121, %v1267
      %v1333 = vmul.f32 %v1122, %v1271
      %v1334 = vmul.f32 %v1123, %v1275
      %v1335 = vmul.f32 %v1124, %v1279
      %v1336 = vmul.f32 %v1125, %v1283
      %v1337 = vmul.f32 %v1126, %v1287
      %v1338 = vmul.f32 %v1127, %v1291
      %v1339 = vmul.f32 %v1128, %v1295
      %v1340 = vmul.f32 %v1129, %v1255
      %v1341 = vmul.f32 %v1130, %v1259
      %v1342 = vmul.f32 %v1131, %v1263
      %v1343 = vmul.f32 %v1132, %v1267
      %v1344 = vmul.f32 %v1133, %v1271
      %v1345 = vmul.f32 %v1134, %v1275
      %v1346 = vmul.f32 %v1135, %v1279
      %v1347 = vmul.f32 %v1136, %v1283
      %v1348 = vmul.f32 %v1137, %v1287
      %v1349 = vmul.f32 %v1138, %v1291
      %v1350 = vmul.f32 %v1139, %v1295
      %v1351 = vmul.f32 %v1140, %v1255
      %v1352 = vmul.f32 %v1141, %v1259
      %v1353 = vmul.f32 %v1142, %v1263
      %v1354 = vmul.f32 %v1143, %v1267
      %v1355 = vmul.f32 %v1144, %v1271
      %v1356 = vmul.f32 %v1145, %v1275
      %v1357 = vmul.f32 %v1146, %v1279
      %v1358 = vmul.f32 %v1147, %v1283
      %v1359 = vmul.f32 %v1148, %v1287
      %v1360 = vmul.f32 %v1149, %v1291
      %v1361 = vmul.f32 %v1150, %v1295
      %v1362 = vmul.f32 %v1151, %v1255
      %v1363 = vmul.f32 %v1152, %v1259
      %v1364 = vmul.f32 %v1153, %v1263
      %v1365 = vmul.f32 %v1154, %v1267
      %v1366 = vmul.f32 %v1155, %v1271
      %v1367 = vmul.f32 %v1156, %v1275
      %v1368 = vmul.f32 %v1157, %v1279
      %v1369 = vmul.f32 %v1158, %v1283
      %v1370 = vmul.f32 %v1159, %v1287
      %v1371 = vmul.f32 %v1160, %v1291
      %v1372 = vmul.f32 %v1161, %v1295
      %v1373 = vmul.f32 %v1162, %v1255
      %v1374 = vmul.f32 %v1163, %v1259
      %v1375 = vmul.f32 %v1164, %v1263
      %v1376 = vmul.f32 %v1165, %v1267
      %v1377 = vmul.f32 %v1166, %v1271
      %v1378 = vmul.f32 %v1167, %v1275
      %v1379 = vmul.f32 %v1168, %v1279
      %v1380 = vmul.f32 %v1169, %v1283
      %v1381 = vmul.f32 %v1170, %v1287
      %v1382 = vmul.f32 %v1171, %v1291
      %v1383 = vmul.f32 %v1172, %v1295
      %v1384 = vmul.f32 %v1173, %v1255
      %v1385 = vmul.f32 %v1174, %v1259
      %v1386 = vmul.f32 %v1175, %v1263
      %v1387 = vmul.f32 %v1176, %v1267
      %v1388 = vmul.f32 %v1177, %v1271
      %v1389 = vmul.f32 %v1178, %v1275
      %v1390 = vmul.f32 %v1179, %v1279
      %v1391 = vmul.f32 %v1180, %v1283
      %v1392 = vmul.f32 %v1181, %v1287
      %v1393 = vmul.f32 %v1182, %v1291
      %v1394 = vmul.f32 %v1183, %v1295
      %v1395 = vmul.f32 %v1184, %v1255
      %v1396 = vmul.f32 %v1185, %v1259
      %v1397 = vmul.f32 %v1186, %v1263
      %v1398 = vmul.f32 %v1187, %v1267
      %v1399 = vmul.f32 %v1188, %v1271
      %v1400 = vmul.f32 %v1189, %v1275
      %v1401 = vmul.f32 %v1190, %v1279
      %v1402 = vmul.f32 %v1191, %v1283
      %v1403 = vmul.f32 %v1192, %v1287
      %v1404 = vmul.f32 %v1193, %v1291
      %v1405 = vmul.f32 %v1194, %v1295
      %v1406 = vmul.f32 %v1195, %v1255
      %v1407 = vmul.f32 %v1196, %v1259
      %v1408 = vmul.f32 %v1197, %v1263
      %v1409 = vmul.f32 %v1198, %v1267
      %v1410 = vmul.f32 %v1199, %v1271
      %v1411 = vmul.f32 %v1200, %v1275
      %v1412 = vmul.f32 %v1201, %v1279
      %v1413 = vmul.f32 %v1202, %v1283
      %v1414 = vmul.f32 %v1203, %v1287
      %v1415 = vmul.f32 %v1204, %v1291
      %v1416 = vmul.f32 %v1205, %v1295
      %v1417 = vmul.f32 %v1206, %v1255
      %v1418 = vmul.f32 %v1207, %v1259
      %v1419 = vmul.f32 %v1208, %v1263
      %v1420 = vmul.f32 %v1209, %v1267
      %v1421 = vmul.f32 %v1210, %v1271
      %v1422 = vmul.f32 %v1211, %v1275
      %v1423 = vmul.f32 %v1212, %v1279
      %v1424 = vmul.f32 %v1213, %v1283
      %v1425 = vmul.f32 %v1214, %v1287
      %v1426 = vmul.f32 %v1215, %v1291
      %v1427 = vmul.f32 %v1216, %v1295
      %v1428 = vmul.f32 %v1217, %v1255
      %v1429 = vmul.f32 %v1218, %v1259
      %v1430 = vmul.f32 %v1219, %v1263
      %v1431 = vmul.f32 %v1220, %v1267
      %v1432 = vmul.f32 %v1221, %v1271
      %v1433 = vmul.f32 %v1222, %v1275
      %v1434 = vmul.f32 %v1223, %v1279
      %v1435 = vmul.f32 %v1224, %v1283
      %v1436 = vmul.f32 %v1225, %v1287
      %v1437 = vmul.f32 %v1226, %v1291
      %v1438 = vmul.f32 %v1227, %v1295
      %v1439 = vmul.f32 %v1228, %v1255
      %v1440 = vmul.f32 %v1229, %v1259
      %v1441 = vmul.f32 %v1230, %v1263
      %v1442 = vmul.f32 %v1231, %v1267
      %v1443 = vmul.f32 %v1232, %v1271
      %v1444 = vmul.f32 %v1233, %v1275
      %v1445 = vmul.f32 %v1234, %v1279
      %v1446 = vmul.f32 %v1235, %v1283
      %v1447 = vmul.f32 %v1236, %v1287
      %v1448 = vmul.f32 %v1237, %v1291
      %v1449 = vmul.f32 %v1238, %v1295
      %v1450 = vmul.f32 %v1239, %v1255
      %v1451 = vmul.f32 %v1240, %v1259
      %v1452 = vmul.f32 %v1241, %v1263
      %v1453 = vmul.f32 %v1242, %v1267
      %v1454 = vmul.f32 %v1243, %v1271
      %v1455 = vmul.f32 %v1244, %v1275
      %v1456 = vmul.f32 %v1245, %v1279
      %v1457 = vmul.f32 %v1246, %v1283
      %v1458 = vmul.f32 %v1247, %v1287
      %v1459 = vmul.f32 %v1248, %v1291
      %v1460 = vmul.f32 %v1249, %v1295
      %v1461 = vpack.c.bf16 %v1318, %v1307
      %v1462 = vpack.c.bf16 %v1319, %v1308
      %v1463 = vpack.c.bf16 %v1320, %v1309
      %v1464 = vpack.c.bf16 %v1321, %v1310
      %v1465 = vpack.c.bf16 %v1322, %v1311
      %v1466 = vpack.c.bf16 %v1323, %v1312
      %v1467 = vpack.c.bf16 %v1324, %v1313
      %v1468 = vpack.c.bf16 %v1325, %v1314
      %v1469 = vpack.c.bf16 %v1326, %v1315
      %v1470 = vpack.c.bf16 %v1327, %v1316
      %v1471 = vpack.c.bf16 %v1328, %v1317
      %v1472 = vpack.c.bf16 %v1340, %v1329
      %v1473 = vpack.c.bf16 %v1341, %v1330
      %v1474 = vpack.c.bf16 %v1342, %v1331
      %v1475 = vpack.c.bf16 %v1343, %v1332
      %v1476 = vpack.c.bf16 %v1344, %v1333
      %v1477 = vpack.c.bf16 %v1345, %v1334
      %v1478 = vpack.c.bf16 %v1346, %v1335
      %v1479 = vpack.c.bf16 %v1347, %v1336
      %v1480 = vpack.c.bf16 %v1348, %v1337
      %v1481 = vpack.c.bf16 %v1349, %v1338
      %v1482 = vpack.c.bf16 %v1350, %v1339
      %v1483 = vpack.c.bf16 %v1362, %v1351
      %v1484 = vpack.c.bf16 %v1363, %v1352
      %v1485 = vpack.c.bf16 %v1364, %v1353
      %v1486 = vpack.c.bf16 %v1365, %v1354
      %v1487 = vpack.c.bf16 %v1366, %v1355
      %v1488 = vpack.c.bf16 %v1367, %v1356
      %v1489 = vpack.c.bf16 %v1368, %v1357
      %v1490 = vpack.c.bf16 %v1369, %v1358
      %v1491 = vpack.c.bf16 %v1370, %v1359
      %v1492 = vpack.c.bf16 %v1371, %v1360
      %v1493 = vpack.c.bf16 %v1372, %v1361
      %v1494 = vpack.c.bf16 %v1384, %v1373
      %v1495 = vpack.c.bf16 %v1385, %v1374
      %v1496 = vpack.c.bf16 %v1386, %v1375
      %v1497 = vpack.c.bf16 %v1387, %v1376
      %v1498 = vpack.c.bf16 %v1388, %v1377
      %v1499 = vpack.c.bf16 %v1389, %v1378
      %v1500 = vpack.c.bf16 %v1390, %v1379
      %v1501 = vpack.c.bf16 %v1391, %v1380
      %v1502 = vpack.c.bf16 %v1392, %v1381
      %v1503 = vpack.c.bf16 %v1393, %v1382
      %v1504 = vpack.c.bf16 %v1394, %v1383
      %v1505 = vpack.c.bf16 %v1406, %v1395
      %v1506 = vpack.c.bf16 %v1407, %v1396
      %v1507 = vpack.c.bf16 %v1408, %v1397
      %v1508 = vpack.c.bf16 %v1409, %v1398
      %v1509 = vpack.c.bf16 %v1410, %v1399
      %v1510 = vpack.c.bf16 %v1411, %v1400
      %v1511 = vpack.c.bf16 %v1412, %v1401
      %v1512 = vpack.c.bf16 %v1413, %v1402
      %v1513 = vpack.c.bf16 %v1414, %v1403
      %v1514 = vpack.c.bf16 %v1415, %v1404
      %v1515 = vpack.c.bf16 %v1416, %v1405
      %v1516 = vpack.c.bf16 %v1428, %v1417
      %v1517 = vpack.c.bf16 %v1429, %v1418
      %v1518 = vpack.c.bf16 %v1430, %v1419
      %v1519 = vpack.c.bf16 %v1431, %v1420
      %v1520 = vpack.c.bf16 %v1432, %v1421
      %v1521 = vpack.c.bf16 %v1433, %v1422
      %v1522 = vpack.c.bf16 %v1434, %v1423
      %v1523 = vpack.c.bf16 %v1435, %v1424
      %v1524 = vpack.c.bf16 %v1436, %v1425
      %v1525 = vpack.c.bf16 %v1437, %v1426
      %v1526 = vpack.c.bf16 %v1438, %v1427
      %v1527 = vpack.c.bf16 %v1450, %v1439
      %v1528 = vpack.c.bf16 %v1451, %v1440
      %v1529 = vpack.c.bf16 %v1452, %v1441
      %v1530 = vpack.c.bf16 %v1453, %v1442
      %v1531 = vpack.c.bf16 %v1454, %v1443
      %v1532 = vpack.c.bf16 %v1455, %v1444
      %v1533 = vpack.c.bf16 %v1456, %v1445
      %v1534 = vpack.c.bf16 %v1457, %v1446
      %v1535 = vpack.c.bf16 %v1458, %v1447
      %v1536 = vpack.c.bf16 %v1459, %v1448
      %v1537 = vpack.c.bf16 %v1460, %v1449
      %v1538 = vld [vmem:[%s3] sm:$0xff]
      %v1539 = vld [vmem:[%s3 + $0x8] sm:$0xff]
      %v1540 = vld [vmem:[%s3 + $0x10] sm:$0xff]
      %v1541 = vld [vmem:[%s3 + $0x18] sm:$0xff]
      %v1542 = vld [vmem:[%s3 + $0x20] sm:$0xff]
      %v1543 = vld [vmem:[%s3 + $0x28] sm:$0xff]
      %v1544 = vld [vmem:[%s3 + $0x30] sm:$0xff]
      %v1545 = vld [vmem:[%s3 + $0x38] sm:$0xff]
      %v1546 = vld [vmem:[%s3 + $0x40] sm:$0xff]
      %v1547 = vld [vmem:[%s3 + $0x48] sm:$0xff]
      %v1548 = vld [vmem:[%s3 + $0x50] sm:$0xff]
      %v1549 = vld [vmem:[%s3 + $0x58] sm:$0xff]
      %v1550 = vld [vmem:[%s3 + $0x60] sm:$0xff]
      %v1551 = vld [vmem:[%s3 + $0x68] sm:$0xff]
      %v1552 = vld [vmem:[%s3 + $0x70] sm:$0xff]
      %v1553 = vld [vmem:[%s3 + $0x78] sm:$0xff]
      %v1554 = vld [vmem:[%s3 + $0x80] sm:$0xff]
      %v1555 = vld [vmem:[%s3 + $0x88] sm:$0xff]
      %v1556 = vld [vmem:[%s3 + $0x90] sm:$0xff]
      %v1557 = vld [vmem:[%s3 + $0x98] sm:$0xff]
      %v1558 = vld [vmem:[%s3 + $0xa0] sm:$0xff]
      %v1559 = vld [vmem:[%s3 + $0xa8] sm:$0xff]
      %v1560 = vld [vmem:[%s3 + $0xb0] sm:$0xff]
      %v1561 = vld [vmem:[%s3 + $0xb8] sm:$0xff]
      %v1562 = vld [vmem:[%s3 + $0xc0] sm:$0xff]
      %v1563 = vld [vmem:[%s3 + $0xc8] sm:$0xff]
      %v1564 = vld [vmem:[%s3 + $0xd0] sm:$0xff]
      %v1565 = vld [vmem:[%s3 + $0xd8] sm:$0xff]
      %v1566 = vld [vmem:[%s3 + $0xe0] sm:$0xff]
      %v1567 = vld [vmem:[%s3 + $0xe8] sm:$0xff]
      %v1568 = vld [vmem:[%s3 + $0xf0] sm:$0xff]
      %v1569 = vld [vmem:[%s3 + $0xf8] sm:$0xff]
      %v1570 = vld [vmem:[%s3 + $0x100] sm:$0xff]
      %v1571 = vld [vmem:[%s3 + $0x108] sm:$0xff]
      %v1572 = vld [vmem:[%s3 + $0x110] sm:$0xff]
      %v1573 = vld [vmem:[%s3 + $0x118] sm:$0xff]
      %v1574 = vld [vmem:[%s3 + $0x120] sm:$0xff]
      %v1575 = vld [vmem:[%s3 + $0x128] sm:$0xff]
      %v1576 = vld [vmem:[%s3 + $0x130] sm:$0xff]
      %v1577 = vld [vmem:[%s3 + $0x138] sm:$0xff]
      %v1578 = vld [vmem:[%s3 + $0x140] sm:$0xff]
      %v1579 = vld [vmem:[%s3 + $0x148] sm:$0xff]
      %v1580 = vld [vmem:[%s3 + $0x150] sm:$0xff]
      %v1581 = vld [vmem:[%s3 + $0x158] sm:$0xff]
      %v1582 = vld [vmem:[%s3 + $0x160] sm:$0xff]
      %v1583 = vld [vmem:[%s3 + $0x168] sm:$0xff]
      %v1584 = vld [vmem:[%s3 + $0x170] sm:$0xff]
      %v1585 = vld [vmem:[%s3 + $0x178] sm:$0xff]
      %v1586 = vld [vmem:[%s3 + $0x180] sm:$0xff]
      %v1587 = vld [vmem:[%s3 + $0x188] sm:$0xff]
      %v1588 = vld [vmem:[%s3 + $0x190] sm:$0xff]
      %v1589 = vld [vmem:[%s3 + $0x198] sm:$0xff]
      %v1590 = vld [vmem:[%s3 + $0x1a0] sm:$0xff]
      %v1591 = vld [vmem:[%s3 + $0x1a8] sm:$0xff]
      %v1592 = vld [vmem:[%s3 + $0x1b0] sm:$0xff]
      %v1593 = vld [vmem:[%s3 + $0x1b8] sm:$0xff]
      %v1594 = vld [vmem:[%s3 + $0x1c0] sm:$0xff]
      %v1595 = vld [vmem:[%s3 + $0x1c8] sm:$0xff]
      %v1596 = vld [vmem:[%s3 + $0x1d0] sm:$0xff]
      %v1597 = vld [vmem:[%s3 + $0x1d8] sm:$0xff]
      %v1598 = vld [vmem:[%s3 + $0x1e0] sm:$0xff]
      %v1599 = vld [vmem:[%s3 + $0x1e8] sm:$0xff]
      %v1600 = vld [vmem:[%s3 + $0x1f0] sm:$0xff]
      %v1601 = vld [vmem:[%s3 + $0x1f8] sm:$0xff]
      %v1602 = vld [vmem:[%s3 + $0x200] sm:$0xff]
      %v1603 = vld [vmem:[%s3 + $0x208] sm:$0xff]
      %v1604 = vld [vmem:[%s3 + $0x210] sm:$0xff]
      %v1605 = vld [vmem:[%s3 + $0x218] sm:$0xff]
      %v1606 = vld [vmem:[%s3 + $0x220] sm:$0xff]
      %v1607 = vld [vmem:[%s3 + $0x228] sm:$0xff]
      %v1608 = vld [vmem:[%s3 + $0x230] sm:$0xff]
      %v1609 = vld [vmem:[%s3 + $0x238] sm:$0xff]
      %v1610 = vld [vmem:[%s3 + $0x240] sm:$0xff]
      %v1611 = vld [vmem:[%s3 + $0x248] sm:$0xff]
      %v1612 = vld [vmem:[%s3 + $0x250] sm:$0xff]
      %v1613 = vld [vmem:[%s3 + $0x258] sm:$0xff]
      %v1614 = vld [vmem:[%s3 + $0x260] sm:$0xff]
      %v1615 = vld [vmem:[%s3 + $0x268] sm:$0xff]
      %v1616 = vld [vmem:[%s3 + $0x270] sm:$0xff]
      %v1617 = vld [vmem:[%s3 + $0x278] sm:$0xff]
      %v1618 = vld [vmem:[%s3 + $0x280] sm:$0xff]
      %v1619 = vld [vmem:[%s3 + $0x288] sm:$0xff]
      %v1620 = vld [vmem:[%s3 + $0x290] sm:$0xff]
      %v1621 = vld [vmem:[%s3 + $0x298] sm:$0xff]
      %v1622 = vld [vmem:[%s3 + $0x2a0] sm:$0xff]
      %v1623 = vld [vmem:[%s3 + $0x2a8] sm:$0xff]
      %v1624 = vld [vmem:[%s3 + $0x2b0] sm:$0xff]
      %v1625 = vld [vmem:[%s3 + $0x2b8] sm:$0xff]
      %v1626 = vld [vmem:[%s3 + $0x2c0] sm:$0xff]
      %v1627 = vld [vmem:[%s3 + $0x2c8] sm:$0xff]
      %v1628 = vld [vmem:[%s3 + $0x2d0] sm:$0xff]
      %v1629 = vld [vmem:[%s3 + $0x2d8] sm:$0xff]
      %v1630 = vld [vmem:[%s3 + $0x2e0] sm:$0xff]
      %v1631 = vld [vmem:[%s3 + $0x2e8] sm:$0xff]
      %v1632 = vld [vmem:[%s3 + $0x2f0] sm:$0xff]
      %v1633 = vld [vmem:[%s3 + $0x2f8] sm:$0xff]
      %v1634 = vld [vmem:[%s3 + $0x300] sm:$0xff]
      %v1635 = vld [vmem:[%s3 + $0x308] sm:$0xff]
      %v1636 = vld [vmem:[%s3 + $0x310] sm:$0xff]
      %v1637 = vld [vmem:[%s3 + $0x318] sm:$0xff]
      %v1638 = vld [vmem:[%s3 + $0x320] sm:$0xff]
      %v1639 = vld [vmem:[%s3 + $0x328] sm:$0xff]
      %v1640 = vld [vmem:[%s3 + $0x330] sm:$0xff]
      %v1641 = vld [vmem:[%s3 + $0x338] sm:$0xff]
      %v1642 = vld [vmem:[%s3 + $0x340] sm:$0xff]
      %v1643 = vld [vmem:[%s3 + $0x348] sm:$0xff]
      %v1644 = vld [vmem:[%s3 + $0x350] sm:$0xff]
      %v1645 = vld [vmem:[%s3 + $0x358] sm:$0xff]
      %v1646 = vld [vmem:[%s3 + $0x360] sm:$0xff]
      %v1647 = vld [vmem:[%s3 + $0x368] sm:$0xff]
      %v1648 = vld [vmem:[%s3 + $0x370] sm:$0xff]
      %v1649 = vld [vmem:[%s3 + $0x378] sm:$0xff]
      %v1650 = vld [vmem:[%s3 + $0x380] sm:$0xff]
      %v1651 = vld [vmem:[%s3 + $0x388] sm:$0xff]
      %v1652 = vld [vmem:[%s3 + $0x390] sm:$0xff]
      %v1653 = vld [vmem:[%s3 + $0x398] sm:$0xff]
      %v1654 = vld [vmem:[%s3 + $0x3a0] sm:$0xff]
      %v1655 = vld [vmem:[%s3 + $0x3a8] sm:$0xff]
      %v1656 = vld [vmem:[%s3 + $0x3b0] sm:$0xff]
      %v1657 = vld [vmem:[%s3 + $0x3b8] sm:$0xff]
      %v1658 = vld [vmem:[%s3 + $0x3c0] sm:$0xff]
      %v1659 = vld [vmem:[%s3 + $0x3c8] sm:$0xff]
      %v1660 = vld [vmem:[%s3 + $0x3d0] sm:$0xff]
      %v1661 = vld [vmem:[%s3 + $0x3d8] sm:$0xff]
      %v1662 = vld [vmem:[%s3 + $0x3e0] sm:$0xff]
      %v1663 = vld [vmem:[%s3 + $0x3e8] sm:$0xff]
      %v1664 = vld [vmem:[%s3 + $0x3f0] sm:$0xff]
      %v1665 = vld [vmem:[%s3 + $0x3f8] sm:$0xff]
      %v1666 = vld [vmem:[%s3 + $0x400] sm:$0xff]
      %v1667 = vld [vmem:[%s3 + $0x408] sm:$0xff]
      %v1668 = vld [vmem:[%s3 + $0x410] sm:$0xff]
      %v1669 = vld [vmem:[%s3 + $0x418] sm:$0xff]
      %v1670 = vld [vmem:[%s3 + $0x420] sm:$0xff]
      %v1671 = vld [vmem:[%s3 + $0x428] sm:$0xff]
      %v1672 = vld [vmem:[%s3 + $0x430] sm:$0xff]
      %v1673 = vld [vmem:[%s3 + $0x438] sm:$0xff]
      %v1674 = vld [vmem:[%s3 + $0x440] sm:$0xff]
      %v1675 = vld [vmem:[%s3 + $0x448] sm:$0xff]
      %v1676 = vld [vmem:[%s3 + $0x450] sm:$0xff]
      %v1677 = vld [vmem:[%s3 + $0x458] sm:$0xff]
      %v1678 = vld [vmem:[%s3 + $0x460] sm:$0xff]
      %v1679 = vld [vmem:[%s3 + $0x468] sm:$0xff]
      %v1680 = vld [vmem:[%s3 + $0x470] sm:$0xff]
      %v1681 = vld [vmem:[%s3 + $0x478] sm:$0xff]
      %v1682 = vld [vmem:[%s3 + $0x480] sm:$0xff]
      %v1683 = vld [vmem:[%s3 + $0x488] sm:$0xff]
      %v1684 = vld [vmem:[%s3 + $0x490] sm:$0xff]
      %v1685 = vld [vmem:[%s3 + $0x498] sm:$0xff]
      %v1686 = vld [vmem:[%s3 + $0x4a0] sm:$0xff]
      %v1687 = vld [vmem:[%s3 + $0x4a8] sm:$0xff]
      %v1688 = vld [vmem:[%s3 + $0x4b0] sm:$0xff]
      %v1689 = vld [vmem:[%s3 + $0x4b8] sm:$0xff]
      %v1690 = vld [vmem:[%s3 + $0x4c0] sm:$0xff]
      %v1691 = vld [vmem:[%s3 + $0x4c8] sm:$0xff]
      %v1692 = vld [vmem:[%s3 + $0x4d0] sm:$0xff]
      %v1693 = vld [vmem:[%s3 + $0x4d8] sm:$0xff]
      %v1694 = vld [vmem:[%s3 + $0x4e0] sm:$0xff]
      %v1695 = vld [vmem:[%s3 + $0x4e8] sm:$0xff]
      %v1696 = vld [vmem:[%s3 + $0x4f0] sm:$0xff]
      %v1697 = vld [vmem:[%s3 + $0x4f8] sm:$0xff]
      %v1698 = vld [vmem:[%s3 + $0x500] sm:$0xff]
      %v1699 = vld [vmem:[%s3 + $0x508] sm:$0xff]
      %v1700 = vld [vmem:[%s3 + $0x510] sm:$0xff]
      %v1701 = vld [vmem:[%s3 + $0x518] sm:$0xff]
      %v1702 = vld [vmem:[%s3 + $0x520] sm:$0xff]
      %v1703 = vld [vmem:[%s3 + $0x528] sm:$0xff]
      %v1704 = vld [vmem:[%s3 + $0x530] sm:$0xff]
      %v1705 = vld [vmem:[%s3 + $0x538] sm:$0xff]
      %v1874 = vunpack.c.l.b16 %v1538
      %v1875 = vunpack.c.h.b16 %v1538
      %v1876 = vunpack.c.l.b16 %v1539
      %v1877 = vunpack.c.h.b16 %v1539
      %v1878 = vunpack.c.l.b16 %v1540
      %v1879 = vunpack.c.h.b16 %v1540
      %v1880 = vunpack.c.l.b16 %v1541
      %v1881 = vunpack.c.h.b16 %v1541
      %v1882 = vunpack.c.l.b16 %v1542
      %v1883 = vunpack.c.h.b16 %v1542
      %v1884 = vunpack.c.l.b16 %v1543
      %v1885 = vunpack.c.h.b16 %v1543
      %v1886 = vunpack.c.l.b16 %v1544
      %v1887 = vunpack.c.h.b16 %v1544
      %v1888 = vunpack.c.l.b16 %v1545
      %v1889 = vunpack.c.h.b16 %v1545
      %v1890 = vunpack.c.l.b16 %v1546
      %v1891 = vunpack.c.h.b16 %v1546
      %v1892 = vunpack.c.l.b16 %v1547
      %v1893 = vunpack.c.h.b16 %v1547
      %v1894 = vunpack.c.l.b16 %v1548
      %v1895 = vunpack.c.h.b16 %v1548
      %v1896 = vunpack.c.l.b16 %v1549
      %v1897 = vunpack.c.h.b16 %v1549
      %v1898 = vunpack.c.l.b16 %v1550
      %v1899 = vunpack.c.h.b16 %v1550
      %v1900 = vunpack.c.l.b16 %v1551
      %v1901 = vunpack.c.h.b16 %v1551
      %v1902 = vunpack.c.l.b16 %v1552
      %v1903 = vunpack.c.h.b16 %v1552
      %v1904 = vunpack.c.l.b16 %v1553
      %v1905 = vunpack.c.h.b16 %v1553
      %v1906 = vunpack.c.l.b16 %v1554
      %v1907 = vunpack.c.h.b16 %v1554
      %v1908 = vunpack.c.l.b16 %v1555
      %v1909 = vunpack.c.h.b16 %v1555
      %v1910 = vunpack.c.l.b16 %v1556
      %v1911 = vunpack.c.h.b16 %v1556
      %v1912 = vunpack.c.l.b16 %v1557
      %v1913 = vunpack.c.h.b16 %v1557
      %v1914 = vunpack.c.l.b16 %v1558
      %v1915 = vunpack.c.h.b16 %v1558
      %v1916 = vunpack.c.l.b16 %v1559
      %v1917 = vunpack.c.h.b16 %v1559
      %v1918 = vunpack.c.l.b16 %v1560
      %v1919 = vunpack.c.h.b16 %v1560
      %v1920 = vunpack.c.l.b16 %v1561
      %v1921 = vunpack.c.h.b16 %v1561
      %v1922 = vunpack.c.l.b16 %v1562
      %v1923 = vunpack.c.h.b16 %v1562
      %v1924 = vunpack.c.l.b16 %v1563
      %v1925 = vunpack.c.h.b16 %v1563
      %v1926 = vunpack.c.l.b16 %v1564
      %v1927 = vunpack.c.h.b16 %v1564
      %v1928 = vunpack.c.l.b16 %v1565
      %v1929 = vunpack.c.h.b16 %v1565
      %v1930 = vunpack.c.l.b16 %v1566
      %v1931 = vunpack.c.h.b16 %v1566
      %v1932 = vunpack.c.l.b16 %v1567
      %v1933 = vunpack.c.h.b16 %v1567
      %v1934 = vunpack.c.l.b16 %v1568
      %v1935 = vunpack.c.h.b16 %v1568
      %v1936 = vunpack.c.l.b16 %v1569
      %v1937 = vunpack.c.h.b16 %v1569
      %v1938 = vunpack.c.l.b16 %v1570
      %v1939 = vunpack.c.h.b16 %v1570
      %v1940 = vunpack.c.l.b16 %v1571
      %v1941 = vunpack.c.h.b16 %v1571
      %v1942 = vunpack.c.l.b16 %v1572
      %v1943 = vunpack.c.h.b16 %v1572
      %v1944 = vunpack.c.l.b16 %v1573
      %v1945 = vunpack.c.h.b16 %v1573
      %v1946 = vunpack.c.l.b16 %v1574
      %v1947 = vunpack.c.h.b16 %v1574
      %v1948 = vunpack.c.l.b16 %v1575
      %v1949 = vunpack.c.h.b16 %v1575
      %v1950 = vunpack.c.l.b16 %v1576
      %v1951 = vunpack.c.h.b16 %v1576
      %v1952 = vunpack.c.l.b16 %v1577
      %v1953 = vunpack.c.h.b16 %v1577
      %v1954 = vunpack.c.l.b16 %v1578
      %v1955 = vunpack.c.h.b16 %v1578
      %v1956 = vunpack.c.l.b16 %v1579
      %v1957 = vunpack.c.h.b16 %v1579
      %v1958 = vunpack.c.l.b16 %v1580
      %v1959 = vunpack.c.h.b16 %v1580
      %v1960 = vunpack.c.l.b16 %v1581
      %v1961 = vunpack.c.h.b16 %v1581
      %v1962 = vunpack.c.l.b16 %v1582
      %v1963 = vunpack.c.h.b16 %v1582
      %v1964 = vunpack.c.l.b16 %v1583
      %v1965 = vunpack.c.h.b16 %v1583
      %v1966 = vunpack.c.l.b16 %v1584
      %v1967 = vunpack.c.h.b16 %v1584
      %v1968 = vunpack.c.l.b16 %v1585
      %v1969 = vunpack.c.h.b16 %v1585
      %v1970 = vunpack.c.l.b16 %v1586
      %v1971 = vunpack.c.h.b16 %v1586
      %v1972 = vunpack.c.l.b16 %v1587
      %v1973 = vunpack.c.h.b16 %v1587
      %v1974 = vunpack.c.l.b16 %v1588
      %v1975 = vunpack.c.h.b16 %v1588
      %v1976 = vunpack.c.l.b16 %v1589
      %v1977 = vunpack.c.h.b16 %v1589
      %v1978 = vunpack.c.l.b16 %v1590
      %v1979 = vunpack.c.h.b16 %v1590
      %v1980 = vunpack.c.l.b16 %v1591
      %v1981 = vunpack.c.h.b16 %v1591
      %v1982 = vunpack.c.l.b16 %v1592
      %v1983 = vunpack.c.h.b16 %v1592
      %v1984 = vunpack.c.l.b16 %v1593
      %v1985 = vunpack.c.h.b16 %v1593
      %v1986 = vunpack.c.l.b16 %v1594
      %v1987 = vunpack.c.h.b16 %v1594
      %v1988 = vunpack.c.l.b16 %v1595
      %v1989 = vunpack.c.h.b16 %v1595
      %v1990 = vunpack.c.l.b16 %v1596
      %v1991 = vunpack.c.h.b16 %v1596
      %v1992 = vunpack.c.l.b16 %v1597
      %v1993 = vunpack.c.h.b16 %v1597
      %v1994 = vunpack.c.l.b16 %v1598
      %v1995 = vunpack.c.h.b16 %v1598
      %v1996 = vunpack.c.l.b16 %v1599
      %v1997 = vunpack.c.h.b16 %v1599
      %v1998 = vunpack.c.l.b16 %v1600
      %v1999 = vunpack.c.h.b16 %v1600
      %v2000 = vunpack.c.l.b16 %v1601
      %v2001 = vunpack.c.h.b16 %v1601
      %v2002 = vunpack.c.l.b16 %v1602
      %v2003 = vunpack.c.h.b16 %v1602
      %v2004 = vunpack.c.l.b16 %v1603
      %v2005 = vunpack.c.h.b16 %v1603
      %v2006 = vunpack.c.l.b16 %v1604
      %v2007 = vunpack.c.h.b16 %v1604
      %v2008 = vunpack.c.l.b16 %v1605
      %v2009 = vunpack.c.h.b16 %v1605
      %v2010 = vunpack.c.l.b16 %v1606
      %v2011 = vunpack.c.h.b16 %v1606
      %v2012 = vunpack.c.l.b16 %v1607
      %v2013 = vunpack.c.h.b16 %v1607
      %v2014 = vunpack.c.l.b16 %v1608
      %v2015 = vunpack.c.h.b16 %v1608
      %v2016 = vunpack.c.l.b16 %v1609
      %v2017 = vunpack.c.h.b16 %v1609
      %v2018 = vunpack.c.l.b16 %v1610
      %v2019 = vunpack.c.h.b16 %v1610
      %v2020 = vunpack.c.l.b16 %v1611
      %v2021 = vunpack.c.h.b16 %v1611
      %v2022 = vunpack.c.l.b16 %v1612
      %v2023 = vunpack.c.h.b16 %v1612
      %v2024 = vunpack.c.l.b16 %v1613
      %v2025 = vunpack.c.h.b16 %v1613
      %v2026 = vunpack.c.l.b16 %v1614
      %v2027 = vunpack.c.h.b16 %v1614
      %v2028 = vunpack.c.l.b16 %v1615
      %v2029 = vunpack.c.h.b16 %v1615
      %v2030 = vunpack.c.l.b16 %v1616
      %v2031 = vunpack.c.h.b16 %v1616
      %v2032 = vunpack.c.l.b16 %v1617
      %v2033 = vunpack.c.h.b16 %v1617
      %v2034 = vunpack.c.l.b16 %v1618
      %v2035 = vunpack.c.h.b16 %v1618
      %v2036 = vunpack.c.l.b16 %v1619
      %v2037 = vunpack.c.h.b16 %v1619
      %v2038 = vunpack.c.l.b16 %v1620
      %v2039 = vunpack.c.h.b16 %v1620
      %v2040 = vunpack.c.l.b16 %v1621
      %v2041 = vunpack.c.h.b16 %v1621
      %v2042 = vunpack.c.l.b16 %v1622
      %v2043 = vunpack.c.h.b16 %v1622
      %v2044 = vunpack.c.l.b16 %v1623
      %v2045 = vunpack.c.h.b16 %v1623
      %v2046 = vunpack.c.l.b16 %v1624
      %v2047 = vunpack.c.h.b16 %v1624
      %v2048 = vunpack.c.l.b16 %v1625
      %v2049 = vunpack.c.h.b16 %v1625
      %v2050 = vunpack.c.l.b16 %v1626
      %v2051 = vunpack.c.h.b16 %v1626
      %v2052 = vunpack.c.l.b16 %v1627
      %v2053 = vunpack.c.h.b16 %v1627
      %v2054 = vunpack.c.l.b16 %v1628
      %v2055 = vunpack.c.h.b16 %v1628
      %v2056 = vunpack.c.l.b16 %v1629
      %v2057 = vunpack.c.h.b16 %v1629
      %v2058 = vunpack.c.l.b16 %v1630
      %v2059 = vunpack.c.h.b16 %v1630
      %v2060 = vunpack.c.l.b16 %v1631
      %v2061 = vunpack.c.h.b16 %v1631
      %v2062 = vunpack.c.l.b16 %v1632
      %v2063 = vunpack.c.h.b16 %v1632
      %v2064 = vunpack.c.l.b16 %v1633
      %v2065 = vunpack.c.h.b16 %v1633
      %v2066 = vunpack.c.l.b16 %v1634
      %v2067 = vunpack.c.h.b16 %v1634
      %v2068 = vunpack.c.l.b16 %v1635
      %v2069 = vunpack.c.h.b16 %v1635
      %v2070 = vunpack.c.l.b16 %v1636
      %v2071 = vunpack.c.h.b16 %v1636
      %v2072 = vunpack.c.l.b16 %v1637
      %v2073 = vunpack.c.h.b16 %v1637
      %v2074 = vunpack.c.l.b16 %v1638
      %v2075 = vunpack.c.h.b16 %v1638
      %v2076 = vunpack.c.l.b16 %v1639
      %v2077 = vunpack.c.h.b16 %v1639
      %v2078 = vunpack.c.l.b16 %v1640
      %v2079 = vunpack.c.h.b16 %v1640
      %v2080 = vunpack.c.l.b16 %v1641
      %v2081 = vunpack.c.h.b16 %v1641
      %v2082 = vunpack.c.l.b16 %v1642
      %v2083 = vunpack.c.h.b16 %v1642
      %v2084 = vunpack.c.l.b16 %v1643
      %v2085 = vunpack.c.h.b16 %v1643
      %v2086 = vunpack.c.l.b16 %v1644
      %v2087 = vunpack.c.h.b16 %v1644
      %v2088 = vunpack.c.l.b16 %v1645
      %v2089 = vunpack.c.h.b16 %v1645
      %v2090 = vunpack.c.l.b16 %v1646
      %v2091 = vunpack.c.h.b16 %v1646
      %v2092 = vunpack.c.l.b16 %v1647
      %v2093 = vunpack.c.h.b16 %v1647
      %v2094 = vunpack.c.l.b16 %v1648
      %v2095 = vunpack.c.h.b16 %v1648
      %v2096 = vunpack.c.l.b16 %v1649
      %v2097 = vunpack.c.h.b16 %v1649
      %v2098 = vunpack.c.l.b16 %v1650
      %v2099 = vunpack.c.h.b16 %v1650
      %v2100 = vunpack.c.l.b16 %v1651
      %v2101 = vunpack.c.h.b16 %v1651
      %v2102 = vunpack.c.l.b16 %v1652
      %v2103 = vunpack.c.h.b16 %v1652
      %v2104 = vunpack.c.l.b16 %v1653
      %v2105 = vunpack.c.h.b16 %v1653
      %v2106 = vunpack.c.l.b16 %v1654
      %v2107 = vunpack.c.h.b16 %v1654
      %v2108 = vunpack.c.l.b16 %v1655
      %v2109 = vunpack.c.h.b16 %v1655
      %v2110 = vunpack.c.l.b16 %v1656
      %v2111 = vunpack.c.h.b16 %v1656
      %v2112 = vunpack.c.l.b16 %v1657
      %v2113 = vunpack.c.h.b16 %v1657
      %v2114 = vunpack.c.l.b16 %v1658
      %v2115 = vunpack.c.h.b16 %v1658
      %v2116 = vunpack.c.l.b16 %v1659
      %v2117 = vunpack.c.h.b16 %v1659
      %v2118 = vunpack.c.l.b16 %v1660
      %v2119 = vunpack.c.h.b16 %v1660
      %v2120 = vunpack.c.l.b16 %v1661
      %v2121 = vunpack.c.h.b16 %v1661
      %v2122 = vunpack.c.l.b16 %v1662
      %v2123 = vunpack.c.h.b16 %v1662
      %v2124 = vunpack.c.l.b16 %v1663
      %v2125 = vunpack.c.h.b16 %v1663
      %v2126 = vunpack.c.l.b16 %v1664
      %v2127 = vunpack.c.h.b16 %v1664
      %v2128 = vunpack.c.l.b16 %v1665
      %v2129 = vunpack.c.h.b16 %v1665
      %v2130 = vunpack.c.l.b16 %v1666
      %v2131 = vunpack.c.h.b16 %v1666
      %v2132 = vunpack.c.l.b16 %v1667
      %v2133 = vunpack.c.h.b16 %v1667
      %v2134 = vunpack.c.l.b16 %v1668
      %v2135 = vunpack.c.h.b16 %v1668
      %v2136 = vunpack.c.l.b16 %v1669
      %v2137 = vunpack.c.h.b16 %v1669
      %v2138 = vunpack.c.l.b16 %v1670
      %v2139 = vunpack.c.h.b16 %v1670
      %v2140 = vunpack.c.l.b16 %v1671
      %v2141 = vunpack.c.h.b16 %v1671
      %v2142 = vunpack.c.l.b16 %v1672
      %v2143 = vunpack.c.h.b16 %v1672
      %v2144 = vunpack.c.l.b16 %v1673
      %v2145 = vunpack.c.h.b16 %v1673
      %v2146 = vunpack.c.l.b16 %v1674
      %v2147 = vunpack.c.h.b16 %v1674
      %v2148 = vunpack.c.l.b16 %v1675
      %v2149 = vunpack.c.h.b16 %v1675
      %v2150 = vunpack.c.l.b16 %v1676
      %v2151 = vunpack.c.h.b16 %v1676
      %v2152 = vunpack.c.l.b16 %v1677
      %v2153 = vunpack.c.h.b16 %v1677
      %v2154 = vunpack.c.l.b16 %v1678
      %v2155 = vunpack.c.h.b16 %v1678
      %v2156 = vunpack.c.l.b16 %v1679
      %v2157 = vunpack.c.h.b16 %v1679
      %v2158 = vunpack.c.l.b16 %v1680
      %v2159 = vunpack.c.h.b16 %v1680
      %v2160 = vunpack.c.l.b16 %v1681
      %v2161 = vunpack.c.h.b16 %v1681
      %v2162 = vunpack.c.l.b16 %v1682
      %v2163 = vunpack.c.h.b16 %v1682
      %v2164 = vunpack.c.l.b16 %v1683
      %v2165 = vunpack.c.h.b16 %v1683
      %v2166 = vunpack.c.l.b16 %v1684
      %v2167 = vunpack.c.h.b16 %v1684
      %v2168 = vunpack.c.l.b16 %v1685
      %v2169 = vunpack.c.h.b16 %v1685
      %v2170 = vunpack.c.l.b16 %v1686
      %v2171 = vunpack.c.h.b16 %v1686
      %v2172 = vunpack.c.l.b16 %v1687
      %v2173 = vunpack.c.h.b16 %v1687
      %v2174 = vunpack.c.l.b16 %v1688
      %v2175 = vunpack.c.h.b16 %v1688
      %v2176 = vunpack.c.l.b16 %v1689
      %v2177 = vunpack.c.h.b16 %v1689
      %v2178 = vunpack.c.l.b16 %v1690
      %v2179 = vunpack.c.h.b16 %v1690
      %v2180 = vunpack.c.l.b16 %v1691
      %v2181 = vunpack.c.h.b16 %v1691
      %v2182 = vunpack.c.l.b16 %v1692
      %v2183 = vunpack.c.h.b16 %v1692
      %v2184 = vunpack.c.l.b16 %v1693
      %v2185 = vunpack.c.h.b16 %v1693
      %v2186 = vunpack.c.l.b16 %v1694
      %v2187 = vunpack.c.h.b16 %v1694
      %v2188 = vunpack.c.l.b16 %v1695
      %v2189 = vunpack.c.h.b16 %v1695
      %v2190 = vunpack.c.l.b16 %v1696
      %v2191 = vunpack.c.h.b16 %v1696
      %v2192 = vunpack.c.l.b16 %v1697
      %v2193 = vunpack.c.h.b16 %v1697
      %v2194 = vunpack.c.l.b16 %v1698
      %v2195 = vunpack.c.h.b16 %v1698
      %v2196 = vunpack.c.l.b16 %v1699
      %v2197 = vunpack.c.h.b16 %v1699
      %v2198 = vunpack.c.l.b16 %v1700
      %v2199 = vunpack.c.h.b16 %v1700
      %v2200 = vunpack.c.l.b16 %v1701
      %v2201 = vunpack.c.h.b16 %v1701
      %v2202 = vunpack.c.l.b16 %v1702
      %v2203 = vunpack.c.h.b16 %v1702
      %v2204 = vunpack.c.l.b16 %v1703
      %v2205 = vunpack.c.h.b16 %v1703
      %v2206 = vunpack.c.l.b16 %v1704
      %v2207 = vunpack.c.h.b16 %v1704
      %v2208 = vunpack.c.l.b16 %v1705
      %v2209 = vunpack.c.h.b16 %v1705
      %v2210 = vpack.c.b16 %v1876, %v1874
      %v2211 = vpack.c.b16 %v1877, %v1875
      %v2212 = vpack.c.b16 %v1880, %v1878
      %v2213 = vpack.c.b16 %v1881, %v1879
      %v2214 = vpack.c.b16 %v1884, %v1882
      %v2215 = vpack.c.b16 %v1885, %v1883
      %v2216 = vpack.c.b16 %v1888, %v1886
      %v2217 = vpack.c.b16 %v1889, %v1887
      %v2218 = vpack.c.b16 %v1892, %v1890
      %v2219 = vpack.c.b16 %v1893, %v1891
      %v2220 = vpack.c.b16 %v1896, %v1894
      %v2221 = vpack.c.b16 %v1897, %v1895
      %v2222 = vpack.c.b16 %v1900, %v1898
      %v2223 = vpack.c.b16 %v1901, %v1899
      %v2224 = vpack.c.b16 %v1904, %v1902
      %v2225 = vpack.c.b16 %v1905, %v1903
      %v2226 = vpack.c.b16 %v1908, %v1906
      %v2227 = vpack.c.b16 %v1909, %v1907
      %v2228 = vpack.c.b16 %v1912, %v1910
      %v2229 = vpack.c.b16 %v1913, %v1911
      %v2230 = vpack.c.b16 %v1916, %v1914
      %v2231 = vpack.c.b16 %v1917, %v1915
      %v2232 = vpack.c.b16 %v1920, %v1918
      %v2233 = vpack.c.b16 %v1921, %v1919
      %v2234 = vpack.c.b16 %v1924, %v1922
      %v2235 = vpack.c.b16 %v1925, %v1923
      %v2236 = vpack.c.b16 %v1928, %v1926
      %v2237 = vpack.c.b16 %v1929, %v1927
      %v2238 = vpack.c.b16 %v1932, %v1930
      %v2239 = vpack.c.b16 %v1933, %v1931
      %v2240 = vpack.c.b16 %v1936, %v1934
      %v2241 = vpack.c.b16 %v1937, %v1935
      %v2242 = vpack.c.b16 %v1940, %v1938
      %v2243 = vpack.c.b16 %v1941, %v1939
      %v2244 = vpack.c.b16 %v1944, %v1942
      %v2245 = vpack.c.b16 %v1945, %v1943
      %v2246 = vpack.c.b16 %v1948, %v1946
      %v2247 = vpack.c.b16 %v1949, %v1947
      %v2248 = vpack.c.b16 %v1952, %v1950
      %v2249 = vpack.c.b16 %v1953, %v1951
      %v2250 = vpack.c.b16 %v1956, %v1954
      %v2251 = vpack.c.b16 %v1957, %v1955
      %v2252 = vpack.c.b16 %v1960, %v1958
      %v2253 = vpack.c.b16 %v1961, %v1959
      %v2254 = vpack.c.b16 %v1964, %v1962
      %v2255 = vpack.c.b16 %v1965, %v1963
      %v2256 = vpack.c.b16 %v1968, %v1966
      %v2257 = vpack.c.b16 %v1969, %v1967
      %v2258 = vpack.c.b16 %v1972, %v1970
      %v2259 = vpack.c.b16 %v1973, %v1971
      %v2260 = vpack.c.b16 %v1976, %v1974
      %v2261 = vpack.c.b16 %v1977, %v1975
      %v2262 = vpack.c.b16 %v1980, %v1978
      %v2263 = vpack.c.b16 %v1981, %v1979
      %v2264 = vpack.c.b16 %v1984, %v1982
      %v2265 = vpack.c.b16 %v1985, %v1983
      %v2266 = vpack.c.b16 %v1988, %v1986
      %v2267 = vpack.c.b16 %v1989, %v1987
      %v2268 = vpack.c.b16 %v1992, %v1990
      %v2269 = vpack.c.b16 %v1993, %v1991
      %v2270 = vpack.c.b16 %v1996, %v1994
      %v2271 = vpack.c.b16 %v1997, %v1995
      %v2272 = vpack.c.b16 %v2000, %v1998
      %v2273 = vpack.c.b16 %v2001, %v1999
      %v2274 = vpack.c.b16 %v2004, %v2002
      %v2275 = vpack.c.b16 %v2005, %v2003
      %v2276 = vpack.c.b16 %v2008, %v2006
      %v2277 = vpack.c.b16 %v2009, %v2007
      %v2278 = vpack.c.b16 %v2012, %v2010
      %v2279 = vpack.c.b16 %v2013, %v2011
      %v2280 = vpack.c.b16 %v2016, %v2014
      %v2281 = vpack.c.b16 %v2017, %v2015
      %v2282 = vpack.c.b16 %v2020, %v2018
      %v2283 = vpack.c.b16 %v2021, %v2019
      %v2284 = vpack.c.b16 %v2024, %v2022
      %v2285 = vpack.c.b16 %v2025, %v2023
      %v2286 = vpack.c.b16 %v2028, %v2026
      %v2287 = vpack.c.b16 %v2029, %v2027
      %v2288 = vpack.c.b16 %v2032, %v2030
      %v2289 = vpack.c.b16 %v2033, %v2031
      %v2290 = vpack.c.b16 %v2036, %v2034
      %v2291 = vpack.c.b16 %v2037, %v2035
      %v2292 = vpack.c.b16 %v2040, %v2038
      %v2293 = vpack.c.b16 %v2041, %v2039
      %v2294 = vpack.c.b16 %v2044, %v2042
      %v2295 = vpack.c.b16 %v2045, %v2043
      %v2296 = vpack.c.b16 %v2048, %v2046
      %v2297 = vpack.c.b16 %v2049, %v2047
      %v2298 = vpack.c.b16 %v2052, %v2050
      %v2299 = vpack.c.b16 %v2053, %v2051
      %v2300 = vpack.c.b16 %v2056, %v2054
      %v2301 = vpack.c.b16 %v2057, %v2055
      %v2302 = vpack.c.b16 %v2060, %v2058
      %v2303 = vpack.c.b16 %v2061, %v2059
      %v2304 = vpack.c.b16 %v2064, %v2062
      %v2305 = vpack.c.b16 %v2065, %v2063
      %v2306 = vpack.c.b16 %v2068, %v2066
      %v2307 = vpack.c.b16 %v2069, %v2067
      %v2308 = vpack.c.b16 %v2072, %v2070
      %v2309 = vpack.c.b16 %v2073, %v2071
      %v2310 = vpack.c.b16 %v2076, %v2074
      %v2311 = vpack.c.b16 %v2077, %v2075
      %v2312 = vpack.c.b16 %v2080, %v2078
      %v2313 = vpack.c.b16 %v2081, %v2079
      %v2314 = vpack.c.b16 %v2084, %v2082
      %v2315 = vpack.c.b16 %v2085, %v2083
      %v2316 = vpack.c.b16 %v2088, %v2086
      %v2317 = vpack.c.b16 %v2089, %v2087
      %v2318 = vpack.c.b16 %v2092, %v2090
      %v2319 = vpack.c.b16 %v2093, %v2091
      %v2320 = vpack.c.b16 %v2096, %v2094
      %v2321 = vpack.c.b16 %v2097, %v2095
      %v2322 = vpack.c.b16 %v2100, %v2098
      %v2323 = vpack.c.b16 %v2101, %v2099
      %v2324 = vpack.c.b16 %v2104, %v2102
      %v2325 = vpack.c.b16 %v2105, %v2103
      %v2326 = vpack.c.b16 %v2108, %v2106
      %v2327 = vpack.c.b16 %v2109, %v2107
      %v2328 = vpack.c.b16 %v2112, %v2110
      %v2329 = vpack.c.b16 %v2113, %v2111
      %v2330 = vpack.c.b16 %v2116, %v2114
      %v2331 = vpack.c.b16 %v2117, %v2115
      %v2332 = vpack.c.b16 %v2120, %v2118
      %v2333 = vpack.c.b16 %v2121, %v2119
      %v2334 = vpack.c.b16 %v2124, %v2122
      %v2335 = vpack.c.b16 %v2125, %v2123
      %v2336 = vpack.c.b16 %v2128, %v2126
      %v2337 = vpack.c.b16 %v2129, %v2127
      %v2338 = vpack.c.b16 %v2132, %v2130
      %v2339 = vpack.c.b16 %v2133, %v2131
      %v2340 = vpack.c.b16 %v2136, %v2134
      %v2341 = vpack.c.b16 %v2137, %v2135
      %v2342 = vpack.c.b16 %v2140, %v2138
      %v2343 = vpack.c.b16 %v2141, %v2139
      %v2344 = vpack.c.b16 %v2144, %v2142
      %v2345 = vpack.c.b16 %v2145, %v2143
      %v2346 = vpack.c.b16 %v2148, %v2146
      %v2347 = vpack.c.b16 %v2149, %v2147
      %v2348 = vpack.c.b16 %v2152, %v2150
      %v2349 = vpack.c.b16 %v2153, %v2151
      %v2350 = vpack.c.b16 %v2156, %v2154
      %v2351 = vpack.c.b16 %v2157, %v2155
      %v2352 = vpack.c.b16 %v2160, %v2158
      %v2353 = vpack.c.b16 %v2161, %v2159
      %v2354 = vpack.c.b16 %v2164, %v2162
      %v2355 = vpack.c.b16 %v2165, %v2163
      %v2356 = vpack.c.b16 %v2168, %v2166
      %v2357 = vpack.c.b16 %v2169, %v2167
      %v2358 = vpack.c.b16 %v2172, %v2170
      %v2359 = vpack.c.b16 %v2173, %v2171
      %v2360 = vpack.c.b16 %v2176, %v2174
      %v2361 = vpack.c.b16 %v2177, %v2175
      %v2362 = vpack.c.b16 %v2180, %v2178
      %v2363 = vpack.c.b16 %v2181, %v2179
      %v2364 = vpack.c.b16 %v2184, %v2182
      %v2365 = vpack.c.b16 %v2185, %v2183
      %v2366 = vpack.c.b16 %v2188, %v2186
      %v2367 = vpack.c.b16 %v2189, %v2187
      %v2368 = vpack.c.b16 %v2192, %v2190
      %v2369 = vpack.c.b16 %v2193, %v2191
      %v2370 = vpack.c.b16 %v2196, %v2194
      %v2371 = vpack.c.b16 %v2197, %v2195
      %v2372 = vpack.c.b16 %v2200, %v2198
      %v2373 = vpack.c.b16 %v2201, %v2199
      %v2374 = vpack.c.b16 %v2204, %v2202
      %v2375 = vpack.c.b16 %v2205, %v2203
      %v2376 = vpack.c.b16 %v2208, %v2206
      %v2377 = vpack.c.b16 %v2209, %v2207
      %vm2546 = vcmask 523264
      %v2548 = vsel %vm2546, %v1471, 0
      %v2551 = vsel %vm2546, %v1482, 0
      %v2554 = vsel %vm2546, %v1493, 0
      %v2557 = vsel %vm2546, %v1504, 0
      %v2560 = vsel %vm2546, %v1515, 0
      %v2563 = vsel %vm2546, %v1526, 0
      %v2566 = vsel %vm2546, %v1537, 0
      %2568 = vmatprep.subr.bf16.mxu0 %v2211
      %2569 = vmatpush1.bf16.msra.mxu0 %v2210
      %2570 = vmatprep.subr.bf16.mxu0 %v2213
      %2571 = vmatpush1.bf16.msra.mxu0 %v2212
      %2572 = vmatprep.subr.bf16.mxu0 %v2215
      %2573 = vmatpush1.bf16.msra.mxu0 %v2214
      %2574 = vmatprep.subr.bf16.mxu0 %v2217
      %2575 = vmatpush1.bf16.msra.mxu0 %v2216
      %2576 = vmatprep.subr.bf16.mxu0 %v2219
      %2577 = vmatpush1.bf16.msra.mxu0 %v2218
      %2578 = vmatprep.subr.bf16.mxu0 %v2221
      %2579 = vmatpush1.bf16.msra.mxu0 %v2220
      %2580 = vmatprep.subr.bf16.mxu0 %v2223
      %2581 = vmatpush1.bf16.msra.mxu0 %v2222
      %2582 = vmatprep.subr.bf16.mxu0 %v2225
      %2583 = vmatpush1.bf16.msra.mxu0 %v2224
      %2584 = vmatprep.subr.bf16.mxu0 %v2227
      %2585 = vmatpush1.bf16.msra.mxu0 %v2226
      %2586 = vmatprep.subr.bf16.mxu0 %v2229
      %2587 = vmatpush1.bf16.msra.mxu0 %v2228
      %2588 = vmatprep.subr.bf16.mxu0 %v2231
      %2589 = vmatpush1.bf16.msra.mxu0 %v2230
      %2590 = vmatprep.subr.bf16.mxu0 %v2233
      %2591 = vmatpush1.bf16.msra.mxu0 %v2232
      %2592 = vmatprep.subr.bf16.mxu0 %v2235
      %2593 = vmatpush1.bf16.msra.mxu0 %v2234
      %2594 = vmatprep.subr.bf16.mxu0 %v2237
      %2595 = vmatpush1.bf16.msra.mxu0 %v2236
      %2596 = vmatprep.subr.bf16.mxu0 %v2239
      %2597 = vmatpush1.bf16.msra.mxu0 %v2238
      %2598 = vmatprep.subr.bf16.mxu0 %v2241
      %2599 = vmatpush1.bf16.msra.mxu0 %v2240
      %2600 = vmatprep.mubr.bf16.mxu0 %v1462
      %2601 = vmatmul.mubr.bf16.gmra.mrb[0].mxu0 %v1461
      %v2602 = vpop.f32.mrb[0].mxu0
      %v2603 = vadd.f32 0.0, %v2602
      %v2604 = vpop.f32.mrb[0].mxu0
      %v2605 = vadd.f32 0.0, %v2604
      %v2606 = vpop.f32.mrb[0].mxu0
      %v2607 = vadd.f32 0.0, %v2606
      %v2608 = vpop.f32.mrb[0].mxu0
      %v2609 = vadd.f32 0.0, %v2608
      %2610 = vmatprep.mubr.bf16.mxu0 %v1473
      %2611 = vmatmul.mubr.bf16.gmra.mrb[0].mxu0 %v1472
      %v2612 = vpop.f32.mrb[0].mxu0
      %v2613 = vadd.f32 0.0, %v2612
      %v2614 = vpop.f32.mrb[0].mxu0
      %v2615 = vadd.f32 0.0, %v2614
      %v2616 = vpop.f32.mrb[0].mxu0
      %v2617 = vadd.f32 0.0, %v2616
      %v2618 = vpop.f32.mrb[0].mxu0
      %v2619 = vadd.f32 0.0, %v2618
      %2620 = vmatprep.mubr.bf16.mxu0 %v1484
      %2621 = vmatmul.mubr.bf16.gmra.mrb[0].mxu0 %v1483
      %v2622 = vpop.f32.mrb[0].mxu0
      %v2623 = vadd.f32 0.0, %v2622
      %v2624 = vpop.f32.mrb[0].mxu0
      %v2625 = vadd.f32 0.0, %v2624
      %v2626 = vpop.f32.mrb[0].mxu0
      %v2627 = vadd.f32 0.0, %v2626
      %v2628 = vpop.f32.mrb[0].mxu0
      %v2629 = vadd.f32 0.0, %v2628
      %2630 = vmatprep.mubr.bf16.mxu0 %v1495
      %2631 = vmatmul.mubr.bf16.gmra.mrb[0].mxu0 %v1494
      %v2632 = vpop.f32.mrb[0].mxu0
      %v2633 = vadd.f32 0.0, %v2632
      %v2634 = vpop.f32.mrb[0].mxu0
      %v2635 = vadd.f32 0.0, %v2634
      %v2636 = vpop.f32.mrb[0].mxu0
      %v2637 = vadd.f32 0.0, %v2636
      %v2638 = vpop.f32.mrb[0].mxu0
      %v2639 = vadd.f32 0.0, %v2638
      %2640 = vmatprep.mubr.bf16.mxu0 %v1506
      %2641 = vmatmul.mubr.bf16.gmra.mrb[0].mxu0 %v1505
      %v2642 = vpop.f32.mrb[0].mxu0
      %v2643 = vadd.f32 0.0, %v2642
      %v2644 = vpop.f32.mrb[0].mxu0
      %v2645 = vadd.f32 0.0, %v2644
      %v2646 = vpop.f32.mrb[0].mxu0
      %v2647 = vadd.f32 0.0, %v2646
      %v2648 = vpop.f32.mrb[0].mxu0
      %v2649 = vadd.f32 0.0, %v2648
      %2650 = vmatprep.mubr.bf16.mxu0 %v1517
      %2651 = vmatmul.mubr.bf16.gmra.mrb[0].mxu0 %v1516
      %v2652 = vpop.f32.mrb[0].mxu0
      %v2653 = vadd.f32 0.0, %v2652
      %v2654 = vpop.f32.mrb[0].mxu0
      %v2655 = vadd.f32 0.0, %v2654
      %v2656 = vpop.f32.mrb[0].mxu0
      %v2657 = vadd.f32 0.0, %v2656
      %v2658 = vpop.f32.mrb[0].mxu0
      %v2659 = vadd.f32 0.0, %v2658
      %2660 = vmatprep.mubr.bf16.mxu0 %v1528
      %2661 = vmatmul.mubr.bf16.gmra.mrb[0].mxu0 %v1527
      %v2662 = vpop.f32.mrb[0].mxu0
      %v2663 = vadd.f32 0.0, %v2662
      %v2664 = vpop.f32.mrb[0].mxu0
      %v2665 = vadd.f32 0.0, %v2664
      %v2666 = vpop.f32.mrb[0].mxu0
      %v2667 = vadd.f32 0.0, %v2666
      %v2668 = vpop.f32.mrb[0].mxu0
      %v2669 = vadd.f32 0.0, %v2668
      %2670 = vdwg.mxu0
      %2671 = vmatprep.subr.bf16.mxu0 %v2243
      %2672 = vmatpush1.bf16.msra.mxu0 %v2242
      %2673 = vmatprep.subr.bf16.mxu0 %v2245
      %2674 = vmatpush1.bf16.msra.mxu0 %v2244
      %2675 = vmatprep.subr.bf16.mxu0 %v2247
      %2676 = vmatpush1.bf16.msra.mxu0 %v2246
      %2677 = vmatprep.subr.bf16.mxu0 %v2249
      %2678 = vmatpush1.bf16.msra.mxu0 %v2248
      %2679 = vmatprep.subr.bf16.mxu0 %v2251
      %2680 = vmatpush1.bf16.msra.mxu0 %v2250
      %2681 = vmatprep.subr.bf16.mxu0 %v2253
      %2682 = vmatpush1.bf16.msra.mxu0 %v2252
      %2683 = vmatprep.subr.bf16.mxu0 %v2255
      %2684 = vmatpush1.bf16.msra.mxu0 %v2254
      %2685 = vmatprep.subr.bf16.mxu0 %v2257
      %2686 = vmatpush1.bf16.msra.mxu0 %v2256
      %2687 = vmatprep.subr.bf16.mxu0 %v2259
      %2688 = vmatpush1.bf16.msra.mxu0 %v2258
      %2689 = vmatprep.subr.bf16.mxu0 %v2261
      %2690 = vmatpush1.bf16.msra.mxu0 %v2260
      %2691 = vmatprep.subr.bf16.mxu0 %v2263
      %2692 = vmatpush1.bf16.msra.mxu0 %v2262
      %2693 = vmatprep.subr.bf16.mxu0 %v2265
      %2694 = vmatpush1.bf16.msra.mxu0 %v2264
      %2695 = vmatprep.subr.bf16.mxu0 %v2267
      %2696 = vmatpush1.bf16.msra.mxu0 %v2266
      %2697 = vmatprep.subr.bf16.mxu0 %v2269
      %2698 = vmatpush1.bf16.msra.mxu0 %v2268
      %2699 = vmatprep.subr.bf16.mxu0 %v2271
      %2700 = vmatpush1.bf16.msra.mxu0 %v2270
      %2701 = vmatprep.subr.bf16.mxu0 %v2273
      %2702 = vmatpush1.bf16.msra.mxu0 %v2272
      %2703 = vmatprep.mubr.bf16.mxu0 %v1464
      %2704 = vmatmul.mubr.bf16.gmra.mrb[0].mxu0 %v1463
      %v2705 = vpop.f32.mrb[0].mxu0
      %v2706 = vadd.f32 %v2603, %v2705
      %v2707 = vpop.f32.mrb[0].mxu0
      %v2708 = vadd.f32 %v2605, %v2707
      %v2709 = vpop.f32.mrb[0].mxu0
      %v2710 = vadd.f32 %v2607, %v2709
      %v2711 = vpop.f32.mrb[0].mxu0
      %v2712 = vadd.f32 %v2609, %v2711
      %2713 = vmatprep.mubr.bf16.mxu0 %v1475
      %2714 = vmatmul.mubr.bf16.gmra.mrb[0].mxu0 %v1474
      %v2715 = vpop.f32.mrb[0].mxu0
      %v2716 = vadd.f32 %v2613, %v2715
      %v2717 = vpop.f32.mrb[0].mxu0
      %v2718 = vadd.f32 %v2615, %v2717
      %v2719 = vpop.f32.mrb[0].mxu0
      %v2720 = vadd.f32 %v2617, %v2719
      %v2721 = vpop.f32.mrb[0].mxu0
      %v2722 = vadd.f32 %v2619, %v2721
      %2723 = vmatprep.mubr.bf16.mxu0 %v1486
      %2724 = vmatmul.mubr.bf16.gmra.mrb[0].mxu0 %v1485
      %v2725 = vpop.f32.mrb[0].mxu0
      %v2726 = vadd.f32 %v2623, %v2725
      %v2727 = vpop.f32.mrb[0].mxu0
      %v2728 = vadd.f32 %v2625, %v2727
      %v2729 = vpop.f32.mrb[0].mxu0
      %v2730 = vadd.f32 %v2627, %v2729
      %v2731 = vpop.f32.mrb[0].mxu0
      %v2732 = vadd.f32 %v2629, %v2731
      %2733 = vmatprep.mubr.bf16.mxu0 %v1497
      %2734 = vmatmul.mubr.bf16.gmra.mrb[0].mxu0 %v1496
      %v2735 = vpop.f32.mrb[0].mxu0
      %v2736 = vadd.f32 %v2633, %v2735
      %v2737 = vpop.f32.mrb[0].mxu0
      %v2738 = vadd.f32 %v2635, %v2737
      %v2739 = vpop.f32.mrb[0].mxu0
      %v2740 = vadd.f32 %v2637, %v2739
      %v2741 = vpop.f32.mrb[0].mxu0
      %v2742 = vadd.f32 %v2639, %v2741
      %2743 = vmatprep.mubr.bf16.mxu0 %v1508
      %2744 = vmatmul.mubr.bf16.gmra.mrb[0].mxu0 %v1507
      %v2745 = vpop.f32.mrb[0].mxu0
      %v2746 = vadd.f32 %v2643, %v2745
      %v2747 = vpop.f32.mrb[0].mxu0
      %v2748 = vadd.f32 %v2645, %v2747
      %v2749 = vpop.f32.mrb[0].mxu0
      %v2750 = vadd.f32 %v2647, %v2749
      %v2751 = vpop.f32.mrb[0].mxu0
      %v2752 = vadd.f32 %v2649, %v2751
      %2753 = vmatprep.mubr.bf16.mxu0 %v1519
      %2754 = vmatmul.mubr.bf16.gmra.mrb[0].mxu0 %v1518
      %v2755 = vpop.f32.mrb[0].mxu0
      %v2756 = vadd.f32 %v2653, %v2755
      %v2757 = vpop.f32.mrb[0].mxu0
      %v2758 = vadd.f32 %v2655, %v2757
      %v2759 = vpop.f32.mrb[0].mxu0
      %v2760 = vadd.f32 %v2657, %v2759
      %v2761 = vpop.f32.mrb[0].mxu0
      %v2762 = vadd.f32 %v2659, %v2761
      %2763 = vmatprep.mubr.bf16.mxu0 %v1530
      %2764 = vmatmul.mubr.bf16.gmra.mrb[0].mxu0 %v1529
      %v2765 = vpop.f32.mrb[0].mxu0
      %v2766 = vadd.f32 %v2663, %v2765
      %v2767 = vpop.f32.mrb[0].mxu0
      %v2768 = vadd.f32 %v2665, %v2767
      %v2769 = vpop.f32.mrb[0].mxu0
      %v2770 = vadd.f32 %v2667, %v2769
      %v2771 = vpop.f32.mrb[0].mxu0
      %v2772 = vadd.f32 %v2669, %v2771
      %2773 = vdwg.mxu0
      %2774 = vmatprep.subr.bf16.mxu0 %v2275
      %2775 = vmatpush1.bf16.msra.mxu0 %v2274
      %2776 = vmatprep.subr.bf16.mxu0 %v2277
      %2777 = vmatpush1.bf16.msra.mxu0 %v2276
      %2778 = vmatprep.subr.bf16.mxu0 %v2279
      %2779 = vmatpush1.bf16.msra.mxu0 %v2278
      %2780 = vmatprep.subr.bf16.mxu0 %v2281
      %2781 = vmatpush1.bf16.msra.mxu0 %v2280
      %2782 = vmatprep.subr.bf16.mxu0 %v2283
      %2783 = vmatpush1.bf16.msra.mxu0 %v2282
      %2784 = vmatprep.subr.bf16.mxu0 %v2285
      %2785 = vmatpush1.bf16.msra.mxu0 %v2284
      %2786 = vmatprep.subr.bf16.mxu0 %v2287
      %2787 = vmatpush1.bf16.msra.mxu0 %v2286
      %2788 = vmatprep.subr.bf16.mxu0 %v2289
      %2789 = vmatpush1.bf16.msra.mxu0 %v2288
      %2790 = vmatprep.subr.bf16.mxu0 %v2291
      %2791 = vmatpush1.bf16.msra.mxu0 %v2290
      %2792 = vmatprep.subr.bf16.mxu0 %v2293
      %2793 = vmatpush1.bf16.msra.mxu0 %v2292
      %2794 = vmatprep.subr.bf16.mxu0 %v2295
      %2795 = vmatpush1.bf16.msra.mxu0 %v2294
      %2796 = vmatprep.subr.bf16.mxu0 %v2297
      %2797 = vmatpush1.bf16.msra.mxu0 %v2296
      %2798 = vmatprep.subr.bf16.mxu0 %v2299
      %2799 = vmatpush1.bf16.msra.mxu0 %v2298
      %2800 = vmatprep.subr.bf16.mxu0 %v2301
      %2801 = vmatpush1.bf16.msra.mxu0 %v2300
      %2802 = vmatprep.subr.bf16.mxu0 %v2303
      %2803 = vmatpush1.bf16.msra.mxu0 %v2302
      %2804 = vmatprep.subr.bf16.mxu0 %v2305
      %2805 = vmatpush1.bf16.msra.mxu0 %v2304
      %2806 = vmatprep.mubr.bf16.mxu0 %v1466
      %2807 = vmatmul.mubr.bf16.gmra.mrb[0].mxu0 %v1465
      %v2808 = vpop.f32.mrb[0].mxu0
      %v2809 = vadd.f32 %v2706, %v2808
      %v2810 = vpop.f32.mrb[0].mxu0
      %v2811 = vadd.f32 %v2708, %v2810
      %v2812 = vpop.f32.mrb[0].mxu0
      %v2813 = vadd.f32 %v2710, %v2812
      %v2814 = vpop.f32.mrb[0].mxu0
      %v2815 = vadd.f32 %v2712, %v2814
      %2816 = vmatprep.mubr.bf16.mxu0 %v1477
      %2817 = vmatmul.mubr.bf16.gmra.mrb[0].mxu0 %v1476
      %v2818 = vpop.f32.mrb[0].mxu0
      %v2819 = vadd.f32 %v2716, %v2818
      %v2820 = vpop.f32.mrb[0].mxu0
      %v2821 = vadd.f32 %v2718, %v2820
      %v2822 = vpop.f32.mrb[0].mxu0
      %v2823 = vadd.f32 %v2720, %v2822
      %v2824 = vpop.f32.mrb[0].mxu0
      %v2825 = vadd.f32 %v2722, %v2824
      %2826 = vmatprep.mubr.bf16.mxu0 %v1488
      %2827 = vmatmul.mubr.bf16.gmra.mrb[0].mxu0 %v1487
      %v2828 = vpop.f32.mrb[0].mxu0
      %v2829 = vadd.f32 %v2726, %v2828
      %v2830 = vpop.f32.mrb[0].mxu0
      %v2831 = vadd.f32 %v2728, %v2830
      %v2832 = vpop.f32.mrb[0].mxu0
      %v2833 = vadd.f32 %v2730, %v2832
      %v2834 = vpop.f32.mrb[0].mxu0
      %v2835 = vadd.f32 %v2732, %v2834
      %2836 = vmatprep.mubr.bf16.mxu0 %v1499
      %2837 = vmatmul.mubr.bf16.gmra.mrb[0].mxu0 %v1498
      %v2838 = vpop.f32.mrb[0].mxu0
      %v2839 = vadd.f32 %v2736, %v2838
      %v2840 = vpop.f32.mrb[0].mxu0
      %v2841 = vadd.f32 %v2738, %v2840
      %v2842 = vpop.f32.mrb[0].mxu0
      %v2843 = vadd.f32 %v2740, %v2842
      %v2844 = vpop.f32.mrb[0].mxu0
      %v2845 = vadd.f32 %v2742, %v2844
      %2846 = vmatprep.mubr.bf16.mxu0 %v1510
      %2847 = vmatmul.mubr.bf16.gmra.mrb[0].mxu0 %v1509
      %v2848 = vpop.f32.mrb[0].mxu0
      %v2849 = vadd.f32 %v2746, %v2848
      %v2850 = vpop.f32.mrb[0].mxu0
      %v2851 = vadd.f32 %v2748, %v2850
      %v2852 = vpop.f32.mrb[0].mxu0
      %v2853 = vadd.f32 %v2750, %v2852
      %v2854 = vpop.f32.mrb[0].mxu0
      %v2855 = vadd.f32 %v2752, %v2854
      %2856 = vmatprep.mubr.bf16.mxu0 %v1521
      %2857 = vmatmul.mubr.bf16.gmra.mrb[0].mxu0 %v1520
      %v2858 = vpop.f32.mrb[0].mxu0
      %v2859 = vadd.f32 %v2756, %v2858
      %v2860 = vpop.f32.mrb[0].mxu0
      %v2861 = vadd.f32 %v2758, %v2860
      %v2862 = vpop.f32.mrb[0].mxu0
      %v2863 = vadd.f32 %v2760, %v2862
      %v2864 = vpop.f32.mrb[0].mxu0
      %v2865 = vadd.f32 %v2762, %v2864
      %2866 = vmatprep.mubr.bf16.mxu0 %v1532
      %2867 = vmatmul.mubr.bf16.gmra.mrb[0].mxu0 %v1531
      %v2868 = vpop.f32.mrb[0].mxu0
      %v2869 = vadd.f32 %v2766, %v2868
      %v2870 = vpop.f32.mrb[0].mxu0
      %v2871 = vadd.f32 %v2768, %v2870
      %v2872 = vpop.f32.mrb[0].mxu0
      %v2873 = vadd.f32 %v2770, %v2872
      %v2874 = vpop.f32.mrb[0].mxu0
      %v2875 = vadd.f32 %v2772, %v2874
      %2876 = vdwg.mxu0
      %2877 = vmatprep.subr.bf16.mxu0 %v2307
      %2878 = vmatpush1.bf16.msra.mxu0 %v2306
      %2879 = vmatprep.subr.bf16.mxu0 %v2309
      %2880 = vmatpush1.bf16.msra.mxu0 %v2308
      %2881 = vmatprep.subr.bf16.mxu0 %v2311
      %2882 = vmatpush1.bf16.msra.mxu0 %v2310
      %2883 = vmatprep.subr.bf16.mxu0 %v2313
      %2884 = vmatpush1.bf16.msra.mxu0 %v2312
      %2885 = vmatprep.subr.bf16.mxu0 %v2315
      %2886 = vmatpush1.bf16.msra.mxu0 %v2314
      %2887 = vmatprep.subr.bf16.mxu0 %v2317
      %2888 = vmatpush1.bf16.msra.mxu0 %v2316
      %2889 = vmatprep.subr.bf16.mxu0 %v2319
      %2890 = vmatpush1.bf16.msra.mxu0 %v2318
      %2891 = vmatprep.subr.bf16.mxu0 %v2321
      %2892 = vmatpush1.bf16.msra.mxu0 %v2320
      %2893 = vmatprep.subr.bf16.mxu0 %v2323
      %2894 = vmatpush1.bf16.msra.mxu0 %v2322
      %2895 = vmatprep.subr.bf16.mxu0 %v2325
      %2896 = vmatpush1.bf16.msra.mxu0 %v2324
      %2897 = vmatprep.subr.bf16.mxu0 %v2327
      %2898 = vmatpush1.bf16.msra.mxu0 %v2326
      %2899 = vmatprep.subr.bf16.mxu0 %v2329
      %2900 = vmatpush1.bf16.msra.mxu0 %v2328
      %2901 = vmatprep.subr.bf16.mxu0 %v2331
      %2902 = vmatpush1.bf16.msra.mxu0 %v2330
      %2903 = vmatprep.subr.bf16.mxu0 %v2333
      %2904 = vmatpush1.bf16.msra.mxu0 %v2332
      %2905 = vmatprep.subr.bf16.mxu0 %v2335
      %2906 = vmatpush1.bf16.msra.mxu0 %v2334
      %2907 = vmatprep.subr.bf16.mxu0 %v2337
      %2908 = vmatpush1.bf16.msra.mxu0 %v2336
      %2909 = vmatprep.mubr.bf16.mxu0 %v1468
      %2910 = vmatmul.mubr.bf16.gmra.mrb[0].mxu0 %v1467
      %v2911 = vpop.f32.mrb[0].mxu0
      %v2912 = vadd.f32 %v2809, %v2911
      %v2913 = vpop.f32.mrb[0].mxu0
      %v2914 = vadd.f32 %v2811, %v2913
      %v2915 = vpop.f32.mrb[0].mxu0
      %v2916 = vadd.f32 %v2813, %v2915
      %v2917 = vpop.f32.mrb[0].mxu0
      %v2918 = vadd.f32 %v2815, %v2917
      %2919 = vmatprep.mubr.bf16.mxu0 %v1479
      %2920 = vmatmul.mubr.bf16.gmra.mrb[0].mxu0 %v1478
      %v2921 = vpop.f32.mrb[0].mxu0
      %v2922 = vadd.f32 %v2819, %v2921
      %v2923 = vpop.f32.mrb[0].mxu0
      %v2924 = vadd.f32 %v2821, %v2923
      %v2925 = vpop.f32.mrb[0].mxu0
      %v2926 = vadd.f32 %v2823, %v2925
      %v2927 = vpop.f32.mrb[0].mxu0
      %v2928 = vadd.f32 %v2825, %v2927
      %2929 = vmatprep.mubr.bf16.mxu0 %v1490
      %2930 = vmatmul.mubr.bf16.gmra.mrb[0].mxu0 %v1489
      %v2931 = vpop.f32.mrb[0].mxu0
      %v2932 = vadd.f32 %v2829, %v2931
      %v2933 = vpop.f32.mrb[0].mxu0
      %v2934 = vadd.f32 %v2831, %v2933
      %v2935 = vpop.f32.mrb[0].mxu0
      %v2936 = vadd.f32 %v2833, %v2935
      %v2937 = vpop.f32.mrb[0].mxu0
      %v2938 = vadd.f32 %v2835, %v2937
      %2939 = vmatprep.mubr.bf16.mxu0 %v1501
      %2940 = vmatmul.mubr.bf16.gmra.mrb[0].mxu0 %v1500
      %v2941 = vpop.f32.mrb[0].mxu0
      %v2942 = vadd.f32 %v2839, %v2941
      %v2943 = vpop.f32.mrb[0].mxu0
      %v2944 = vadd.f32 %v2841, %v2943
      %v2945 = vpop.f32.mrb[0].mxu0
      %v2946 = vadd.f32 %v2843, %v2945
      %v2947 = vpop.f32.mrb[0].mxu0
      %v2948 = vadd.f32 %v2845, %v2947
      %2949 = vmatprep.mubr.bf16.mxu0 %v1512
      %2950 = vmatmul.mubr.bf16.gmra.mrb[0].mxu0 %v1511
      %v2951 = vpop.f32.mrb[0].mxu0
      %v2952 = vadd.f32 %v2849, %v2951
      %v2953 = vpop.f32.mrb[0].mxu0
      %v2954 = vadd.f32 %v2851, %v2953
      %v2955 = vpop.f32.mrb[0].mxu0
      %v2956 = vadd.f32 %v2853, %v2955
      %v2957 = vpop.f32.mrb[0].mxu0
      %v2958 = vadd.f32 %v2855, %v2957
      %2959 = vmatprep.mubr.bf16.mxu0 %v1523
      %2960 = vmatmul.mubr.bf16.gmra.mrb[0].mxu0 %v1522
      %v2961 = vpop.f32.mrb[0].mxu0
      %v2962 = vadd.f32 %v2859, %v2961
      %v2963 = vpop.f32.mrb[0].mxu0
      %v2964 = vadd.f32 %v2861, %v2963
      %v2965 = vpop.f32.mrb[0].mxu0
      %v2966 = vadd.f32 %v2863, %v2965
      %v2967 = vpop.f32.mrb[0].mxu0
      %v2968 = vadd.f32 %v2865, %v2967
      %2969 = vmatprep.mubr.bf16.mxu0 %v1534
      %2970 = vmatmul.mubr.bf16.gmra.mrb[0].mxu0 %v1533
      %v2971 = vpop.f32.mrb[0].mxu0
      %v2972 = vadd.f32 %v2869, %v2971
      %v2973 = vpop.f32.mrb[0].mxu0
      %v2974 = vadd.f32 %v2871, %v2973
      %v2975 = vpop.f32.mrb[0].mxu0
      %v2976 = vadd.f32 %v2873, %v2975
      %v2977 = vpop.f32.mrb[0].mxu0
      %v2978 = vadd.f32 %v2875, %v2977
      %2979 = vdwg.mxu0
      %2980 = vmatprep.subr.bf16.mxu0 %v2339
      %2981 = vmatpush1.bf16.msra.mxu0 %v2338
      %2982 = vmatprep.subr.bf16.mxu0 %v2341
      %2983 = vmatpush1.bf16.msra.mxu0 %v2340
      %2984 = vmatprep.subr.bf16.mxu0 %v2343
      %2985 = vmatpush1.bf16.msra.mxu0 %v2342
      %2986 = vmatprep.subr.bf16.mxu0 %v2345
      %2987 = vmatpush1.bf16.msra.mxu0 %v2344
      %2988 = vmatprep.subr.bf16.mxu0 %v2347
      %2989 = vmatpush1.bf16.msra.mxu0 %v2346
      %2990 = vmatprep.subr.bf16.mxu0 %v2349
      %2991 = vmatpush1.bf16.msra.mxu0 %v2348
      %2992 = vmatprep.subr.bf16.mxu0 %v2351
      %2993 = vmatpush1.bf16.msra.mxu0 %v2350
      %2994 = vmatprep.subr.bf16.mxu0 %v2353
      %2995 = vmatpush1.bf16.msra.mxu0 %v2352
      %2996 = vmatprep.subr.bf16.mxu0 %v2355
      %2997 = vmatpush1.bf16.msra.mxu0 %v2354
      %2998 = vmatprep.subr.bf16.mxu0 %v2357
      %2999 = vmatpush1.bf16.msra.mxu0 %v2356
      %3000 = vmatprep.subr.bf16.mxu0 %v2359
      %3001 = vmatpush1.bf16.msra.mxu0 %v2358
      %3002 = vmatprep.subr.bf16.mxu0 %v2361
      %3003 = vmatpush1.bf16.msra.mxu0 %v2360
      %3004 = vmatprep.subr.bf16.mxu0 %v2363
      %3005 = vmatpush1.bf16.msra.mxu0 %v2362
      %3006 = vmatprep.subr.bf16.mxu0 %v2365
      %3007 = vmatpush1.bf16.msra.mxu0 %v2364
      %3008 = vmatprep.subr.bf16.mxu0 %v2367
      %3009 = vmatpush1.bf16.msra.mxu0 %v2366
      %3010 = vmatprep.subr.bf16.mxu0 %v2369
      %3011 = vmatpush1.bf16.msra.mxu0 %v2368
      %3012 = vmatprep.mubr.bf16.mxu0 %v1470
      %3013 = vmatmul.mubr.bf16.gmra.mrb[0].mxu0 %v1469
      %v3014 = vpop.f32.mrb[0].mxu0
      %v3015 = vadd.f32 %v2912, %v3014
      %v3016 = vpop.f32.mrb[0].mxu0
      %v3017 = vadd.f32 %v2914, %v3016
      %v3018 = vpop.f32.mrb[0].mxu0
      %v3019 = vadd.f32 %v2916, %v3018
      %v3020 = vpop.f32.mrb[0].mxu0
      %v3021 = vadd.f32 %v2918, %v3020
      %3022 = vmatprep.mubr.bf16.mxu0 %v1481
      %3023 = vmatmul.mubr.bf16.gmra.mrb[0].mxu0 %v1480
      %v3024 = vpop.f32.mrb[0].mxu0
      %v3025 = vadd.f32 %v2922, %v3024
      %v3026 = vpop.f32.mrb[0].mxu0
      %v3027 = vadd.f32 %v2924, %v3026
      %v3028 = vpop.f32.mrb[0].mxu0
      %v3029 = vadd.f32 %v2926, %v3028
      %v3030 = vpop.f32.mrb[0].mxu0
      %v3031 = vadd.f32 %v2928, %v3030
      %3032 = vmatprep.mubr.bf16.mxu0 %v1492
      %3033 = vmatmul.mubr.bf16.gmra.mrb[0].mxu0 %v1491
      %v3034 = vpop.f32.mrb[0].mxu0
      %v3035 = vadd.f32 %v2932, %v3034
      %v3036 = vpop.f32.mrb[0].mxu0
      %v3037 = vadd.f32 %v2934, %v3036
      %v3038 = vpop.f32.mrb[0].mxu0
      %v3039 = vadd.f32 %v2936, %v3038
      %v3040 = vpop.f32.mrb[0].mxu0
      %v3041 = vadd.f32 %v2938, %v3040
      %3042 = vmatprep.mubr.bf16.mxu0 %v1503
      %3043 = vmatmul.mubr.bf16.gmra.mrb[0].mxu0 %v1502
      %v3044 = vpop.f32.mrb[0].mxu0
      %v3045 = vadd.f32 %v2942, %v3044
      %v3046 = vpop.f32.mrb[0].mxu0
      %v3047 = vadd.f32 %v2944, %v3046
      %v3048 = vpop.f32.mrb[0].mxu0
      %v3049 = vadd.f32 %v2946, %v3048
      %v3050 = vpop.f32.mrb[0].mxu0
      %v3051 = vadd.f32 %v2948, %v3050
      %3052 = vmatprep.mubr.bf16.mxu0 %v1514
      %3053 = vmatmul.mubr.bf16.gmra.mrb[0].mxu0 %v1513
      %v3054 = vpop.f32.mrb[0].mxu0
      %v3055 = vadd.f32 %v2952, %v3054
      %v3056 = vpop.f32.mrb[0].mxu0
      %v3057 = vadd.f32 %v2954, %v3056
      %v3058 = vpop.f32.mrb[0].mxu0
      %v3059 = vadd.f32 %v2956, %v3058
      %v3060 = vpop.f32.mrb[0].mxu0
      %v3061 = vadd.f32 %v2958, %v3060
      %3062 = vmatprep.mubr.bf16.mxu0 %v1525
      %3063 = vmatmul.mubr.bf16.gmra.mrb[0].mxu0 %v1524
      %v3064 = vpop.f32.mrb[0].mxu0
      %v3065 = vadd.f32 %v2962, %v3064
      %v3066 = vpop.f32.mrb[0].mxu0
      %v3067 = vadd.f32 %v2964, %v3066
      %v3068 = vpop.f32.mrb[0].mxu0
      %v3069 = vadd.f32 %v2966, %v3068
      %v3070 = vpop.f32.mrb[0].mxu0
      %v3071 = vadd.f32 %v2968, %v3070
      %3072 = vmatprep.mubr.bf16.mxu0 %v1536
      %3073 = vmatmul.mubr.bf16.gmra.mrb[0].mxu0 %v1535
      %v3074 = vpop.f32.mrb[0].mxu0
      %v3075 = vadd.f32 %v2972, %v3074
      %v3076 = vpop.f32.mrb[0].mxu0
      %v3077 = vadd.f32 %v2974, %v3076
      %v3078 = vpop.f32.mrb[0].mxu0
      %v3079 = vadd.f32 %v2976, %v3078
      %v3080 = vpop.f32.mrb[0].mxu0
      %v3081 = vadd.f32 %v2978, %v3080
      %3082 = vdwg.mxu0
      %3083 = vmatprep.subr.bf16.mxu0 %v2371
      %3084 = vmatpush1.bf16.msra.mxu0 %v2370
      %3085 = vmatprep.subr.bf16.mxu0 %v2373
      %3086 = vmatpush1.bf16.msra.mxu0 %v2372
      %3087 = vmatprep.subr.bf16.mxu0 %v2375
      %3088 = vmatpush1.bf16.msra.mxu0 %v2374
      %3089 = vmatprep.subr.bf16.mxu0 %v2377
      %3090 = vmatpush1.bf16.msra.mxu0 %v2376
      %3091 = vmatprep.subr.bf16.mxu0 0
      %3092 = vmatpush1.bf16.msra.mxu0 0
      %3093 = vmatprep.subr.bf16.mxu0 0
      %3094 = vmatpush1.bf16.msra.mxu0 0
      %3095 = vmatprep.subr.bf16.mxu0 0
      %3096 = vmatpush1.bf16.msra.mxu0 0
      %3097 = vmatprep.subr.bf16.mxu0 0
      %3098 = vmatpush1.bf16.msra.mxu0 0
      %3099 = vmatprep.subr.bf16.mxu0 0
      %3100 = vmatpush1.bf16.msra.mxu0 0
      %3101 = vmatprep.subr.bf16.mxu0 0
      %3102 = vmatpush1.bf16.msra.mxu0 0
      %3103 = vmatprep.subr.bf16.mxu0 0
      %3104 = vmatpush1.bf16.msra.mxu0 0
      %3105 = vmatprep.subr.bf16.mxu0 0
      %3106 = vmatpush1.bf16.msra.mxu0 0
      %3107 = vmatprep.subr.bf16.mxu0 0
      %3108 = vmatpush1.bf16.msra.mxu0 0
      %3109 = vmatprep.subr.bf16.mxu0 0
      %3110 = vmatpush1.bf16.msra.mxu0 0
      %3111 = vmatprep.subr.bf16.mxu0 0
      %3112 = vmatpush1.bf16.msra.mxu0 0
      %3113 = vmatprep.subr.bf16.mxu0 0
      %3114 = vmatpush1.bf16.msra.mxu0 0
      %3115 = vmatprep.mubr.bf16.mxu0 0
      %3116 = vmatmul.mubr.bf16.gmra.mrb[0].mxu0 %v2548
      %v3117 = vpop.f32.mrb[0].mxu0
      %v3118 = vadd.f32 %v3015, %v3117
      %v3119 = vpop.f32.mrb[0].mxu0
      %v3120 = vadd.f32 %v3017, %v3119
      %v3121 = vpop.f32.mrb[0].mxu0
      %v3122 = vadd.f32 %v3019, %v3121
      %v3123 = vpop.f32.mrb[0].mxu0
      %v3124 = vadd.f32 %v3021, %v3123
      %3125 = vmatprep.mubr.bf16.mxu0 0
      %3126 = vmatmul.mubr.bf16.gmra.mrb[0].mxu0 %v2551
      %v3127 = vpop.f32.mrb[0].mxu0
      %v3128 = vadd.f32 %v3025, %v3127
      %v3129 = vpop.f32.mrb[0].mxu0
      %v3130 = vadd.f32 %v3027, %v3129
      %v3131 = vpop.f32.mrb[0].mxu0
      %v3132 = vadd.f32 %v3029, %v3131
      %v3133 = vpop.f32.mrb[0].mxu0
      %v3134 = vadd.f32 %v3031, %v3133
      %3135 = vmatprep.mubr.bf16.mxu0 0
      %3136 = vmatmul.mubr.bf16.gmra.mrb[0].mxu0 %v2554
      %v3137 = vpop.f32.mrb[0].mxu0
      %v3138 = vadd.f32 %v3035, %v3137
      %v3139 = vpop.f32.mrb[0].mxu0
      %v3140 = vadd.f32 %v3037, %v3139
      %v3141 = vpop.f32.mrb[0].mxu0
      %v3142 = vadd.f32 %v3039, %v3141
      %v3143 = vpop.f32.mrb[0].mxu0
      %v3144 = vadd.f32 %v3041, %v3143
      %3145 = vmatprep.mubr.bf16.mxu0 0
      %3146 = vmatmul.mubr.bf16.gmra.mrb[0].mxu0 %v2557
      %v3147 = vpop.f32.mrb[0].mxu0
      %v3148 = vadd.f32 %v3045, %v3147
      %v3149 = vpop.f32.mrb[0].mxu0
      %v3150 = vadd.f32 %v3047, %v3149
      %v3151 = vpop.f32.mrb[0].mxu0
      %v3152 = vadd.f32 %v3049, %v3151
      %v3153 = vpop.f32.mrb[0].mxu0
      %v3154 = vadd.f32 %v3051, %v3153
      %3155 = vmatprep.mubr.bf16.mxu0 0
      %3156 = vmatmul.mubr.bf16.gmra.mrb[0].mxu0 %v2560
      %v3157 = vpop.f32.mrb[0].mxu0
      %v3158 = vadd.f32 %v3055, %v3157
      %v3159 = vpop.f32.mrb[0].mxu0
      %v3160 = vadd.f32 %v3057, %v3159
      %v3161 = vpop.f32.mrb[0].mxu0
      %v3162 = vadd.f32 %v3059, %v3161
      %v3163 = vpop.f32.mrb[0].mxu0
      %v3164 = vadd.f32 %v3061, %v3163
      %3165 = vmatprep.mubr.bf16.mxu0 0
      %3166 = vmatmul.mubr.bf16.gmra.mrb[0].mxu0 %v2563
      %v3167 = vpop.f32.mrb[0].mxu0
      %v3168 = vadd.f32 %v3065, %v3167
      %v3169 = vpop.f32.mrb[0].mxu0
      %v3170 = vadd.f32 %v3067, %v3169
      %v3171 = vpop.f32.mrb[0].mxu0
      %v3172 = vadd.f32 %v3069, %v3171
      %v3173 = vpop.f32.mrb[0].mxu0
      %v3174 = vadd.f32 %v3071, %v3173
      %3175 = vmatprep.mubr.bf16.mxu0 0
      %3176 = vmatmul.mubr.bf16.gmra.mrb[0].mxu0 %v2566
      %v3177 = vpop.f32.mrb[0].mxu0
      %v3178 = vadd.f32 %v3075, %v3177
      %v3179 = vpop.f32.mrb[0].mxu0
      %v3180 = vadd.f32 %v3077, %v3179
      %v3181 = vpop.f32.mrb[0].mxu0
      %v3182 = vadd.f32 %v3079, %v3181
      %v3183 = vpop.f32.mrb[0].mxu0
      %v3184 = vadd.f32 %v3081, %v3183
      %3185 = vdwg.mxu0
      %vm3186 = vcmask 556032
      %v3187 = vsel %vm3186, %v3120, 0.0
      %v3188 = vadd.f32 %v3118, %v3187
      %3189 = vadd.xlane.f32.xlu0 %v3188
      %v3190 = vpop.xlane.xlu0 %3189
      %v3191 = vsel %vm3186, %v3124, 0.0
      %v3192 = vadd.f32 %v3122, %v3191
      %3193 = vadd.xlane.f32.xlu0 %v3192
      %v3194 = vpop.xlane.xlu0 %3193
      %v3195 = vsel %vm3186, %v3130, 0.0
      %v3196 = vadd.f32 %v3128, %v3195
      %3197 = vadd.xlane.f32.xlu0 %v3196
      %v3198 = vpop.xlane.xlu0 %3197
      %v3199 = vsel %vm3186, %v3134, 0.0
      %v3200 = vadd.f32 %v3132, %v3199
      %3201 = vadd.xlane.f32.xlu0 %v3200
      %v3202 = vpop.xlane.xlu0 %3201
      %v3203 = vsel %vm3186, %v3140, 0.0
      %v3204 = vadd.f32 %v3138, %v3203
      %3205 = vadd.xlane.f32.xlu0 %v3204
      %v3206 = vpop.xlane.xlu0 %3205
      %v3207 = vsel %vm3186, %v3144, 0.0
      %v3208 = vadd.f32 %v3142, %v3207
      %3209 = vadd.xlane.f32.xlu0 %v3208
      %v3210 = vpop.xlane.xlu0 %3209
      %v3211 = vsel %vm3186, %v3150, 0.0
      %v3212 = vadd.f32 %v3148, %v3211
      %3213 = vadd.xlane.f32.xlu0 %v3212
      %v3214 = vpop.xlane.xlu0 %3213
      %v3215 = vsel %vm3186, %v3154, 0.0
      %v3216 = vadd.f32 %v3152, %v3215
      %3217 = vadd.xlane.f32.xlu0 %v3216
      %v3218 = vpop.xlane.xlu0 %3217
      %v3219 = vsel %vm3186, %v3160, 0.0
      %v3220 = vadd.f32 %v3158, %v3219
      %3221 = vadd.xlane.f32.xlu0 %v3220
      %v3222 = vpop.xlane.xlu0 %3221
      %v3223 = vsel %vm3186, %v3164, 0.0
      %v3224 = vadd.f32 %v3162, %v3223
      %3225 = vadd.xlane.f32.xlu0 %v3224
      %v3226 = vpop.xlane.xlu0 %3225
      %v3227 = vsel %vm3186, %v3170, 0.0
      %v3228 = vadd.f32 %v3168, %v3227
      %3229 = vadd.xlane.f32.xlu0 %v3228
      %v3230 = vpop.xlane.xlu0 %3229
      %v3231 = vsel %vm3186, %v3174, 0.0
      %v3232 = vadd.f32 %v3172, %v3231
      %3233 = vadd.xlane.f32.xlu0 %v3232
      %v3234 = vpop.xlane.xlu0 %3233
      %v3235 = vsel %vm3186, %v3180, 0.0
      %v3236 = vadd.f32 %v3178, %v3235
      %3237 = vadd.xlane.f32.xlu0 %v3236
      %v3238 = vpop.xlane.xlu0 %3237
      %v3239 = vsel %vm3186, %v3184, 0.0
      %v3240 = vadd.f32 %v3182, %v3239
      %3241 = vadd.xlane.f32.xlu0 %v3240
      %v3242 = vpop.xlane.xlu0 %3241
      %v3243 = vrcp.pop 196.0
      %v3244 = vmul.f32 %v3190, %v3243
      %v3245 = vmul.f32 %v3194, %v3243
      %v3246 = vmul.f32 %v3198, %v3243
      %v3247 = vmul.f32 %v3202, %v3243
      %v3248 = vmul.f32 %v3206, %v3243
      %v3249 = vmul.f32 %v3210, %v3243
      %v3250 = vmul.f32 %v3214, %v3243
      %v3251 = vmul.f32 %v3218, %v3243
      %v3252 = vmul.f32 %v3222, %v3243
      %v3253 = vmul.f32 %v3226, %v3243
      %v3254 = vmul.f32 %v3230, %v3243
      %v3255 = vmul.f32 %v3234, %v3243
      %v3256 = vmul.f32 %v3238, %v3243
      %v3257 = vmul.f32 %v3242, %v3243
      %v3258 = vsub.f32 %v3118, %v3244
      %v3259 = vsub.f32 %v3120, %v3244
      %v3260 = vsub.f32 %v3122, %v3245
      %v3261 = vsub.f32 %v3124, %v3245
      %v3262 = vsub.f32 %v3128, %v3246
      %v3263 = vsub.f32 %v3130, %v3246
      %v3264 = vsub.f32 %v3132, %v3247
      %v3265 = vsub.f32 %v3134, %v3247
      %v3266 = vsub.f32 %v3138, %v3248
      %v3267 = vsub.f32 %v3140, %v3248
      %v3268 = vsub.f32 %v3142, %v3249
      %v3269 = vsub.f32 %v3144, %v3249
      %v3270 = vsub.f32 %v3148, %v3250
      %v3271 = vsub.f32 %v3150, %v3250
      %v3272 = vsub.f32 %v3152, %v3251
      %v3273 = vsub.f32 %v3154, %v3251
      %v3274 = vsub.f32 %v3158, %v3252
      %v3275 = vsub.f32 %v3160, %v3252
      %v3276 = vsub.f32 %v3162, %v3253
      %v3277 = vsub.f32 %v3164, %v3253
      %v3278 = vsub.f32 %v3168, %v3254
      %v3279 = vsub.f32 %v3170, %v3254
      %v3280 = vsub.f32 %v3172, %v3255
      %v3281 = vsub.f32 %v3174, %v3255
      %v3282 = vsub.f32 %v3178, %v3256
      %v3283 = vsub.f32 %v3180, %v3256
      %v3284 = vsub.f32 %v3182, %v3257
      %v3285 = vsub.f32 %v3184, %v3257
      %v3286 = vmul.f32 %v3258, %v3258
      %v3287 = vmul.f32 %v3259, %v3259
      %v3288 = vmul.f32 %v3260, %v3260
      %v3289 = vmul.f32 %v3261, %v3261
      %v3290 = vmul.f32 %v3262, %v3262
      %v3291 = vmul.f32 %v3263, %v3263
      %v3292 = vmul.f32 %v3264, %v3264
      %v3293 = vmul.f32 %v3265, %v3265
      %v3294 = vmul.f32 %v3266, %v3266
      %v3295 = vmul.f32 %v3267, %v3267
      %v3296 = vmul.f32 %v3268, %v3268
      %v3297 = vmul.f32 %v3269, %v3269
      %v3298 = vmul.f32 %v3270, %v3270
      %v3299 = vmul.f32 %v3271, %v3271
      %v3300 = vmul.f32 %v3272, %v3272
      %v3301 = vmul.f32 %v3273, %v3273
      %v3302 = vmul.f32 %v3274, %v3274
      %v3303 = vmul.f32 %v3275, %v3275
      %v3304 = vmul.f32 %v3276, %v3276
      %v3305 = vmul.f32 %v3277, %v3277
      %v3306 = vmul.f32 %v3278, %v3278
      %v3307 = vmul.f32 %v3279, %v3279
      %v3308 = vmul.f32 %v3280, %v3280
      %v3309 = vmul.f32 %v3281, %v3281
      %v3310 = vmul.f32 %v3282, %v3282
      %v3311 = vmul.f32 %v3283, %v3283
      %v3312 = vmul.f32 %v3284, %v3284
      %v3313 = vmul.f32 %v3285, %v3285
      %v3314 = vsel %vm3186, %v3287, 0.0
      %v3315 = vadd.f32 %v3286, %v3314
      %3316 = vadd.xlane.f32.xlu0 %v3315
      %v3317 = vpop.xlane.xlu0 %3316
      %v3318 = vsel %vm3186, %v3289, 0.0
      %v3319 = vadd.f32 %v3288, %v3318
      %3320 = vadd.xlane.f32.xlu0 %v3319
      %v3321 = vpop.xlane.xlu0 %3320
      %v3322 = vsel %vm3186, %v3291, 0.0
      %v3323 = vadd.f32 %v3290, %v3322
      %3324 = vadd.xlane.f32.xlu0 %v3323
      %v3325 = vpop.xlane.xlu0 %3324
      %v3326 = vsel %vm3186, %v3293, 0.0
      %v3327 = vadd.f32 %v3292, %v3326
      %3328 = vadd.xlane.f32.xlu0 %v3327
      %v3329 = vpop.xlane.xlu0 %3328
      %v3330 = vsel %vm3186, %v3295, 0.0
      %v3331 = vadd.f32 %v3294, %v3330
      %3332 = vadd.xlane.f32.xlu0 %v3331
      %v3333 = vpop.xlane.xlu0 %3332
      %v3334 = vsel %vm3186, %v3297, 0.0
      %v3335 = vadd.f32 %v3296, %v3334
      %3336 = vadd.xlane.f32.xlu0 %v3335
      %v3337 = vpop.xlane.xlu0 %3336
      %v3338 = vsel %vm3186, %v3299, 0.0
      %v3339 = vadd.f32 %v3298, %v3338
      %3340 = vadd.xlane.f32.xlu0 %v3339
      %v3341 = vpop.xlane.xlu0 %3340
      %v3342 = vsel %vm3186, %v3301, 0.0
      %v3343 = vadd.f32 %v3300, %v3342
      %3344 = vadd.xlane.f32.xlu0 %v3343
      %v3345 = vpop.xlane.xlu0 %3344
      %v3346 = vsel %vm3186, %v3303, 0.0
      %v3347 = vadd.f32 %v3302, %v3346
      %3348 = vadd.xlane.f32.xlu0 %v3347
      %v3349 = vpop.xlane.xlu0 %3348
      %v3350 = vsel %vm3186, %v3305, 0.0
      %v3351 = vadd.f32 %v3304, %v3350
      %3352 = vadd.xlane.f32.xlu0 %v3351
      %v3353 = vpop.xlane.xlu0 %3352
      %v3354 = vsel %vm3186, %v3307, 0.0
      %v3355 = vadd.f32 %v3306, %v3354
      %3356 = vadd.xlane.f32.xlu0 %v3355
      %v3357 = vpop.xlane.xlu0 %3356
      %v3358 = vsel %vm3186, %v3309, 0.0
      %v3359 = vadd.f32 %v3308, %v3358
      %3360 = vadd.xlane.f32.xlu0 %v3359
      %v3361 = vpop.xlane.xlu0 %3360
      %v3362 = vsel %vm3186, %v3311, 0.0
      %v3363 = vadd.f32 %v3310, %v3362
      %3364 = vadd.xlane.f32.xlu0 %v3363
      %v3365 = vpop.xlane.xlu0 %3364
      %v3366 = vsel %vm3186, %v3313, 0.0
      %v3367 = vadd.f32 %v3312, %v3366
      %3368 = vadd.xlane.f32.xlu0 %v3367
      %v3369 = vpop.xlane.xlu0 %3368
      %v3370 = vmul.f32 %v3317, %v3243
      %v3371 = vmul.f32 %v3321, %v3243
      %v3372 = vmul.f32 %v3325, %v3243
      %v3373 = vmul.f32 %v3329, %v3243
      %v3374 = vmul.f32 %v3333, %v3243
      %v3375 = vmul.f32 %v3337, %v3243
      %v3376 = vmul.f32 %v3341, %v3243
      %v3377 = vmul.f32 %v3345, %v3243
      %v3378 = vmul.f32 %v3349, %v3243
      %v3379 = vmul.f32 %v3353, %v3243
      %v3380 = vmul.f32 %v3357, %v3243
      %v3381 = vmul.f32 %v3361, %v3243
      %v3382 = vmul.f32 %v3365, %v3243
      %v3383 = vmul.f32 %v3369, %v3243
      %v3384 = vld [vmem:[%s273] sm:$0xff]
      %v3385 = vld [vmem:[%s273 + $0x8] sm:$0xff]
      %v3386 = vld [vmem:[%s273 + $0x10] sm:$0xff]
      %v3387 = vld [vmem:[%s273 + $0x18] sm:$0xff]
      %v3388 = vld [vmem:[%s273 + $0x20] sm:$0xff]
      %v3389 = vld [vmem:[%s273 + $0x28] sm:$0xff]
      %v3390 = vld [vmem:[%s273 + $0x30] sm:$0xff]
      %v3391 = vld [vmem:[%s273 + $0x38] sm:$0xff]
      %v3392 = vld [vmem:[%s273 + $0x40] sm:$0xff]
      %v3393 = vld [vmem:[%s273 + $0x48] sm:$0xff]
      %v3394 = vld [vmem:[%s273 + $0x50] sm:$0xff]
      %v3395 = vld [vmem:[%s273 + $0x58] sm:$0xff]
      %v3396 = vld [vmem:[%s273 + $0x60] sm:$0xff]
      %v3397 = vld [vmem:[%s273 + $0x68] sm:$0xff]
      %v3398 = vadd.f32 %v3370, 0.001
      %v3399 = vadd.f32 %v3371, 0.001
      %v3400 = vadd.f32 %v3372, 0.001
      %v3401 = vadd.f32 %v3373, 0.001
      %v3402 = vadd.f32 %v3374, 0.001
      %v3403 = vadd.f32 %v3375, 0.001
      %v3404 = vadd.f32 %v3376, 0.001
      %v3405 = vadd.f32 %v3377, 0.001
      %v3406 = vadd.f32 %v3378, 0.001
      %v3407 = vadd.f32 %v3379, 0.001
      %v3408 = vadd.f32 %v3380, 0.001
      %v3409 = vadd.f32 %v3381, 0.001
      %v3410 = vadd.f32 %v3382, 0.001
      %v3411 = vadd.f32 %v3383, 0.001
      %v3412 = vrsqrt.pop %v3398
      %v3413 = vrsqrt.pop %v3399
      %v3414 = vrsqrt.pop %v3400
      %v3415 = vrsqrt.pop %v3401
      %v3416 = vrsqrt.pop %v3402
      %v3417 = vrsqrt.pop %v3403
      %v3418 = vrsqrt.pop %v3404
      %v3419 = vrsqrt.pop %v3405
      %v3420 = vrsqrt.pop %v3406
      %v3421 = vrsqrt.pop %v3407
      %v3422 = vrsqrt.pop %v3408
      %v3423 = vrsqrt.pop %v3409
      %v3424 = vrsqrt.pop %v3410
      %v3425 = vrsqrt.pop %v3411
      %v3426 = vmul.f32 %v3384, %v3412
      %v3427 = vmul.f32 %v3385, %v3413
      %v3428 = vmul.f32 %v3386, %v3414
      %v3429 = vmul.f32 %v3387, %v3415
      %v3430 = vmul.f32 %v3388, %v3416
      %v3431 = vmul.f32 %v3389, %v3417
      %v3432 = vmul.f32 %v3390, %v3418
      %v3433 = vmul.f32 %v3391, %v3419
      %v3434 = vmul.f32 %v3392, %v3420
      %v3435 = vmul.f32 %v3393, %v3421
      %v3436 = vmul.f32 %v3394, %v3422
      %v3437 = vmul.f32 %v3395, %v3423
      %v3438 = vmul.f32 %v3396, %v3424
      %v3439 = vmul.f32 %v3397, %v3425
      %3441 = vset.pattern.permute.xlu0 0
      %3442 = vperm.xlu0 %3441, %v3426
      %v3443 = vpop.permute.xlu0 %3442
      %3446 = vset.pattern.permute.xlu0 0
      %3447 = vperm.xlu0 %3446, %v3427
      %v3448 = vpop.permute.xlu0 %3447
      %3451 = vset.pattern.permute.xlu0 0
      %3452 = vperm.xlu0 %3451, %v3428
      %v3453 = vpop.permute.xlu0 %3452
      %3456 = vset.pattern.permute.xlu0 0
      %3457 = vperm.xlu0 %3456, %v3429
      %v3458 = vpop.permute.xlu0 %3457
      %3461 = vset.pattern.permute.xlu0 0
      %3462 = vperm.xlu0 %3461, %v3430
      %v3463 = vpop.permute.xlu0 %3462
      %3466 = vset.pattern.permute.xlu0 0
      %3467 = vperm.xlu0 %3466, %v3431
      %v3468 = vpop.permute.xlu0 %3467
      %3471 = vset.pattern.permute.xlu0 0
      %3472 = vperm.xlu0 %3471, %v3432
      %v3473 = vpop.permute.xlu0 %3472
      %3476 = vset.pattern.permute.xlu0 0
      %3477 = vperm.xlu0 %3476, %v3433
      %v3478 = vpop.permute.xlu0 %3477
      %3481 = vset.pattern.permute.xlu0 0
      %3482 = vperm.xlu0 %3481, %v3434
      %v3483 = vpop.permute.xlu0 %3482
      %3486 = vset.pattern.permute.xlu0 0
      %3487 = vperm.xlu0 %3486, %v3435
      %v3488 = vpop.permute.xlu0 %3487
      %3491 = vset.pattern.permute.xlu0 0
      %3492 = vperm.xlu0 %3491, %v3436
      %v3493 = vpop.permute.xlu0 %3492
      %3496 = vset.pattern.permute.xlu0 0
      %3497 = vperm.xlu0 %3496, %v3437
      %v3498 = vpop.permute.xlu0 %3497
      %3501 = vset.pattern.permute.xlu0 0
      %3502 = vperm.xlu0 %3501, %v3438
      %v3503 = vpop.permute.xlu0 %3502
      %3506 = vset.pattern.permute.xlu0 0
      %3507 = vperm.xlu0 %3506, %v3439
      %v3508 = vpop.permute.xlu0 %3507
      %v3510 = vmul.f32 %v3258, %v3443
      %v3511 = vmul.f32 %v3259, %v3443
      %v3512 = vmul.f32 %v3260, %v3448
      %v3513 = vmul.f32 %v3261, %v3448
      %v3514 = vmul.f32 %v3262, %v3453
      %v3515 = vmul.f32 %v3263, %v3453
      %v3516 = vmul.f32 %v3264, %v3458
      %v3517 = vmul.f32 %v3265, %v3458
      %v3518 = vmul.f32 %v3266, %v3463
      %v3519 = vmul.f32 %v3267, %v3463
      %v3520 = vmul.f32 %v3268, %v3468
      %v3521 = vmul.f32 %v3269, %v3468
      %v3522 = vmul.f32 %v3270, %v3473
      %v3523 = vmul.f32 %v3271, %v3473
      %v3524 = vmul.f32 %v3272, %v3478
      %v3525 = vmul.f32 %v3273, %v3478
      %v3526 = vmul.f32 %v3274, %v3483
      %v3527 = vmul.f32 %v3275, %v3483
      %v3528 = vmul.f32 %v3276, %v3488
      %v3529 = vmul.f32 %v3277, %v3488
      %v3530 = vmul.f32 %v3278, %v3493
      %v3531 = vmul.f32 %v3279, %v3493
      %v3532 = vmul.f32 %v3280, %v3498
      %v3533 = vmul.f32 %v3281, %v3498
      %v3534 = vmul.f32 %v3282, %v3503
      %v3535 = vmul.f32 %v3283, %v3503
      %v3536 = vmul.f32 %v3284, %v3508
      %v3537 = vmul.f32 %v3285, %v3508
      %3539 = vset.pattern.permute.xlu0 1
      %3540 = vperm.xlu0 %3539, %v3384
      %v3541 = vpop.permute.xlu0 %3540
      %3544 = vset.pattern.permute.xlu0 1
      %3545 = vperm.xlu0 %3544, %v3385
      %v3546 = vpop.permute.xlu0 %3545
      %3549 = vset.pattern.permute.xlu0 1
      %3550 = vperm.xlu0 %3549, %v3386
      %v3551 = vpop.permute.xlu0 %3550
      %3554 = vset.pattern.permute.xlu0 1
      %3555 = vperm.xlu0 %3554, %v3387
      %v3556 = vpop.permute.xlu0 %3555
      %3559 = vset.pattern.permute.xlu0 1
      %3560 = vperm.xlu0 %3559, %v3388
      %v3561 = vpop.permute.xlu0 %3560
      %3564 = vset.pattern.permute.xlu0 1
      %3565 = vperm.xlu0 %3564, %v3389
      %v3566 = vpop.permute.xlu0 %3565
      %3569 = vset.pattern.permute.xlu0 1
      %3570 = vperm.xlu0 %3569, %v3390
      %v3571 = vpop.permute.xlu0 %3570
      %3574 = vset.pattern.permute.xlu0 1
      %3575 = vperm.xlu0 %3574, %v3391
      %v3576 = vpop.permute.xlu0 %3575
      %3579 = vset.pattern.permute.xlu0 1
      %3580 = vperm.xlu0 %3579, %v3392
      %v3581 = vpop.permute.xlu0 %3580
      %3584 = vset.pattern.permute.xlu0 1
      %3585 = vperm.xlu0 %3584, %v3393
      %v3586 = vpop.permute.xlu0 %3585
      %3589 = vset.pattern.permute.xlu0 1
      %3590 = vperm.xlu0 %3589, %v3394
      %v3591 = vpop.permute.xlu0 %3590
      %3594 = vset.pattern.permute.xlu0 1
      %3595 = vperm.xlu0 %3594, %v3395
      %v3596 = vpop.permute.xlu0 %3595
      %3599 = vset.pattern.permute.xlu0 1
      %3600 = vperm.xlu0 %3599, %v3396
      %v3601 = vpop.permute.xlu0 %3600
      %3604 = vset.pattern.permute.xlu0 1
      %3605 = vperm.xlu0 %3604, %v3397
      %v3606 = vpop.permute.xlu0 %3605
      %v3608 = vadd.f32 %v3510, %v3541
      %v3609 = vadd.f32 %v3511, %v3541
      %v3610 = vadd.f32 %v3512, %v3546
      %v3611 = vadd.f32 %v3513, %v3546
      %v3612 = vadd.f32 %v3514, %v3551
      %v3613 = vadd.f32 %v3515, %v3551
      %v3614 = vadd.f32 %v3516, %v3556
      %v3615 = vadd.f32 %v3517, %v3556
      %v3616 = vadd.f32 %v3518, %v3561
      %v3617 = vadd.f32 %v3519, %v3561
      %v3618 = vadd.f32 %v3520, %v3566
      %v3619 = vadd.f32 %v3521, %v3566
      %v3620 = vadd.f32 %v3522, %v3571
      %v3621 = vadd.f32 %v3523, %v3571
      %v3622 = vadd.f32 %v3524, %v3576
      %v3623 = vadd.f32 %v3525, %v3576
      %v3624 = vadd.f32 %v3526, %v3581
      %v3625 = vadd.f32 %v3527, %v3581
      %v3626 = vadd.f32 %v3528, %v3586
      %v3627 = vadd.f32 %v3529, %v3586
      %v3628 = vadd.f32 %v3530, %v3591
      %v3629 = vadd.f32 %v3531, %v3591
      %v3630 = vadd.f32 %v3532, %v3596
      %v3631 = vadd.f32 %v3533, %v3596
      %v3632 = vadd.f32 %v3534, %v3601
      %v3633 = vadd.f32 %v3535, %v3601
      %v3634 = vadd.f32 %v3536, %v3606
      %v3635 = vadd.f32 %v3537, %v3606
      %3636 = vst [vmem:[%s280] sm:$0xff] %v3608
      %3637 = vst.msk [vmem:[%s280 + $0x8] sm:$0xff] %vm3186, %v3609
      %3638 = vst [vmem:[%s280 + $0x10] sm:$0xff] %v3610
      %3639 = vst.msk [vmem:[%s280 + $0x18] sm:$0xff] %vm3186, %v3611
      %3640 = vst [vmem:[%s280 + $0x20] sm:$0xff] %v3612
      %3641 = vst.msk [vmem:[%s280 + $0x28] sm:$0xff] %vm3186, %v3613
      %3642 = vst [vmem:[%s280 + $0x30] sm:$0xff] %v3614
      %3643 = vst.msk [vmem:[%s280 + $0x38] sm:$0xff] %vm3186, %v3615
      %3644 = vst [vmem:[%s280 + $0x40] sm:$0xff] %v3616
      %3645 = vst.msk [vmem:[%s280 + $0x48] sm:$0xff] %vm3186, %v3617
      %3646 = vst [vmem:[%s280 + $0x50] sm:$0xff] %v3618
      %3647 = vst.msk [vmem:[%s280 + $0x58] sm:$0xff] %vm3186, %v3619
      %3648 = vst [vmem:[%s280 + $0x60] sm:$0xff] %v3620
      %3649 = vst.msk [vmem:[%s280 + $0x68] sm:$0xff] %vm3186, %v3621
      %3650 = vst [vmem:[%s280 + $0x70] sm:$0xff] %v3622
      %3651 = vst.msk [vmem:[%s280 + $0x78] sm:$0xff] %vm3186, %v3623
      %3652 = vst [vmem:[%s280 + $0x80] sm:$0xff] %v3624
      %3653 = vst.msk [vmem:[%s280 + $0x88] sm:$0xff] %vm3186, %v3625
      %3654 = vst [vmem:[%s280 + $0x90] sm:$0xff] %v3626
      %3655 = vst.msk [vmem:[%s280 + $0x98] sm:$0xff] %vm3186, %v3627
      %3656 = vst [vmem:[%s280 + $0xa0] sm:$0xff] %v3628
      %3657 = vst.msk [vmem:[%s280 + $0xa8] sm:$0xff] %vm3186, %v3629
      %3658 = vst [vmem:[%s280 + $0xb0] sm:$0xff] %v3630
      %3659 = vst.msk [vmem:[%s280 + $0xb8] sm:$0xff] %vm3186, %v3631
      %3660 = vst [vmem:[%s280 + $0xc0] sm:$0xff] %v3632
      %3661 = vst.msk [vmem:[%s280 + $0xc8] sm:$0xff] %vm3186, %v3633
      %3662 = vst [vmem:[%s280 + $0xd0] sm:$0xff] %v3634
      %3663 = vst.msk [vmem:[%s280 + $0xd8] sm:$0xff] %vm3186, %v3635
      %s3664 = smul.u32 14, %s17
      %p3665 = scmp.lt.s32.totalorder %s3664, 27
      %s3666 = scalar_select %p3665, %s3664, 27
      %s3667 = smul.addr %s3666, 2
      %s3668 = smul.addr %s3667, 8
      %s3669 = scalar_lea.vmem %s6, %s3668
      // Predicated region
      $region49: #{se_conv_bn.1} parent=43 // pred_check
        %p3670 = pneg %p171
      $region50: #{se_conv_bn.1} parent=43 // pred_check_branch
        %3672 = sbr.rel (%p3670) target = $region52
      $region51: #{se_conv_bn.1} parent=43 // pred_region
        %s3673 = smul.u32 14, %s17
      $region52: #{se_conv_bn.1} parent=43 // pred_fallthru
        _
    $region44: #{se_conv_bn.1} parent=5 // pred_fallthru
      _
    %p3674 = scmp.le.s32.totalorder 2, %s12
    // Predicated region
    $region53: #{se_conv_bn.1} parent=5 // pred_check
      %p3675 = pneg %p3674
    $region54: #{se_conv_bn.1} parent=5 // pred_check_branch
      %3677 = sbr.rel (%p3675) target = $region56
    $region55: #{se_conv_bn.1} parent=5 // pred_region
      %s3678 = ssub.s32 %s12, 2
      // Predicated region
      $region57: #{se_conv_bn.1} parent=55 // pred_check
        %p3679 = pneg %p177
      $region58: #{se_conv_bn.1} parent=55 // pred_check_branch
        %3681 = sbr.rel (%p3679) target = $region60
      $region59: #{se_conv_bn.1} parent=55 // pred_region
        %s3682 = smul.u32 14, %s18
        %p3683 = scmp.lt.s32.totalorder %s3682, 27
        %s3684 = scalar_select %p3683, %s3682, 27
        %s3685 = smul.addr %s3684, 2
        %s3686 = smul.addr %s3685, 8
        %s3687 = scalar_lea.vmem %s6, %s3686
      $region60: #{se_conv_bn.1} parent=55 // pred_fallthru
        _
    $region56: #{se_conv_bn.1} parent=5 // pred_fallthru
      _
  $region6: #{se_conv_bn.1} parent=0 // loop_footer
    %s16 = sadd.s32 1, %s12
  $region7: #{se_conv_bn.1} parent=0 // loop_footer_branch
    %11 = sbr.rel target = $region3
  $region8: #{se_conv_bn.1} parent=0 // loop_exit
    _

</llo_original>
